<compile_context>
chip_gen: v6e
topology: v6e:2x2x1
jax: 0.10.0
libtpu: 0.0.40
codegen_flags: <defaults>
</compile_context>

<pallas_src>
import functools

import jax
import jax.numpy as jnp
from jax import lax
from jax.experimental import pallas as pl
from jax.experimental.pallas import tpu as pltpu


# --------------------------------------------------------------------------- #
# VMEM budgeting helpers
# --------------------------------------------------------------------------- #
def _ceil_to(v, m):
    return (v + m - 1) // m * m


def _vmem_padded_bytes(shape, dtype):
    """Rough VMEM footprint: last two dims padded to the (8, 128) vreg tile."""
    itemsize = jnp.dtype(dtype).itemsize
    if len(shape) == 0:
        return 8 * 128 * itemsize
    if len(shape) == 1:
        return 8 * _ceil_to(int(shape[0]), 128) * itemsize
    lead = 1
    for s in shape[:-2]:
        lead *= int(s)
    return (lead * _ceil_to(int(shape[-2]), 8) * _ceil_to(int(shape[-1]), 128)
            * itemsize)


def _estimate_vmem_bytes(q_tile, kv_tile, dim, heads, x_dtype, w_dtype,
                         compute_dtype):
    d = dim // heads
    est = 0
    # Resident (single-buffered) weights.
    est += 3 * _vmem_padded_bytes((heads, dim, d), w_dtype)
    est += _vmem_padded_bytes((dim, dim), w_dtype)
    est += _vmem_padded_bytes((1, dim), w_dtype)
    # Pipelined input / output blocks (double-buffered by BlockSpec).
    est += 2 * _vmem_padded_bytes((1, q_tile, dim), x_dtype)    # x (q rows)
    est += 2 * _vmem_padded_bytes((1, kv_tile, dim), x_dtype)   # x (kv rows)
    est += 2 * _vmem_padded_bytes((1, q_tile, dim), x_dtype)    # output
    # Scratch accumulators.
    est += _vmem_padded_bytes((heads, q_tile, d), compute_dtype)      # cached q
    est += 2 * _vmem_padded_bytes((heads, q_tile, 1), jnp.float32)    # m, l
    est += _vmem_padded_bytes((heads, q_tile, d), jnp.float32)        # acc
    # Transient per-head temporaries (scores, exp(p), k/v projections).
    est += 3 * _vmem_padded_bytes((q_tile, kv_tile), jnp.float32)
    est += 4 * _vmem_padded_bytes((kv_tile, d), jnp.float32)
    est += 2 * _vmem_padded_bytes((kv_tile, dim), compute_dtype)
    return est


def _pick_tiles(n, dim, heads, x_dtype, w_dtype, compute_dtype, budget_bytes):
    """Largest MXU-friendly (q_tile, kv_tile) that fits the VMEM byte budget."""
    cands = [c for c in (512, 256, 128) if c <= n and n % c == 0]
    if not cands:
        cands = [n]   # small (or ragged) sequence: one full-N tile
    for qt in cands:
        for kt in cands:
            if _estimate_vmem_bytes(qt, kt, dim, heads, x_dtype, w_dtype,
                                    compute_dtype) <= budget_bytes:
                return qt, kt
    return cands[-1], cands[-1]


# --------------------------------------------------------------------------- #
# Parameter prep (ONE TIME, parameter-load time — not in the per-forward path)
# --------------------------------------------------------------------------- #
def prepare_attention_params(wqkv, wout, bout, *, heads):
    """Reorder Wqkv ('(qkv h d)' columns) into per-head weight slabs.

    Returns (wq, wk, wv, wout_p, bout) where wq/wk/wv are (heads, dim, d) so the
    kernel never lane-slices a wide qkv activation. wout_p is (dim, dim) when
    the head dim is a multiple of 128 (concat-heads + single dot path) and
    (heads, d, dim) otherwise (per-head partial-sum path).
    """
    dim, three_dim = wqkv.shape
    assert three_dim == 3 * dim and dim % heads == 0
    d = dim // heads
    w = wqkv.reshape(dim, 3, heads, d)
    wq = jnp.transpose(w[:, 0], (1, 0, 2))     # (heads, dim, d)
    wk = jnp.transpose(w[:, 1], (1, 0, 2))
    wv = jnp.transpose(w[:, 2], (1, 0, 2))
    if d % 128 == 0:
        wout_p = wout                           # (dim, dim)
    else:
        wout_p = wout.reshape(heads, d, dim)    # per-head row slabs
    if bout.ndim == 1:
        bout = bout[None, :]
    return wq, wk, wv, wout_p, bout


# --------------------------------------------------------------------------- #
# Kernel
# --------------------------------------------------------------------------- #
def _attention_kernel(xq_ref, xk_ref, wq_ref, wk_ref, wv_ref, wout_ref, bout_ref,
                      o_ref, q_scr, m_scr, l_scr, acc_scr,
                      *, heads, scale, compute_dtype, use_concat_out):
    f32 = jnp.float32
    cdt = compute_dtype
    ki = pl.program_id(2)
    n_kv = pl.num_programs(2)

    # ---- once per (b, q_tile): project + scale q, reset the accumulators ----
    @pl.when(ki == 0)
    def _init():
        m_scr[...] = jnp.full(m_scr.shape, -jnp.inf, f32)
        l_scr[...] = jnp.zeros(l_scr.shape, f32)
        acc_scr[...] = jnp.zeros(acc_scr.shape, f32)
        xq = xq_ref[0].astype(cdt)                                  # (q_tile, dim)
        for h in range(heads):
            q_h = jnp.dot(xq, wq_ref[h].astype(cdt),
                          preferred_element_type=f32)               # (q_tile, d)
            q_scr[h] = (q_h * scale).astype(q_scr.dtype)            # scale in-kernel

    # ---- every kv tile: project k/v, online-softmax update per head ---------
    xk = xk_ref[0].astype(cdt)                                      # (kv_tile, dim)
    for h in range(heads):
        k_h = jnp.dot(xk, wk_ref[h].astype(cdt),
                      preferred_element_type=f32).astype(cdt)       # (kv_tile, d)
        v_h = jnp.dot(xk, wv_ref[h].astype(cdt),
                      preferred_element_type=f32).astype(cdt)       # (kv_tile, d)
        # q.k^T as an NT dot_general (no in-kernel transpose of k).
        s = lax.dot_general(q_scr[h], k_h, (((1,), (1,)), ((), ())),
                            preferred_element_type=f32)             # (q_tile, kv_tile)
        m_prev = m_scr[h]                                           # (q_tile, 1)
        m_new = jnp.maximum(m_prev, jnp.max(s, axis=-1, keepdims=True))
        alpha = jnp.exp(m_prev - m_new)                             # f32 softmax math
        p = jnp.exp(s - m_new)
        l_scr[h] = alpha * l_scr[h] + jnp.sum(p, axis=-1, keepdims=True)
        acc_scr[h] = alpha * acc_scr[h] + jnp.dot(p.astype(cdt), v_h,
                                                  preferred_element_type=f32)
        m_scr[h] = m_new

    # ---- last kv tile: normalize, concat heads, output projection + bias ----
    @pl.when(ki == n_kv - 1)
    def _finalize():
        if use_concat_out:
            # Lane-aligned head outputs (d % 128 == 0): concat + ONE full dot.
            outs = []
            for h in range(heads):
                inv = pl.reciprocal(l_scr[h], approx=True)
                outs.append((acc_scr[h] * inv).astype(cdt))
            cat = jnp.concatenate(outs, axis=-1)                     # (q_tile, dim)
            y = jnp.dot(cat, wout_ref[...].astype(cdt),
                        preferred_element_type=f32)
        else:
            # Sub-128 head dim: avoid unaligned lane concat; per-head partial
            # projections summed in f32 (wout_ref is (heads, d, dim) slabs).
            y = None
            for h in range(heads):
                inv = pl.reciprocal(l_scr[h], approx=True)
                out_h = (acc_scr[h] * inv).astype(cdt)               # (q_tile, d)
                part = jnp.dot(out_h, wout_ref[h].astype(cdt),
                               preferred_element_type=f32)
                y = part if y is None else y + part
        y = y + bout_ref[...].astype(f32)                            # (1, dim) bcast
        o_ref[0] = y.astype(o_ref.dtype)


# --------------------------------------------------------------------------- #
# Wrapper
# --------------------------------------------------------------------------- #
def attention_pallas(x, params, *, heads, prefer_bf16_matmul=False,
                     vmem_budget_bytes=40 * 1024 * 1024):
    wq, wk, wv, wout_p, bout = params
    b, n, dim = x.shape
    assert dim % heads == 0
    d = dim // heads
    assert wq.shape == (heads, dim, d)
    use_concat_out = (d % 128 == 0)
    assert wout_p.shape == ((dim, dim) if use_concat_out else (heads, d, dim))
    assert bout.shape == (1, dim)

    scale = float(dim) ** (-0.5)          # DIM**-0.5, exactly as the PyTorch module
    compute_dtype = jnp.bfloat16 if prefer_bf16_matmul else x.dtype

    q_tile, kv_tile = _pick_tiles(n, dim, heads, x.dtype, wq.dtype,
                                  compute_dtype, vmem_budget_bytes)
    num_q, num_kv = n // q_tile, n // kv_tile
    grid = (b, num_q, num_kv)

    # vmem limit derived from the computed footprint + headroom (not hardcoded).
    est = _estimate_vmem_bytes(q_tile, kv_tile, dim, heads, x.dtype, wq.dtype,
                               compute_dtype)
    vmem_limit = int(min(max(est + 16 * 2**20, 32 * 2**20), 96 * 2**20))

    flops = b * (2 * n * dim * dim                    # q projection
                 + num_q * (2 * n * dim * (2 * dim))  # k/v projections (per q tile)
                 + 2 * 2 * n * n * dim                # q.k^T and attn.v
                 + 2 * n * dim * dim)                 # output projection
    transcendentals = b * heads * n * n
    bytes_accessed = int(
        x.size * x.dtype.itemsize * (1 + num_q)
        + (wq.size + wk.size + wv.size + wout_p.size + bout.size)
        * wq.dtype.itemsize
        + b * n * dim * x.dtype.itemsize)

    kernel = functools.partial(_attention_kernel, heads=heads, scale=scale,
                               compute_dtype=compute_dtype,
                               use_concat_out=use_concat_out)

    return pl.pallas_call(
        kernel,
        out_shape=jax.ShapeDtypeStruct((b, n, dim), x.dtype),
        grid_spec=pltpu.PrefetchScalarGridSpec(
            num_scalar_prefetch=0,
            grid=grid,
            in_specs=[
                # x, sliced by q tile (constant across ki => fetched once per qi).
                pl.BlockSpec((1, q_tile, dim), lambda bi, qi, ki: (bi, qi, 0)),
                # x again, sliced by kv tile (flash inner loop).
                pl.BlockSpec((1, kv_tile, dim), lambda bi, qi, ki: (bi, ki, 0)),
                # Weights: unblocked, single-buffered, resident in VMEM.
                pl.BlockSpec(memory_space=pltpu.MemorySpace.VMEM),   # wq
                pl.BlockSpec(memory_space=pltpu.MemorySpace.VMEM),   # wk
                pl.BlockSpec(memory_space=pltpu.MemorySpace.VMEM),   # wv
                pl.BlockSpec(memory_space=pltpu.MemorySpace.VMEM),   # wout
                pl.BlockSpec(memory_space=pltpu.MemorySpace.VMEM),   # bout
            ],
            out_specs=pl.BlockSpec((1, q_tile, dim),
                                   lambda bi, qi, ki: (bi, qi, 0)),
            scratch_shapes=[
                pltpu.VMEM((heads, q_tile, d), compute_dtype),   # cached (scaled) q
                pltpu.VMEM((heads, q_tile, 1), jnp.float32),     # running max
                pltpu.VMEM((heads, q_tile, 1), jnp.float32),     # running sum
                pltpu.VMEM((heads, q_tile, d), jnp.float32),     # output accumulator
            ],
        ),
        compiler_params=pltpu.CompilerParams(
            dimension_semantics=("parallel", "parallel", "arbitrary"),
            vmem_limit_bytes=vmem_limit,
        ),
        cost_estimate=pl.CostEstimate(
            flops=int(flops),
            transcendentals=int(transcendentals),
            bytes_accessed=bytes_accessed,
        ),
    )(x, x, wq, wk, wv, wout_p, bout)


# --------------------------------------------------------------------------- #
# Plain-JAX reference (mirrors the PyTorch forward, mask=None)
# --------------------------------------------------------------------------- #
def attention_ref(x, wqkv, wout, bout, *, heads):
    b, n, dim = x.shape
    d = dim // heads
    qkv = x @ wqkv                                             # (b, n, 3*dim)
    qkv = qkv.reshape(b, n, 3, heads, d)                       # '(qkv h d)'
    q = jnp.transpose(qkv[:, :, 0], (0, 2, 1, 3))              # (b, h, n, d)
    k = jnp.transpose(qkv[:, :, 1], (0, 2, 1, 3))
    v = jnp.transpose(qkv[:, :, 2], (0, 2, 1, 3))
    dots = jnp.einsum('bhid,bhjd->bhij', q, k) * (dim ** -0.5)
    attn = jax.nn.softmax(dots, axis=-1)
    out = jnp.einsum('bhij,bhjd->bhid', attn, v)
    out = jnp.transpose(out, (0, 2, 1, 3)).reshape(b, n, dim)
    return out @ wout + bout.reshape(1, 1, dim)


if __name__ == "__main__":
    B, N, DIM, HEADS = 2, 8, 32, 8

    key = jax.random.PRNGKey(0)
    kx, kq, kw, kb = jax.random.split(key, 4)

    x = jax.random.normal(kx, (B, N, DIM), dtype=jnp.float32)
    # Parameters stored as (in, out) matrices so y = x @ W (+ b) — equivalent
    # parameterization of nn.Linear.
    wqkv = jax.random.normal(kq, (DIM, 3 * DIM), dtype=jnp.float32) * (DIM ** -0.5)
    wout = jax.random.normal(kw, (DIM, DIM), dtype=jnp.float32) * (DIM ** -0.5)
    bout = jax.random.normal(kb, (DIM,), dtype=jnp.float32) * 0.1

    ref = attention_ref(x, wqkv, wout, bout, heads=HEADS)

    # One-time parameter layout prep (parameter-load time, not per forward).
    params = prepare_attention_params(wqkv, wout, bout, heads=HEADS)

    # --- f32 path (exact MXU math; approx softmax reciprocal ~2^-12 rel) -----
    out = jax.block_until_ready(attention_pallas(x, params, heads=HEADS))
    assert out.shape == (B, N, DIM) and out.dtype == x.dtype
    assert jnp.allclose(out, ref, atol=5e-3, rtol=5e-3), "f32 mismatch vs reference"

    # --- f32 inputs with bf16-in / f32-acc MXU (gated fast path) -------------
    out_mx = jax.block_until_ready(
        attention_pallas(x, params, heads=HEADS, prefer_bf16_matmul=True))
    assert jnp.allclose(out_mx, ref, atol=1e-1, rtol=1e-1), \
        "bf16-matmul mismatch vs reference"

    # --- bf16 end-to-end smoke run --------------------------------------------
    params_bf16 = jax.tree_util.tree_map(lambda a: a.astype(jnp.bfloat16), params)
    out_bf16 = jax.block_until_ready(
        attention_pallas(x.astype(jnp.bfloat16), params_bf16, heads=HEADS))
    assert out_bf16.shape == (B, N, DIM) and out_bf16.dtype == jnp.bfloat16
    assert jnp.allclose(out_bf16.astype(jnp.float32), ref, atol=1e-1, rtol=1e-1), \
        "bf16 mismatch vs reference"

    print("KERNEL_OK")
</pallas_src>

<mosaic_0001>
module attributes {stable_mosaic.version = 11 : i64} {
  func.func @_attention_kernel(%arg0: i32, %arg1: i32, %arg2: i32, %arg3: memref<1x8x32xf32, #tpu.memory_space<vmem>>, %arg4: memref<1x8x32xf32, #tpu.memory_space<vmem>>, %arg5: memref<8x32x4xf32, #tpu.memory_space<vmem>>, %arg6: memref<8x32x4xf32, #tpu.memory_space<vmem>>, %arg7: memref<8x32x4xf32, #tpu.memory_space<vmem>>, %arg8: memref<8x4x32xf32, #tpu.memory_space<vmem>>, %arg9: memref<1x32xf32, #tpu.memory_space<vmem>>, %arg10: memref<1x8x32xf32, #tpu.memory_space<vmem>>, %arg11: memref<8x8x4xf32, #tpu.memory_space<vmem>>, %arg12: memref<8x8x1xf32, #tpu.memory_space<vmem>>, %arg13: memref<8x8x1xf32, #tpu.memory_space<vmem>>, %arg14: memref<8x8x4xf32, #tpu.memory_space<vmem>>) attributes {dimension_semantics = [#tpu.dimension_semantics<parallel>, #tpu.dimension_semantics<parallel>, #tpu.dimension_semantics<arbitrary>], iteration_bounds = array<i64: 2, 1, 1>, scalar_prefetch = 0 : i64, scratch_operands = 4 : i64, tpu.core_type = #tpu.core_type<tc>, window_params = [{transform_indices = @transform_0, window_bounds = array<i64: 1, 8, 32>}, {transform_indices = @transform_1, window_bounds = array<i64: 1, 8, 32>}, {pipeline_mode = #tpu.pipeline_mode<synchronous>, transform_indices = @transform_2, window_bounds = array<i64: 8, 32, 4>}, {pipeline_mode = #tpu.pipeline_mode<synchronous>, transform_indices = @transform_3, window_bounds = array<i64: 8, 32, 4>}, {pipeline_mode = #tpu.pipeline_mode<synchronous>, transform_indices = @transform_4, window_bounds = array<i64: 8, 32, 4>}, {pipeline_mode = #tpu.pipeline_mode<synchronous>, transform_indices = @transform_5, window_bounds = array<i64: 8, 4, 32>}, {pipeline_mode = #tpu.pipeline_mode<synchronous>, transform_indices = @transform_6, window_bounds = array<i64: 1, 32>}, {transform_indices = @transform_7, window_bounds = array<i64: 1, 8, 32>}]} {
    %c0_i32 = arith.constant 0 : i32
    %0 = arith.cmpi eq, %arg2, %c0_i32 : i32
    %1 = arith.extui %0 : i1 to i32
    %c0_i32_0 = arith.constant 0 : i32
    %2 = arith.cmpi ne, %1, %c0_i32_0 : i32
    scf.if %2 {
      %cst_261 = arith.constant 0xFF800000 : f32
      %328 = vector.broadcast %cst_261 : f32 to vector<8x8x1xf32>
      %c0_262 = arith.constant 0 : index
      %c0_263 = arith.constant 0 : index
      %c0_264 = arith.constant 0 : index
      %329 = vector.load %arg12[%c0_262, %c0_263, %c0_264] : memref<8x8x1xf32, #tpu.memory_space<vmem>>, vector<8x8x1xf32>
      tpu.vector_store %arg12[%c0_262, %c0_263, %c0_264], %328 {strides = array<i32>} : memref<8x8x1xf32, #tpu.memory_space<vmem>>, vector<8x8x1xf32>,
      %cst_265 = arith.constant 0.000000e+00 : f32
      %330 = vector.broadcast %cst_265 : f32 to vector<8x8x1xf32>
      %c0_266 = arith.constant 0 : index
      %c0_267 = arith.constant 0 : index
      %c0_268 = arith.constant 0 : index
      %331 = vector.load %arg13[%c0_266, %c0_267, %c0_268] : memref<8x8x1xf32, #tpu.memory_space<vmem>>, vector<8x8x1xf32>
      tpu.vector_store %arg13[%c0_266, %c0_267, %c0_268], %330 {strides = array<i32>} : memref<8x8x1xf32, #tpu.memory_space<vmem>>, vector<8x8x1xf32>,
      %cst_269 = arith.constant 0.000000e+00 : f32
      %332 = vector.broadcast %cst_269 : f32 to vector<8x8x4xf32>
      %c0_270 = arith.constant 0 : index
      %c0_271 = arith.constant 0 : index
      %c0_272 = arith.constant 0 : index
      %333 = vector.load %arg14[%c0_270, %c0_271, %c0_272] : memref<8x8x4xf32, #tpu.memory_space<vmem>>, vector<8x8x4xf32>
      tpu.vector_store %arg14[%c0_270, %c0_271, %c0_272], %332 {strides = array<i32>} : memref<8x8x4xf32, #tpu.memory_space<vmem>>, vector<8x8x4xf32>,
      %c0_273 = arith.constant 0 : index
      %c0_274 = arith.constant 0 : index
      %c0_275 = arith.constant 0 : index
      %334 = vector.load %arg3[%c0_273, %c0_274, %c0_275] : memref<1x8x32xf32, #tpu.memory_space<vmem>>, vector<1x8x32xf32>
      %335 = vector.shape_cast %334 : vector<1x8x32xf32> to vector<8x32xf32>
      %c0_276 = arith.constant 0 : index
      %c0_277 = arith.constant 0 : index
      %c0_278 = arith.constant 0 : index
      %336 = vector.load %arg5[%c0_276, %c0_277, %c0_278] : memref<8x32x4xf32, #tpu.memory_space<vmem>>, vector<1x32x4xf32>
      %337 = vector.shape_cast %336 : vector<1x32x4xf32> to vector<32x4xf32>
      %cst_279 = arith.constant dense<0.000000e+00> : vector<8x4xf32>
      %338 = tpu.matmul %335, %337, %cst_279 {dimension_numbers = #tpu.dot_dimension_numbers<[1], [0], [0], [1], [0, 0, 1, 1], [], []>} : vector<8x32xf32>, vector<32x4xf32>, vector<8x4xf32> -> vector<8x4xf32>
      %cst_280 = arith.constant 0.176776692 : f32
      %339 = vector.broadcast %cst_280 : f32 to vector<8x4xf32>
      %340 = arith.mulf %338, %339 : vector<8x4xf32>
      %c0_281 = arith.constant 0 : index
      %c0_282 = arith.constant 0 : index
      %c0_283 = arith.constant 0 : index
      %341 = vector.load %arg11[%c0_281, %c0_282, %c0_283] : memref<8x8x4xf32, #tpu.memory_space<vmem>>, vector<1x8x4xf32>
      %342 = vector.shape_cast %341 : vector<1x8x4xf32> to vector<8x4xf32>
      %343 = vector.shape_cast %340 : vector<8x4xf32> to vector<1x8x4xf32>
      tpu.vector_store %arg11[%c0_281, %c0_282, %c0_283], %343 {strides = array<i32>} : memref<8x8x4xf32, #tpu.memory_space<vmem>>, vector<1x8x4xf32>,
      %c1_284 = arith.constant 1 : index
      %c0_285 = arith.constant 0 : index
      %c0_286 = arith.constant 0 : index
      %344 = vector.load %arg5[%c1_284, %c0_285, %c0_286] : memref<8x32x4xf32, #tpu.memory_space<vmem>>, vector<1x32x4xf32>
      %345 = vector.shape_cast %344 : vector<1x32x4xf32> to vector<32x4xf32>
      %cst_287 = arith.constant dense<0.000000e+00> : vector<8x4xf32>
      %346 = tpu.matmul %335, %345, %cst_287 {dimension_numbers = #tpu.dot_dimension_numbers<[1], [0], [0], [1], [0, 0, 1, 1], [], []>} : vector<8x32xf32>, vector<32x4xf32>, vector<8x4xf32> -> vector<8x4xf32>
      %cst_288 = arith.constant 0.176776692 : f32
      %347 = vector.broadcast %cst_288 : f32 to vector<8x4xf32>
      %348 = arith.mulf %346, %347 : vector<8x4xf32>
      %c1_289 = arith.constant 1 : index
      %c0_290 = arith.constant 0 : index
      %c0_291 = arith.constant 0 : index
      %349 = vector.load %arg11[%c1_289, %c0_290, %c0_291] : memref<8x8x4xf32, #tpu.memory_space<vmem>>, vector<1x8x4xf32>
      %350 = vector.shape_cast %349 : vector<1x8x4xf32> to vector<8x4xf32>
      %351 = vector.shape_cast %348 : vector<8x4xf32> to vector<1x8x4xf32>
      tpu.vector_store %arg11[%c1_289, %c0_290, %c0_291], %351 {strides = array<i32>} : memref<8x8x4xf32, #tpu.memory_space<vmem>>, vector<1x8x4xf32>,
      %c2_292 = arith.constant 2 : index
      %c0_293 = arith.constant 0 : index
      %c0_294 = arith.constant 0 : index
      %352 = vector.load %arg5[%c2_292, %c0_293, %c0_294] : memref<8x32x4xf32, #tpu.memory_space<vmem>>, vector<1x32x4xf32>
      %353 = vector.shape_cast %352 : vector<1x32x4xf32> to vector<32x4xf32>
      %cst_295 = arith.constant dense<0.000000e+00> : vector<8x4xf32>
      %354 = tpu.matmul %335, %353, %cst_295 {dimension_numbers = #tpu.dot_dimension_numbers<[1], [0], [0], [1], [0, 0, 1, 1], [], []>} : vector<8x32xf32>, vector<32x4xf32>, vector<8x4xf32> -> vector<8x4xf32>
      %cst_296 = arith.constant 0.176776692 : f32
      %355 = vector.broadcast %cst_296 : f32 to vector<8x4xf32>
      %356 = arith.mulf %354, %355 : vector<8x4xf32>
      %c2_297 = arith.constant 2 : index
      %c0_298 = arith.constant 0 : index
      %c0_299 = arith.constant 0 : index
      %357 = vector.load %arg11[%c2_297, %c0_298, %c0_299] : memref<8x8x4xf32, #tpu.memory_space<vmem>>, vector<1x8x4xf32>
      %358 = vector.shape_cast %357 : vector<1x8x4xf32> to vector<8x4xf32>
      %359 = vector.shape_cast %356 : vector<8x4xf32> to vector<1x8x4xf32>
      tpu.vector_store %arg11[%c2_297, %c0_298, %c0_299], %359 {strides = array<i32>} : memref<8x8x4xf32, #tpu.memory_space<vmem>>, vector<1x8x4xf32>,
      %c3_300 = arith.constant 3 : index
      %c0_301 = arith.constant 0 : index
      %c0_302 = arith.constant 0 : index
      %360 = vector.load %arg5[%c3_300, %c0_301, %c0_302] : memref<8x32x4xf32, #tpu.memory_space<vmem>>, vector<1x32x4xf32>
      %361 = vector.shape_cast %360 : vector<1x32x4xf32> to vector<32x4xf32>
      %cst_303 = arith.constant dense<0.000000e+00> : vector<8x4xf32>
      %362 = tpu.matmul %335, %361, %cst_303 {dimension_numbers = #tpu.dot_dimension_numbers<[1], [0], [0], [1], [0, 0, 1, 1], [], []>} : vector<8x32xf32>, vector<32x4xf32>, vector<8x4xf32> -> vector<8x4xf32>
      %cst_304 = arith.constant 0.176776692 : f32
      %363 = vector.broadcast %cst_304 : f32 to vector<8x4xf32>
      %364 = arith.mulf %362, %363 : vector<8x4xf32>
      %c3_305 = arith.constant 3 : index
      %c0_306 = arith.constant 0 : index
      %c0_307 = arith.constant 0 : index
      %365 = vector.load %arg11[%c3_305, %c0_306, %c0_307] : memref<8x8x4xf32, #tpu.memory_space<vmem>>, vector<1x8x4xf32>
      %366 = vector.shape_cast %365 : vector<1x8x4xf32> to vector<8x4xf32>
      %367 = vector.shape_cast %364 : vector<8x4xf32> to vector<1x8x4xf32>
      tpu.vector_store %arg11[%c3_305, %c0_306, %c0_307], %367 {strides = array<i32>} : memref<8x8x4xf32, #tpu.memory_space<vmem>>, vector<1x8x4xf32>,
      %c4_308 = arith.constant 4 : index
      %c0_309 = arith.constant 0 : index
      %c0_310 = arith.constant 0 : index
      %368 = vector.load %arg5[%c4_308, %c0_309, %c0_310] : memref<8x32x4xf32, #tpu.memory_space<vmem>>, vector<1x32x4xf32>
      %369 = vector.shape_cast %368 : vector<1x32x4xf32> to vector<32x4xf32>
      %cst_311 = arith.constant dense<0.000000e+00> : vector<8x4xf32>
      %370 = tpu.matmul %335, %369, %cst_311 {dimension_numbers = #tpu.dot_dimension_numbers<[1], [0], [0], [1], [0, 0, 1, 1], [], []>} : vector<8x32xf32>, vector<32x4xf32>, vector<8x4xf32> -> vector<8x4xf32>
      %cst_312 = arith.constant 0.176776692 : f32
      %371 = vector.broadcast %cst_312 : f32 to vector<8x4xf32>
      %372 = arith.mulf %370, %371 : vector<8x4xf32>
      %c4_313 = arith.constant 4 : index
      %c0_314 = arith.constant 0 : index
      %c0_315 = arith.constant 0 : index
      %373 = vector.load %arg11[%c4_313, %c0_314, %c0_315] : memref<8x8x4xf32, #tpu.memory_space<vmem>>, vector<1x8x4xf32>
      %374 = vector.shape_cast %373 : vector<1x8x4xf32> to vector<8x4xf32>
      %375 = vector.shape_cast %372 : vector<8x4xf32> to vector<1x8x4xf32>
      tpu.vector_store %arg11[%c4_313, %c0_314, %c0_315], %375 {strides = array<i32>} : memref<8x8x4xf32, #tpu.memory_space<vmem>>, vector<1x8x4xf32>,
      %c5_316 = arith.constant 5 : index
      %c0_317 = arith.constant 0 : index
      %c0_318 = arith.constant 0 : index
      %376 = vector.load %arg5[%c5_316, %c0_317, %c0_318] : memref<8x32x4xf32, #tpu.memory_space<vmem>>, vector<1x32x4xf32>
      %377 = vector.shape_cast %376 : vector<1x32x4xf32> to vector<32x4xf32>
      %cst_319 = arith.constant dense<0.000000e+00> : vector<8x4xf32>
      %378 = tpu.matmul %335, %377, %cst_319 {dimension_numbers = #tpu.dot_dimension_numbers<[1], [0], [0], [1], [0, 0, 1, 1], [], []>} : vector<8x32xf32>, vector<32x4xf32>, vector<8x4xf32> -> vector<8x4xf32>
      %cst_320 = arith.constant 0.176776692 : f32
      %379 = vector.broadcast %cst_320 : f32 to vector<8x4xf32>
      %380 = arith.mulf %378, %379 : vector<8x4xf32>
      %c5_321 = arith.constant 5 : index
      %c0_322 = arith.constant 0 : index
      %c0_323 = arith.constant 0 : index
      %381 = vector.load %arg11[%c5_321, %c0_322, %c0_323] : memref<8x8x4xf32, #tpu.memory_space<vmem>>, vector<1x8x4xf32>
      %382 = vector.shape_cast %381 : vector<1x8x4xf32> to vector<8x4xf32>
      %383 = vector.shape_cast %380 : vector<8x4xf32> to vector<1x8x4xf32>
      tpu.vector_store %arg11[%c5_321, %c0_322, %c0_323], %383 {strides = array<i32>} : memref<8x8x4xf32, #tpu.memory_space<vmem>>, vector<1x8x4xf32>,
      %c6_324 = arith.constant 6 : index
      %c0_325 = arith.constant 0 : index
      %c0_326 = arith.constant 0 : index
      %384 = vector.load %arg5[%c6_324, %c0_325, %c0_326] : memref<8x32x4xf32, #tpu.memory_space<vmem>>, vector<1x32x4xf32>
      %385 = vector.shape_cast %384 : vector<1x32x4xf32> to vector<32x4xf32>
      %cst_327 = arith.constant dense<0.000000e+00> : vector<8x4xf32>
      %386 = tpu.matmul %335, %385, %cst_327 {dimension_numbers = #tpu.dot_dimension_numbers<[1], [0], [0], [1], [0, 0, 1, 1], [], []>} : vector<8x32xf32>, vector<32x4xf32>, vector<8x4xf32> -> vector<8x4xf32>
      %cst_328 = arith.constant 0.176776692 : f32
      %387 = vector.broadcast %cst_328 : f32 to vector<8x4xf32>
      %388 = arith.mulf %386, %387 : vector<8x4xf32>
      %c6_329 = arith.constant 6 : index
      %c0_330 = arith.constant 0 : index
      %c0_331 = arith.constant 0 : index
      %389 = vector.load %arg11[%c6_329, %c0_330, %c0_331] : memref<8x8x4xf32, #tpu.memory_space<vmem>>, vector<1x8x4xf32>
      %390 = vector.shape_cast %389 : vector<1x8x4xf32> to vector<8x4xf32>
      %391 = vector.shape_cast %388 : vector<8x4xf32> to vector<1x8x4xf32>
      tpu.vector_store %arg11[%c6_329, %c0_330, %c0_331], %391 {strides = array<i32>} : memref<8x8x4xf32, #tpu.memory_space<vmem>>, vector<1x8x4xf32>,
      %c7_332 = arith.constant 7 : index
      %c0_333 = arith.constant 0 : index
      %c0_334 = arith.constant 0 : index
      %392 = vector.load %arg5[%c7_332, %c0_333, %c0_334] : memref<8x32x4xf32, #tpu.memory_space<vmem>>, vector<1x32x4xf32>
      %393 = vector.shape_cast %392 : vector<1x32x4xf32> to vector<32x4xf32>
      %cst_335 = arith.constant dense<0.000000e+00> : vector<8x4xf32>
      %394 = tpu.matmul %335, %393, %cst_335 {dimension_numbers = #tpu.dot_dimension_numbers<[1], [0], [0], [1], [0, 0, 1, 1], [], []>} : vector<8x32xf32>, vector<32x4xf32>, vector<8x4xf32> -> vector<8x4xf32>
      %cst_336 = arith.constant 0.176776692 : f32
      %395 = vector.broadcast %cst_336 : f32 to vector<8x4xf32>
      %396 = arith.mulf %394, %395 : vector<8x4xf32>
      %c7_337 = arith.constant 7 : index
      %c0_338 = arith.constant 0 : index
      %c0_339 = arith.constant 0 : index
      %397 = vector.load %arg11[%c7_337, %c0_338, %c0_339] : memref<8x8x4xf32, #tpu.memory_space<vmem>>, vector<1x8x4xf32>
      %398 = vector.shape_cast %397 : vector<1x8x4xf32> to vector<8x4xf32>
      %399 = vector.shape_cast %396 : vector<8x4xf32> to vector<1x8x4xf32>
      tpu.vector_store %arg11[%c7_337, %c0_338, %c0_339], %399 {strides = array<i32>} : memref<8x8x4xf32, #tpu.memory_space<vmem>>, vector<1x8x4xf32>,
    } else {
    }
    %c0 = arith.constant 0 : index
    %c0_1 = arith.constant 0 : index
    %c0_2 = arith.constant 0 : index
    %3 = vector.load %arg4[%c0, %c0_1, %c0_2] : memref<1x8x32xf32, #tpu.memory_space<vmem>>, vector<1x8x32xf32>
    %4 = vector.shape_cast %3 : vector<1x8x32xf32> to vector<8x32xf32>
    %c0_3 = arith.constant 0 : index
    %c0_4 = arith.constant 0 : index
    %c0_5 = arith.constant 0 : index
    %5 = vector.load %arg6[%c0_3, %c0_4, %c0_5] : memref<8x32x4xf32, #tpu.memory_space<vmem>>, vector<1x32x4xf32>
    %6 = vector.shape_cast %5 : vector<1x32x4xf32> to vector<32x4xf32>
    %cst = arith.constant dense<0.000000e+00> : vector<8x4xf32>
    %7 = tpu.matmul %4, %6, %cst {dimension_numbers = #tpu.dot_dimension_numbers<[1], [0], [0], [1], [0, 0, 1, 1], [], []>} : vector<8x32xf32>, vector<32x4xf32>, vector<8x4xf32> -> vector<8x4xf32>
    %c0_6 = arith.constant 0 : index
    %c0_7 = arith.constant 0 : index
    %c0_8 = arith.constant 0 : index
    %8 = vector.load %arg7[%c0_6, %c0_7, %c0_8] : memref<8x32x4xf32, #tpu.memory_space<vmem>>, vector<1x32x4xf32>
    %9 = vector.shape_cast %8 : vector<1x32x4xf32> to vector<32x4xf32>
    %cst_9 = arith.constant dense<0.000000e+00> : vector<8x4xf32>
    %10 = tpu.matmul %4, %9, %cst_9 {dimension_numbers = #tpu.dot_dimension_numbers<[1], [0], [0], [1], [0, 0, 1, 1], [], []>} : vector<8x32xf32>, vector<32x4xf32>, vector<8x4xf32> -> vector<8x4xf32>
    %c0_10 = arith.constant 0 : index
    %c0_11 = arith.constant 0 : index
    %c0_12 = arith.constant 0 : index
    %11 = vector.load %arg11[%c0_10, %c0_11, %c0_12] : memref<8x8x4xf32, #tpu.memory_space<vmem>>, vector<1x8x4xf32>
    %12 = vector.shape_cast %11 : vector<1x8x4xf32> to vector<8x4xf32>
    %cst_13 = arith.constant dense<0.000000e+00> : vector<8x8xf32>
    %13 = tpu.matmul %12, %7, %cst_13 {dimension_numbers = #tpu.dot_dimension_numbers<[1], [1], [0], [0], [0, 0, 1, 0], [], []>} : vector<8x4xf32>, vector<8x4xf32>, vector<8x8xf32> -> vector<8x8xf32>
    %c0_14 = arith.constant 0 : index
    %c0_15 = arith.constant 0 : index
    %c0_16 = arith.constant 0 : index
    %14 = vector.load %arg12[%c0_14, %c0_15, %c0_16] : memref<8x8x1xf32, #tpu.memory_space<vmem>>, vector<1x8x1xf32>
    %15 = vector.shape_cast %14 : vector<1x8x1xf32> to vector<8x1xf32>
    %cst_17 = arith.constant dense<0xFF800000> : vector<8xf32>
    %16 = vector.multi_reduction <maximumf>, %13, %cst_17 [1] : vector<8x8xf32> to vector<8xf32>
    %17 = vector.shape_cast %16 : vector<8xf32> to vector<8x1xf32>
    %18 = arith.maximumf %15, %17 : vector<8x1xf32>
    %19 = arith.subf %15, %18 : vector<8x1xf32>
    %20 = math.exp %19 : vector<8x1xf32>
    %21 = vector.broadcast %18 : vector<8x1xf32> to vector<8x8xf32>
    %22 = arith.subf %13, %21 : vector<8x8xf32>
    %23 = math.exp %22 : vector<8x8xf32>
    %c0_18 = arith.constant 0 : index
    %c0_19 = arith.constant 0 : index
    %c0_20 = arith.constant 0 : index
    %24 = vector.load %arg13[%c0_18, %c0_19, %c0_20] : memref<8x8x1xf32, #tpu.memory_space<vmem>>, vector<1x8x1xf32>
    %25 = vector.shape_cast %24 : vector<1x8x1xf32> to vector<8x1xf32>
    %26 = arith.mulf %20, %25 : vector<8x1xf32>
    %cst_21 = arith.constant dense<0.000000e+00> : vector<8xf32>
    %27 = vector.multi_reduction <add>, %23, %cst_21 [1] : vector<8x8xf32> to vector<8xf32>
    %28 = vector.shape_cast %27 : vector<8xf32> to vector<8x1xf32>
    %29 = arith.addf %26, %28 : vector<8x1xf32>
    %c0_22 = arith.constant 0 : index
    %c0_23 = arith.constant 0 : index
    %c0_24 = arith.constant 0 : index
    %30 = vector.load %arg13[%c0_22, %c0_23, %c0_24] : memref<8x8x1xf32, #tpu.memory_space<vmem>>, vector<1x8x1xf32>
    %31 = vector.shape_cast %30 : vector<1x8x1xf32> to vector<8x1xf32>
    %32 = vector.shape_cast %29 : vector<8x1xf32> to vector<1x8x1xf32>
    tpu.vector_store %arg13[%c0_22, %c0_23, %c0_24], %32 {strides = array<i32>} : memref<8x8x1xf32, #tpu.memory_space<vmem>>, vector<1x8x1xf32>,
    %c0_25 = arith.constant 0 : index
    %c0_26 = arith.constant 0 : index
    %c0_27 = arith.constant 0 : index
    %33 = vector.load %arg14[%c0_25, %c0_26, %c0_27] : memref<8x8x4xf32, #tpu.memory_space<vmem>>, vector<1x8x4xf32>
    %34 = vector.shape_cast %33 : vector<1x8x4xf32> to vector<8x4xf32>
    %35 = vector.broadcast %20 : vector<8x1xf32> to vector<8x4xf32>
    %36 = arith.mulf %35, %34 : vector<8x4xf32>
    %cst_28 = arith.constant dense<0.000000e+00> : vector<8x4xf32>
    %37 = tpu.matmul %23, %10, %cst_28 {dimension_numbers = #tpu.dot_dimension_numbers<[1], [0], [0], [1], [0, 0, 1, 1], [], []>} : vector<8x8xf32>, vector<8x4xf32>, vector<8x4xf32> -> vector<8x4xf32>
    %38 = arith.addf %36, %37 : vector<8x4xf32>
    %c0_29 = arith.constant 0 : index
    %c0_30 = arith.constant 0 : index
    %c0_31 = arith.constant 0 : index
    %39 = vector.load %arg14[%c0_29, %c0_30, %c0_31] : memref<8x8x4xf32, #tpu.memory_space<vmem>>, vector<1x8x4xf32>
    %40 = vector.shape_cast %39 : vector<1x8x4xf32> to vector<8x4xf32>
    %41 = vector.shape_cast %38 : vector<8x4xf32> to vector<1x8x4xf32>
    tpu.vector_store %arg14[%c0_29, %c0_30, %c0_31], %41 {strides = array<i32>} : memref<8x8x4xf32, #tpu.memory_space<vmem>>, vector<1x8x4xf32>,
    %c0_32 = arith.constant 0 : index
    %c0_33 = arith.constant 0 : index
    %c0_34 = arith.constant 0 : index
    %42 = vector.load %arg12[%c0_32, %c0_33, %c0_34] : memref<8x8x1xf32, #tpu.memory_space<vmem>>, vector<1x8x1xf32>
    %43 = vector.shape_cast %42 : vector<1x8x1xf32> to vector<8x1xf32>
    %44 = vector.shape_cast %18 : vector<8x1xf32> to vector<1x8x1xf32>
    tpu.vector_store %arg12[%c0_32, %c0_33, %c0_34], %44 {strides = array<i32>} : memref<8x8x1xf32, #tpu.memory_space<vmem>>, vector<1x8x1xf32>,
    %c1 = arith.constant 1 : index
    %c0_35 = arith.constant 0 : index
    %c0_36 = arith.constant 0 : index
    %45 = vector.load %arg6[%c1, %c0_35, %c0_36] : memref<8x32x4xf32, #tpu.memory_space<vmem>>, vector<1x32x4xf32>
    %46 = vector.shape_cast %45 : vector<1x32x4xf32> to vector<32x4xf32>
    %cst_37 = arith.constant dense<0.000000e+00> : vector<8x4xf32>
    %47 = tpu.matmul %4, %46, %cst_37 {dimension_numbers = #tpu.dot_dimension_numbers<[1], [0], [0], [1], [0, 0, 1, 1], [], []>} : vector<8x32xf32>, vector<32x4xf32>, vector<8x4xf32> -> vector<8x4xf32>
    %c1_38 = arith.constant 1 : index
    %c0_39 = arith.constant 0 : index
    %c0_40 = arith.constant 0 : index
    %48 = vector.load %arg7[%c1_38, %c0_39, %c0_40] : memref<8x32x4xf32, #tpu.memory_space<vmem>>, vector<1x32x4xf32>
    %49 = vector.shape_cast %48 : vector<1x32x4xf32> to vector<32x4xf32>
    %cst_41 = arith.constant dense<0.000000e+00> : vector<8x4xf32>
    %50 = tpu.matmul %4, %49, %cst_41 {dimension_numbers = #tpu.dot_dimension_numbers<[1], [0], [0], [1], [0, 0, 1, 1], [], []>} : vector<8x32xf32>, vector<32x4xf32>, vector<8x4xf32> -> vector<8x4xf32>
    %c1_42 = arith.constant 1 : index
    %c0_43 = arith.constant 0 : index
    %c0_44 = arith.constant 0 : index
    %51 = vector.load %arg11[%c1_42, %c0_43, %c0_44] : memref<8x8x4xf32, #tpu.memory_space<vmem>>, vector<1x8x4xf32>
    %52 = vector.shape_cast %51 : vector<1x8x4xf32> to vector<8x4xf32>
    %cst_45 = arith.constant dense<0.000000e+00> : vector<8x8xf32>
    %53 = tpu.matmul %52, %47, %cst_45 {dimension_numbers = #tpu.dot_dimension_numbers<[1], [1], [0], [0], [0, 0, 1, 0], [], []>} : vector<8x4xf32>, vector<8x4xf32>, vector<8x8xf32> -> vector<8x8xf32>
    %c1_46 = arith.constant 1 : index
    %c0_47 = arith.constant 0 : index
    %c0_48 = arith.constant 0 : index
    %54 = vector.load %arg12[%c1_46, %c0_47, %c0_48] : memref<8x8x1xf32, #tpu.memory_space<vmem>>, vector<1x8x1xf32>
    %55 = vector.shape_cast %54 : vector<1x8x1xf32> to vector<8x1xf32>
    %cst_49 = arith.constant dense<0xFF800000> : vector<8xf32>
    %56 = vector.multi_reduction <maximumf>, %53, %cst_49 [1] : vector<8x8xf32> to vector<8xf32>
    %57 = vector.shape_cast %56 : vector<8xf32> to vector<8x1xf32>
    %58 = arith.maximumf %55, %57 : vector<8x1xf32>
    %59 = arith.subf %55, %58 : vector<8x1xf32>
    %60 = math.exp %59 : vector<8x1xf32>
    %61 = vector.broadcast %58 : vector<8x1xf32> to vector<8x8xf32>
    %62 = arith.subf %53, %61 : vector<8x8xf32>
    %63 = math.exp %62 : vector<8x8xf32>
    %c1_50 = arith.constant 1 : index
    %c0_51 = arith.constant 0 : index
    %c0_52 = arith.constant 0 : index
    %64 = vector.load %arg13[%c1_50, %c0_51, %c0_52] : memref<8x8x1xf32, #tpu.memory_space<vmem>>, vector<1x8x1xf32>
    %65 = vector.shape_cast %64 : vector<1x8x1xf32> to vector<8x1xf32>
    %66 = arith.mulf %60, %65 : vector<8x1xf32>
    %cst_53 = arith.constant dense<0.000000e+00> : vector<8xf32>
    %67 = vector.multi_reduction <add>, %63, %cst_53 [1] : vector<8x8xf32> to vector<8xf32>
    %68 = vector.shape_cast %67 : vector<8xf32> to vector<8x1xf32>
    %69 = arith.addf %66, %68 : vector<8x1xf32>
    %c1_54 = arith.constant 1 : index
    %c0_55 = arith.constant 0 : index
    %c0_56 = arith.constant 0 : index
    %70 = vector.load %arg13[%c1_54, %c0_55, %c0_56] : memref<8x8x1xf32, #tpu.memory_space<vmem>>, vector<1x8x1xf32>
    %71 = vector.shape_cast %70 : vector<1x8x1xf32> to vector<8x1xf32>
    %72 = vector.shape_cast %69 : vector<8x1xf32> to vector<1x8x1xf32>
    tpu.vector_store %arg13[%c1_54, %c0_55, %c0_56], %72 {strides = array<i32>} : memref<8x8x1xf32, #tpu.memory_space<vmem>>, vector<1x8x1xf32>,
    %c1_57 = arith.constant 1 : index
    %c0_58 = arith.constant 0 : index
    %c0_59 = arith.constant 0 : index
    %73 = vector.load %arg14[%c1_57, %c0_58, %c0_59] : memref<8x8x4xf32, #tpu.memory_space<vmem>>, vector<1x8x4xf32>
    %74 = vector.shape_cast %73 : vector<1x8x4xf32> to vector<8x4xf32>
    %75 = vector.broadcast %60 : vector<8x1xf32> to vector<8x4xf32>
    %76 = arith.mulf %75, %74 : vector<8x4xf32>
    %cst_60 = arith.constant dense<0.000000e+00> : vector<8x4xf32>
    %77 = tpu.matmul %63, %50, %cst_60 {dimension_numbers = #tpu.dot_dimension_numbers<[1], [0], [0], [1], [0, 0, 1, 1], [], []>} : vector<8x8xf32>, vector<8x4xf32>, vector<8x4xf32> -> vector<8x4xf32>
    %78 = arith.addf %76, %77 : vector<8x4xf32>
    %c1_61 = arith.constant 1 : index
    %c0_62 = arith.constant 0 : index
    %c0_63 = arith.constant 0 : index
    %79 = vector.load %arg14[%c1_61, %c0_62, %c0_63] : memref<8x8x4xf32, #tpu.memory_space<vmem>>, vector<1x8x4xf32>
    %80 = vector.shape_cast %79 : vector<1x8x4xf32> to vector<8x4xf32>
    %81 = vector.shape_cast %78 : vector<8x4xf32> to vector<1x8x4xf32>
    tpu.vector_store %arg14[%c1_61, %c0_62, %c0_63], %81 {strides = array<i32>} : memref<8x8x4xf32, #tpu.memory_space<vmem>>, vector<1x8x4xf32>,
    %c1_64 = arith.constant 1 : index
    %c0_65 = arith.constant 0 : index
    %c0_66 = arith.constant 0 : index
    %82 = vector.load %arg12[%c1_64, %c0_65, %c0_66] : memref<8x8x1xf32, #tpu.memory_space<vmem>>, vector<1x8x1xf32>
    %83 = vector.shape_cast %82 : vector<1x8x1xf32> to vector<8x1xf32>
    %84 = vector.shape_cast %58 : vector<8x1xf32> to vector<1x8x1xf32>
    tpu.vector_store %arg12[%c1_64, %c0_65, %c0_66], %84 {strides = array<i32>} : memref<8x8x1xf32, #tpu.memory_space<vmem>>, vector<1x8x1xf32>,
    %c2 = arith.constant 2 : index
    %c0_67 = arith.constant 0 : index
    %c0_68 = arith.constant 0 : index
    %85 = vector.load %arg6[%c2, %c0_67, %c0_68] : memref<8x32x4xf32, #tpu.memory_space<vmem>>, vector<1x32x4xf32>
    %86 = vector.shape_cast %85 : vector<1x32x4xf32> to vector<32x4xf32>
    %cst_69 = arith.constant dense<0.000000e+00> : vector<8x4xf32>
    %87 = tpu.matmul %4, %86, %cst_69 {dimension_numbers = #tpu.dot_dimension_numbers<[1], [0], [0], [1], [0, 0, 1, 1], [], []>} : vector<8x32xf32>, vector<32x4xf32>, vector<8x4xf32> -> vector<8x4xf32>
    %c2_70 = arith.constant 2 : index
    %c0_71 = arith.constant 0 : index
    %c0_72 = arith.constant 0 : index
    %88 = vector.load %arg7[%c2_70, %c0_71, %c0_72] : memref<8x32x4xf32, #tpu.memory_space<vmem>>, vector<1x32x4xf32>
    %89 = vector.shape_cast %88 : vector<1x32x4xf32> to vector<32x4xf32>
    %cst_73 = arith.constant dense<0.000000e+00> : vector<8x4xf32>
    %90 = tpu.matmul %4, %89, %cst_73 {dimension_numbers = #tpu.dot_dimension_numbers<[1], [0], [0], [1], [0, 0, 1, 1], [], []>} : vector<8x32xf32>, vector<32x4xf32>, vector<8x4xf32> -> vector<8x4xf32>
    %c2_74 = arith.constant 2 : index
    %c0_75 = arith.constant 0 : index
    %c0_76 = arith.constant 0 : index
    %91 = vector.load %arg11[%c2_74, %c0_75, %c0_76] : memref<8x8x4xf32, #tpu.memory_space<vmem>>, vector<1x8x4xf32>
    %92 = vector.shape_cast %91 : vector<1x8x4xf32> to vector<8x4xf32>
    %cst_77 = arith.constant dense<0.000000e+00> : vector<8x8xf32>
    %93 = tpu.matmul %92, %87, %cst_77 {dimension_numbers = #tpu.dot_dimension_numbers<[1], [1], [0], [0], [0, 0, 1, 0], [], []>} : vector<8x4xf32>, vector<8x4xf32>, vector<8x8xf32> -> vector<8x8xf32>
    %c2_78 = arith.constant 2 : index
    %c0_79 = arith.constant 0 : index
    %c0_80 = arith.constant 0 : index
    %94 = vector.load %arg12[%c2_78, %c0_79, %c0_80] : memref<8x8x1xf32, #tpu.memory_space<vmem>>, vector<1x8x1xf32>
    %95 = vector.shape_cast %94 : vector<1x8x1xf32> to vector<8x1xf32>
    %cst_81 = arith.constant dense<0xFF800000> : vector<8xf32>
    %96 = vector.multi_reduction <maximumf>, %93, %cst_81 [1] : vector<8x8xf32> to vector<8xf32>
    %97 = vector.shape_cast %96 : vector<8xf32> to vector<8x1xf32>
    %98 = arith.maximumf %95, %97 : vector<8x1xf32>
    %99 = arith.subf %95, %98 : vector<8x1xf32>
    %100 = math.exp %99 : vector<8x1xf32>
    %101 = vector.broadcast %98 : vector<8x1xf32> to vector<8x8xf32>
    %102 = arith.subf %93, %101 : vector<8x8xf32>
    %103 = math.exp %102 : vector<8x8xf32>
    %c2_82 = arith.constant 2 : index
    %c0_83 = arith.constant 0 : index
    %c0_84 = arith.constant 0 : index
    %104 = vector.load %arg13[%c2_82, %c0_83, %c0_84] : memref<8x8x1xf32, #tpu.memory_space<vmem>>, vector<1x8x1xf32>
    %105 = vector.shape_cast %104 : vector<1x8x1xf32> to vector<8x1xf32>
    %106 = arith.mulf %100, %105 : vector<8x1xf32>
    %cst_85 = arith.constant dense<0.000000e+00> : vector<8xf32>
    %107 = vector.multi_reduction <add>, %103, %cst_85 [1] : vector<8x8xf32> to vector<8xf32>
    %108 = vector.shape_cast %107 : vector<8xf32> to vector<8x1xf32>
    %109 = arith.addf %106, %108 : vector<8x1xf32>
    %c2_86 = arith.constant 2 : index
    %c0_87 = arith.constant 0 : index
    %c0_88 = arith.constant 0 : index
    %110 = vector.load %arg13[%c2_86, %c0_87, %c0_88] : memref<8x8x1xf32, #tpu.memory_space<vmem>>, vector<1x8x1xf32>
    %111 = vector.shape_cast %110 : vector<1x8x1xf32> to vector<8x1xf32>
    %112 = vector.shape_cast %109 : vector<8x1xf32> to vector<1x8x1xf32>
    tpu.vector_store %arg13[%c2_86, %c0_87, %c0_88], %112 {strides = array<i32>} : memref<8x8x1xf32, #tpu.memory_space<vmem>>, vector<1x8x1xf32>,
    %c2_89 = arith.constant 2 : index
    %c0_90 = arith.constant 0 : index
    %c0_91 = arith.constant 0 : index
    %113 = vector.load %arg14[%c2_89, %c0_90, %c0_91] : memref<8x8x4xf32, #tpu.memory_space<vmem>>, vector<1x8x4xf32>
    %114 = vector.shape_cast %113 : vector<1x8x4xf32> to vector<8x4xf32>
    %115 = vector.broadcast %100 : vector<8x1xf32> to vector<8x4xf32>
    %116 = arith.mulf %115, %114 : vector<8x4xf32>
    %cst_92 = arith.constant dense<0.000000e+00> : vector<8x4xf32>
    %117 = tpu.matmul %103, %90, %cst_92 {dimension_numbers = #tpu.dot_dimension_numbers<[1], [0], [0], [1], [0, 0, 1, 1], [], []>} : vector<8x8xf32>, vector<8x4xf32>, vector<8x4xf32> -> vector<8x4xf32>
    %118 = arith.addf %116, %117 : vector<8x4xf32>
    %c2_93 = arith.constant 2 : index
    %c0_94 = arith.constant 0 : index
    %c0_95 = arith.constant 0 : index
    %119 = vector.load %arg14[%c2_93, %c0_94, %c0_95] : memref<8x8x4xf32, #tpu.memory_space<vmem>>, vector<1x8x4xf32>
    %120 = vector.shape_cast %119 : vector<1x8x4xf32> to vector<8x4xf32>
    %121 = vector.shape_cast %118 : vector<8x4xf32> to vector<1x8x4xf32>
    tpu.vector_store %arg14[%c2_93, %c0_94, %c0_95], %121 {strides = array<i32>} : memref<8x8x4xf32, #tpu.memory_space<vmem>>, vector<1x8x4xf32>,
    %c2_96 = arith.constant 2 : index
    %c0_97 = arith.constant 0 : index
    %c0_98 = arith.constant 0 : index
    %122 = vector.load %arg12[%c2_96, %c0_97, %c0_98] : memref<8x8x1xf32, #tpu.memory_space<vmem>>, vector<1x8x1xf32>
    %123 = vector.shape_cast %122 : vector<1x8x1xf32> to vector<8x1xf32>
    %124 = vector.shape_cast %98 : vector<8x1xf32> to vector<1x8x1xf32>
    tpu.vector_store %arg12[%c2_96, %c0_97, %c0_98], %124 {strides = array<i32>} : memref<8x8x1xf32, #tpu.memory_space<vmem>>, vector<1x8x1xf32>,
    %c3 = arith.constant 3 : index
    %c0_99 = arith.constant 0 : index
    %c0_100 = arith.constant 0 : index
    %125 = vector.load %arg6[%c3, %c0_99, %c0_100] : memref<8x32x4xf32, #tpu.memory_space<vmem>>, vector<1x32x4xf32>
    %126 = vector.shape_cast %125 : vector<1x32x4xf32> to vector<32x4xf32>
    %cst_101 = arith.constant dense<0.000000e+00> : vector<8x4xf32>
    %127 = tpu.matmul %4, %126, %cst_101 {dimension_numbers = #tpu.dot_dimension_numbers<[1], [0], [0], [1], [0, 0, 1, 1], [], []>} : vector<8x32xf32>, vector<32x4xf32>, vector<8x4xf32> -> vector<8x4xf32>
    %c3_102 = arith.constant 3 : index
    %c0_103 = arith.constant 0 : index
    %c0_104 = arith.constant 0 : index
    %128 = vector.load %arg7[%c3_102, %c0_103, %c0_104] : memref<8x32x4xf32, #tpu.memory_space<vmem>>, vector<1x32x4xf32>
    %129 = vector.shape_cast %128 : vector<1x32x4xf32> to vector<32x4xf32>
    %cst_105 = arith.constant dense<0.000000e+00> : vector<8x4xf32>
    %130 = tpu.matmul %4, %129, %cst_105 {dimension_numbers = #tpu.dot_dimension_numbers<[1], [0], [0], [1], [0, 0, 1, 1], [], []>} : vector<8x32xf32>, vector<32x4xf32>, vector<8x4xf32> -> vector<8x4xf32>
    %c3_106 = arith.constant 3 : index
    %c0_107 = arith.constant 0 : index
    %c0_108 = arith.constant 0 : index
    %131 = vector.load %arg11[%c3_106, %c0_107, %c0_108] : memref<8x8x4xf32, #tpu.memory_space<vmem>>, vector<1x8x4xf32>
    %132 = vector.shape_cast %131 : vector<1x8x4xf32> to vector<8x4xf32>
    %cst_109 = arith.constant dense<0.000000e+00> : vector<8x8xf32>
    %133 = tpu.matmul %132, %127, %cst_109 {dimension_numbers = #tpu.dot_dimension_numbers<[1], [1], [0], [0], [0, 0, 1, 0], [], []>} : vector<8x4xf32>, vector<8x4xf32>, vector<8x8xf32> -> vector<8x8xf32>
    %c3_110 = arith.constant 3 : index
    %c0_111 = arith.constant 0 : index
    %c0_112 = arith.constant 0 : index
    %134 = vector.load %arg12[%c3_110, %c0_111, %c0_112] : memref<8x8x1xf32, #tpu.memory_space<vmem>>, vector<1x8x1xf32>
    %135 = vector.shape_cast %134 : vector<1x8x1xf32> to vector<8x1xf32>
    %cst_113 = arith.constant dense<0xFF800000> : vector<8xf32>
    %136 = vector.multi_reduction <maximumf>, %133, %cst_113 [1] : vector<8x8xf32> to vector<8xf32>
    %137 = vector.shape_cast %136 : vector<8xf32> to vector<8x1xf32>
    %138 = arith.maximumf %135, %137 : vector<8x1xf32>
    %139 = arith.subf %135, %138 : vector<8x1xf32>
    %140 = math.exp %139 : vector<8x1xf32>
    %141 = vector.broadcast %138 : vector<8x1xf32> to vector<8x8xf32>
    %142 = arith.subf %133, %141 : vector<8x8xf32>
    %143 = math.exp %142 : vector<8x8xf32>
    %c3_114 = arith.constant 3 : index
    %c0_115 = arith.constant 0 : index
    %c0_116 = arith.constant 0 : index
    %144 = vector.load %arg13[%c3_114, %c0_115, %c0_116] : memref<8x8x1xf32, #tpu.memory_space<vmem>>, vector<1x8x1xf32>
    %145 = vector.shape_cast %144 : vector<1x8x1xf32> to vector<8x1xf32>
    %146 = arith.mulf %140, %145 : vector<8x1xf32>
    %cst_117 = arith.constant dense<0.000000e+00> : vector<8xf32>
    %147 = vector.multi_reduction <add>, %143, %cst_117 [1] : vector<8x8xf32> to vector<8xf32>
    %148 = vector.shape_cast %147 : vector<8xf32> to vector<8x1xf32>
    %149 = arith.addf %146, %148 : vector<8x1xf32>
    %c3_118 = arith.constant 3 : index
    %c0_119 = arith.constant 0 : index
    %c0_120 = arith.constant 0 : index
    %150 = vector.load %arg13[%c3_118, %c0_119, %c0_120] : memref<8x8x1xf32, #tpu.memory_space<vmem>>, vector<1x8x1xf32>
    %151 = vector.shape_cast %150 : vector<1x8x1xf32> to vector<8x1xf32>
    %152 = vector.shape_cast %149 : vector<8x1xf32> to vector<1x8x1xf32>
    tpu.vector_store %arg13[%c3_118, %c0_119, %c0_120], %152 {strides = array<i32>} : memref<8x8x1xf32, #tpu.memory_space<vmem>>, vector<1x8x1xf32>,
    %c3_121 = arith.constant 3 : index
    %c0_122 = arith.constant 0 : index
    %c0_123 = arith.constant 0 : index
    %153 = vector.load %arg14[%c3_121, %c0_122, %c0_123] : memref<8x8x4xf32, #tpu.memory_space<vmem>>, vector<1x8x4xf32>
    %154 = vector.shape_cast %153 : vector<1x8x4xf32> to vector<8x4xf32>
    %155 = vector.broadcast %140 : vector<8x1xf32> to vector<8x4xf32>
    %156 = arith.mulf %155, %154 : vector<8x4xf32>
    %cst_124 = arith.constant dense<0.000000e+00> : vector<8x4xf32>
    %157 = tpu.matmul %143, %130, %cst_124 {dimension_numbers = #tpu.dot_dimension_numbers<[1], [0], [0], [1], [0, 0, 1, 1], [], []>} : vector<8x8xf32>, vector<8x4xf32>, vector<8x4xf32> -> vector<8x4xf32>
    %158 = arith.addf %156, %157 : vector<8x4xf32>
    %c3_125 = arith.constant 3 : index
    %c0_126 = arith.constant 0 : index
    %c0_127 = arith.constant 0 : index
    %159 = vector.load %arg14[%c3_125, %c0_126, %c0_127] : memref<8x8x4xf32, #tpu.memory_space<vmem>>, vector<1x8x4xf32>
    %160 = vector.shape_cast %159 : vector<1x8x4xf32> to vector<8x4xf32>
    %161 = vector.shape_cast %158 : vector<8x4xf32> to vector<1x8x4xf32>
    tpu.vector_store %arg14[%c3_125, %c0_126, %c0_127], %161 {strides = array<i32>} : memref<8x8x4xf32, #tpu.memory_space<vmem>>, vector<1x8x4xf32>,
    %c3_128 = arith.constant 3 : index
    %c0_129 = arith.constant 0 : index
    %c0_130 = arith.constant 0 : index
    %162 = vector.load %arg12[%c3_128, %c0_129, %c0_130] : memref<8x8x1xf32, #tpu.memory_space<vmem>>, vector<1x8x1xf32>
    %163 = vector.shape_cast %162 : vector<1x8x1xf32> to vector<8x1xf32>
    %164 = vector.shape_cast %138 : vector<8x1xf32> to vector<1x8x1xf32>
    tpu.vector_store %arg12[%c3_128, %c0_129, %c0_130], %164 {strides = array<i32>} : memref<8x8x1xf32, #tpu.memory_space<vmem>>, vector<1x8x1xf32>,
    %c4 = arith.constant 4 : index
    %c0_131 = arith.constant 0 : index
    %c0_132 = arith.constant 0 : index
    %165 = vector.load %arg6[%c4, %c0_131, %c0_132] : memref<8x32x4xf32, #tpu.memory_space<vmem>>, vector<1x32x4xf32>
    %166 = vector.shape_cast %165 : vector<1x32x4xf32> to vector<32x4xf32>
    %cst_133 = arith.constant dense<0.000000e+00> : vector<8x4xf32>
    %167 = tpu.matmul %4, %166, %cst_133 {dimension_numbers = #tpu.dot_dimension_numbers<[1], [0], [0], [1], [0, 0, 1, 1], [], []>} : vector<8x32xf32>, vector<32x4xf32>, vector<8x4xf32> -> vector<8x4xf32>
    %c4_134 = arith.constant 4 : index
    %c0_135 = arith.constant 0 : index
    %c0_136 = arith.constant 0 : index
    %168 = vector.load %arg7[%c4_134, %c0_135, %c0_136] : memref<8x32x4xf32, #tpu.memory_space<vmem>>, vector<1x32x4xf32>
    %169 = vector.shape_cast %168 : vector<1x32x4xf32> to vector<32x4xf32>
    %cst_137 = arith.constant dense<0.000000e+00> : vector<8x4xf32>
    %170 = tpu.matmul %4, %169, %cst_137 {dimension_numbers = #tpu.dot_dimension_numbers<[1], [0], [0], [1], [0, 0, 1, 1], [], []>} : vector<8x32xf32>, vector<32x4xf32>, vector<8x4xf32> -> vector<8x4xf32>
    %c4_138 = arith.constant 4 : index
    %c0_139 = arith.constant 0 : index
    %c0_140 = arith.constant 0 : index
    %171 = vector.load %arg11[%c4_138, %c0_139, %c0_140] : memref<8x8x4xf32, #tpu.memory_space<vmem>>, vector<1x8x4xf32>
    %172 = vector.shape_cast %171 : vector<1x8x4xf32> to vector<8x4xf32>
    %cst_141 = arith.constant dense<0.000000e+00> : vector<8x8xf32>
    %173 = tpu.matmul %172, %167, %cst_141 {dimension_numbers = #tpu.dot_dimension_numbers<[1], [1], [0], [0], [0, 0, 1, 0], [], []>} : vector<8x4xf32>, vector<8x4xf32>, vector<8x8xf32> -> vector<8x8xf32>
    %c4_142 = arith.constant 4 : index
    %c0_143 = arith.constant 0 : index
    %c0_144 = arith.constant 0 : index
    %174 = vector.load %arg12[%c4_142, %c0_143, %c0_144] : memref<8x8x1xf32, #tpu.memory_space<vmem>>, vector<1x8x1xf32>
    %175 = vector.shape_cast %174 : vector<1x8x1xf32> to vector<8x1xf32>
    %cst_145 = arith.constant dense<0xFF800000> : vector<8xf32>
    %176 = vector.multi_reduction <maximumf>, %173, %cst_145 [1] : vector<8x8xf32> to vector<8xf32>
    %177 = vector.shape_cast %176 : vector<8xf32> to vector<8x1xf32>
    %178 = arith.maximumf %175, %177 : vector<8x1xf32>
    %179 = arith.subf %175, %178 : vector<8x1xf32>
    %180 = math.exp %179 : vector<8x1xf32>
    %181 = vector.broadcast %178 : vector<8x1xf32> to vector<8x8xf32>
    %182 = arith.subf %173, %181 : vector<8x8xf32>
    %183 = math.exp %182 : vector<8x8xf32>
    %c4_146 = arith.constant 4 : index
    %c0_147 = arith.constant 0 : index
    %c0_148 = arith.constant 0 : index
    %184 = vector.load %arg13[%c4_146, %c0_147, %c0_148] : memref<8x8x1xf32, #tpu.memory_space<vmem>>, vector<1x8x1xf32>
    %185 = vector.shape_cast %184 : vector<1x8x1xf32> to vector<8x1xf32>
    %186 = arith.mulf %180, %185 : vector<8x1xf32>
    %cst_149 = arith.constant dense<0.000000e+00> : vector<8xf32>
    %187 = vector.multi_reduction <add>, %183, %cst_149 [1] : vector<8x8xf32> to vector<8xf32>
    %188 = vector.shape_cast %187 : vector<8xf32> to vector<8x1xf32>
    %189 = arith.addf %186, %188 : vector<8x1xf32>
    %c4_150 = arith.constant 4 : index
    %c0_151 = arith.constant 0 : index
    %c0_152 = arith.constant 0 : index
    %190 = vector.load %arg13[%c4_150, %c0_151, %c0_152] : memref<8x8x1xf32, #tpu.memory_space<vmem>>, vector<1x8x1xf32>
    %191 = vector.shape_cast %190 : vector<1x8x1xf32> to vector<8x1xf32>
    %192 = vector.shape_cast %189 : vector<8x1xf32> to vector<1x8x1xf32>
    tpu.vector_store %arg13[%c4_150, %c0_151, %c0_152], %192 {strides = array<i32>} : memref<8x8x1xf32, #tpu.memory_space<vmem>>, vector<1x8x1xf32>,
    %c4_153 = arith.constant 4 : index
    %c0_154 = arith.constant 0 : index
    %c0_155 = arith.constant 0 : index
    %193 = vector.load %arg14[%c4_153, %c0_154, %c0_155] : memref<8x8x4xf32, #tpu.memory_space<vmem>>, vector<1x8x4xf32>
    %194 = vector.shape_cast %193 : vector<1x8x4xf32> to vector<8x4xf32>
    %195 = vector.broadcast %180 : vector<8x1xf32> to vector<8x4xf32>
    %196 = arith.mulf %195, %194 : vector<8x4xf32>
    %cst_156 = arith.constant dense<0.000000e+00> : vector<8x4xf32>
    %197 = tpu.matmul %183, %170, %cst_156 {dimension_numbers = #tpu.dot_dimension_numbers<[1], [0], [0], [1], [0, 0, 1, 1], [], []>} : vector<8x8xf32>, vector<8x4xf32>, vector<8x4xf32> -> vector<8x4xf32>
    %198 = arith.addf %196, %197 : vector<8x4xf32>
    %c4_157 = arith.constant 4 : index
    %c0_158 = arith.constant 0 : index
    %c0_159 = arith.constant 0 : index
    %199 = vector.load %arg14[%c4_157, %c0_158, %c0_159] : memref<8x8x4xf32, #tpu.memory_space<vmem>>, vector<1x8x4xf32>
    %200 = vector.shape_cast %199 : vector<1x8x4xf32> to vector<8x4xf32>
    %201 = vector.shape_cast %198 : vector<8x4xf32> to vector<1x8x4xf32>
    tpu.vector_store %arg14[%c4_157, %c0_158, %c0_159], %201 {strides = array<i32>} : memref<8x8x4xf32, #tpu.memory_space<vmem>>, vector<1x8x4xf32>,
    %c4_160 = arith.constant 4 : index
    %c0_161 = arith.constant 0 : index
    %c0_162 = arith.constant 0 : index
    %202 = vector.load %arg12[%c4_160, %c0_161, %c0_162] : memref<8x8x1xf32, #tpu.memory_space<vmem>>, vector<1x8x1xf32>
    %203 = vector.shape_cast %202 : vector<1x8x1xf32> to vector<8x1xf32>
    %204 = vector.shape_cast %178 : vector<8x1xf32> to vector<1x8x1xf32>
    tpu.vector_store %arg12[%c4_160, %c0_161, %c0_162], %204 {strides = array<i32>} : memref<8x8x1xf32, #tpu.memory_space<vmem>>, vector<1x8x1xf32>,
    %c5 = arith.constant 5 : index
    %c0_163 = arith.constant 0 : index
    %c0_164 = arith.constant 0 : index
    %205 = vector.load %arg6[%c5, %c0_163, %c0_164] : memref<8x32x4xf32, #tpu.memory_space<vmem>>, vector<1x32x4xf32>
    %206 = vector.shape_cast %205 : vector<1x32x4xf32> to vector<32x4xf32>
    %cst_165 = arith.constant dense<0.000000e+00> : vector<8x4xf32>
    %207 = tpu.matmul %4, %206, %cst_165 {dimension_numbers = #tpu.dot_dimension_numbers<[1], [0], [0], [1], [0, 0, 1, 1], [], []>} : vector<8x32xf32>, vector<32x4xf32>, vector<8x4xf32> -> vector<8x4xf32>
    %c5_166 = arith.constant 5 : index
    %c0_167 = arith.constant 0 : index
    %c0_168 = arith.constant 0 : index
    %208 = vector.load %arg7[%c5_166, %c0_167, %c0_168] : memref<8x32x4xf32, #tpu.memory_space<vmem>>, vector<1x32x4xf32>
    %209 = vector.shape_cast %208 : vector<1x32x4xf32> to vector<32x4xf32>
    %cst_169 = arith.constant dense<0.000000e+00> : vector<8x4xf32>
    %210 = tpu.matmul %4, %209, %cst_169 {dimension_numbers = #tpu.dot_dimension_numbers<[1], [0], [0], [1], [0, 0, 1, 1], [], []>} : vector<8x32xf32>, vector<32x4xf32>, vector<8x4xf32> -> vector<8x4xf32>
    %c5_170 = arith.constant 5 : index
    %c0_171 = arith.constant 0 : index
    %c0_172 = arith.constant 0 : index
    %211 = vector.load %arg11[%c5_170, %c0_171, %c0_172] : memref<8x8x4xf32, #tpu.memory_space<vmem>>, vector<1x8x4xf32>
    %212 = vector.shape_cast %211 : vector<1x8x4xf32> to vector<8x4xf32>
    %cst_173 = arith.constant dense<0.000000e+00> : vector<8x8xf32>
    %213 = tpu.matmul %212, %207, %cst_173 {dimension_numbers = #tpu.dot_dimension_numbers<[1], [1], [0], [0], [0, 0, 1, 0], [], []>} : vector<8x4xf32>, vector<8x4xf32>, vector<8x8xf32> -> vector<8x8xf32>
    %c5_174 = arith.constant 5 : index
    %c0_175 = arith.constant 0 : index
    %c0_176 = arith.constant 0 : index
    %214 = vector.load %arg12[%c5_174, %c0_175, %c0_176] : memref<8x8x1xf32, #tpu.memory_space<vmem>>, vector<1x8x1xf32>
    %215 = vector.shape_cast %214 : vector<1x8x1xf32> to vector<8x1xf32>
    %cst_177 = arith.constant dense<0xFF800000> : vector<8xf32>
    %216 = vector.multi_reduction <maximumf>, %213, %cst_177 [1] : vector<8x8xf32> to vector<8xf32>
    %217 = vector.shape_cast %216 : vector<8xf32> to vector<8x1xf32>
    %218 = arith.maximumf %215, %217 : vector<8x1xf32>
    %219 = arith.subf %215, %218 : vector<8x1xf32>
    %220 = math.exp %219 : vector<8x1xf32>
    %221 = vector.broadcast %218 : vector<8x1xf32> to vector<8x8xf32>
    %222 = arith.subf %213, %221 : vector<8x8xf32>
    %223 = math.exp %222 : vector<8x8xf32>
    %c5_178 = arith.constant 5 : index
    %c0_179 = arith.constant 0 : index
    %c0_180 = arith.constant 0 : index
    %224 = vector.load %arg13[%c5_178, %c0_179, %c0_180] : memref<8x8x1xf32, #tpu.memory_space<vmem>>, vector<1x8x1xf32>
    %225 = vector.shape_cast %224 : vector<1x8x1xf32> to vector<8x1xf32>
    %226 = arith.mulf %220, %225 : vector<8x1xf32>
    %cst_181 = arith.constant dense<0.000000e+00> : vector<8xf32>
    %227 = vector.multi_reduction <add>, %223, %cst_181 [1] : vector<8x8xf32> to vector<8xf32>
    %228 = vector.shape_cast %227 : vector<8xf32> to vector<8x1xf32>
    %229 = arith.addf %226, %228 : vector<8x1xf32>
    %c5_182 = arith.constant 5 : index
    %c0_183 = arith.constant 0 : index
    %c0_184 = arith.constant 0 : index
    %230 = vector.load %arg13[%c5_182, %c0_183, %c0_184] : memref<8x8x1xf32, #tpu.memory_space<vmem>>, vector<1x8x1xf32>
    %231 = vector.shape_cast %230 : vector<1x8x1xf32> to vector<8x1xf32>
    %232 = vector.shape_cast %229 : vector<8x1xf32> to vector<1x8x1xf32>
    tpu.vector_store %arg13[%c5_182, %c0_183, %c0_184], %232 {strides = array<i32>} : memref<8x8x1xf32, #tpu.memory_space<vmem>>, vector<1x8x1xf32>,
    %c5_185 = arith.constant 5 : index
    %c0_186 = arith.constant 0 : index
    %c0_187 = arith.constant 0 : index
    %233 = vector.load %arg14[%c5_185, %c0_186, %c0_187] : memref<8x8x4xf32, #tpu.memory_space<vmem>>, vector<1x8x4xf32>
    %234 = vector.shape_cast %233 : vector<1x8x4xf32> to vector<8x4xf32>
    %235 = vector.broadcast %220 : vector<8x1xf32> to vector<8x4xf32>
    %236 = arith.mulf %235, %234 : vector<8x4xf32>
    %cst_188 = arith.constant dense<0.000000e+00> : vector<8x4xf32>
    %237 = tpu.matmul %223, %210, %cst_188 {dimension_numbers = #tpu.dot_dimension_numbers<[1], [0], [0], [1], [0, 0, 1, 1], [], []>} : vector<8x8xf32>, vector<8x4xf32>, vector<8x4xf32> -> vector<8x4xf32>
    %238 = arith.addf %236, %237 : vector<8x4xf32>
    %c5_189 = arith.constant 5 : index
    %c0_190 = arith.constant 0 : index
    %c0_191 = arith.constant 0 : index
    %239 = vector.load %arg14[%c5_189, %c0_190, %c0_191] : memref<8x8x4xf32, #tpu.memory_space<vmem>>, vector<1x8x4xf32>
    %240 = vector.shape_cast %239 : vector<1x8x4xf32> to vector<8x4xf32>
    %241 = vector.shape_cast %238 : vector<8x4xf32> to vector<1x8x4xf32>
    tpu.vector_store %arg14[%c5_189, %c0_190, %c0_191], %241 {strides = array<i32>} : memref<8x8x4xf32, #tpu.memory_space<vmem>>, vector<1x8x4xf32>,
    %c5_192 = arith.constant 5 : index
    %c0_193 = arith.constant 0 : index
    %c0_194 = arith.constant 0 : index
    %242 = vector.load %arg12[%c5_192, %c0_193, %c0_194] : memref<8x8x1xf32, #tpu.memory_space<vmem>>, vector<1x8x1xf32>
    %243 = vector.shape_cast %242 : vector<1x8x1xf32> to vector<8x1xf32>
    %244 = vector.shape_cast %218 : vector<8x1xf32> to vector<1x8x1xf32>
    tpu.vector_store %arg12[%c5_192, %c0_193, %c0_194], %244 {strides = array<i32>} : memref<8x8x1xf32, #tpu.memory_space<vmem>>, vector<1x8x1xf32>,
    %c6 = arith.constant 6 : index
    %c0_195 = arith.constant 0 : index
    %c0_196 = arith.constant 0 : index
    %245 = vector.load %arg6[%c6, %c0_195, %c0_196] : memref<8x32x4xf32, #tpu.memory_space<vmem>>, vector<1x32x4xf32>
    %246 = vector.shape_cast %245 : vector<1x32x4xf32> to vector<32x4xf32>
    %cst_197 = arith.constant dense<0.000000e+00> : vector<8x4xf32>
    %247 = tpu.matmul %4, %246, %cst_197 {dimension_numbers = #tpu.dot_dimension_numbers<[1], [0], [0], [1], [0, 0, 1, 1], [], []>} : vector<8x32xf32>, vector<32x4xf32>, vector<8x4xf32> -> vector<8x4xf32>
    %c6_198 = arith.constant 6 : index
    %c0_199 = arith.constant 0 : index
    %c0_200 = arith.constant 0 : index
    %248 = vector.load %arg7[%c6_198, %c0_199, %c0_200] : memref<8x32x4xf32, #tpu.memory_space<vmem>>, vector<1x32x4xf32>
    %249 = vector.shape_cast %248 : vector<1x32x4xf32> to vector<32x4xf32>
    %cst_201 = arith.constant dense<0.000000e+00> : vector<8x4xf32>
    %250 = tpu.matmul %4, %249, %cst_201 {dimension_numbers = #tpu.dot_dimension_numbers<[1], [0], [0], [1], [0, 0, 1, 1], [], []>} : vector<8x32xf32>, vector<32x4xf32>, vector<8x4xf32> -> vector<8x4xf32>
    %c6_202 = arith.constant 6 : index
    %c0_203 = arith.constant 0 : index
    %c0_204 = arith.constant 0 : index
    %251 = vector.load %arg11[%c6_202, %c0_203, %c0_204] : memref<8x8x4xf32, #tpu.memory_space<vmem>>, vector<1x8x4xf32>
    %252 = vector.shape_cast %251 : vector<1x8x4xf32> to vector<8x4xf32>
    %cst_205 = arith.constant dense<0.000000e+00> : vector<8x8xf32>
    %253 = tpu.matmul %252, %247, %cst_205 {dimension_numbers = #tpu.dot_dimension_numbers<[1], [1], [0], [0], [0, 0, 1, 0], [], []>} : vector<8x4xf32>, vector<8x4xf32>, vector<8x8xf32> -> vector<8x8xf32>
    %c6_206 = arith.constant 6 : index
    %c0_207 = arith.constant 0 : index
    %c0_208 = arith.constant 0 : index
    %254 = vector.load %arg12[%c6_206, %c0_207, %c0_208] : memref<8x8x1xf32, #tpu.memory_space<vmem>>, vector<1x8x1xf32>
    %255 = vector.shape_cast %254 : vector<1x8x1xf32> to vector<8x1xf32>
    %cst_209 = arith.constant dense<0xFF800000> : vector<8xf32>
    %256 = vector.multi_reduction <maximumf>, %253, %cst_209 [1] : vector<8x8xf32> to vector<8xf32>
    %257 = vector.shape_cast %256 : vector<8xf32> to vector<8x1xf32>
    %258 = arith.maximumf %255, %257 : vector<8x1xf32>
    %259 = arith.subf %255, %258 : vector<8x1xf32>
    %260 = math.exp %259 : vector<8x1xf32>
    %261 = vector.broadcast %258 : vector<8x1xf32> to vector<8x8xf32>
    %262 = arith.subf %253, %261 : vector<8x8xf32>
    %263 = math.exp %262 : vector<8x8xf32>
    %c6_210 = arith.constant 6 : index
    %c0_211 = arith.constant 0 : index
    %c0_212 = arith.constant 0 : index
    %264 = vector.load %arg13[%c6_210, %c0_211, %c0_212] : memref<8x8x1xf32, #tpu.memory_space<vmem>>, vector<1x8x1xf32>
    %265 = vector.shape_cast %264 : vector<1x8x1xf32> to vector<8x1xf32>
    %266 = arith.mulf %260, %265 : vector<8x1xf32>
    %cst_213 = arith.constant dense<0.000000e+00> : vector<8xf32>
    %267 = vector.multi_reduction <add>, %263, %cst_213 [1] : vector<8x8xf32> to vector<8xf32>
    %268 = vector.shape_cast %267 : vector<8xf32> to vector<8x1xf32>
    %269 = arith.addf %266, %268 : vector<8x1xf32>
    %c6_214 = arith.constant 6 : index
    %c0_215 = arith.constant 0 : index
    %c0_216 = arith.constant 0 : index
    %270 = vector.load %arg13[%c6_214, %c0_215, %c0_216] : memref<8x8x1xf32, #tpu.memory_space<vmem>>, vector<1x8x1xf32>
    %271 = vector.shape_cast %270 : vector<1x8x1xf32> to vector<8x1xf32>
    %272 = vector.shape_cast %269 : vector<8x1xf32> to vector<1x8x1xf32>
    tpu.vector_store %arg13[%c6_214, %c0_215, %c0_216], %272 {strides = array<i32>} : memref<8x8x1xf32, #tpu.memory_space<vmem>>, vector<1x8x1xf32>,
    %c6_217 = arith.constant 6 : index
    %c0_218 = arith.constant 0 : index
    %c0_219 = arith.constant 0 : index
    %273 = vector.load %arg14[%c6_217, %c0_218, %c0_219] : memref<8x8x4xf32, #tpu.memory_space<vmem>>, vector<1x8x4xf32>
    %274 = vector.shape_cast %273 : vector<1x8x4xf32> to vector<8x4xf32>
    %275 = vector.broadcast %260 : vector<8x1xf32> to vector<8x4xf32>
    %276 = arith.mulf %275, %274 : vector<8x4xf32>
    %cst_220 = arith.constant dense<0.000000e+00> : vector<8x4xf32>
    %277 = tpu.matmul %263, %250, %cst_220 {dimension_numbers = #tpu.dot_dimension_numbers<[1], [0], [0], [1], [0, 0, 1, 1], [], []>} : vector<8x8xf32>, vector<8x4xf32>, vector<8x4xf32> -> vector<8x4xf32>
    %278 = arith.addf %276, %277 : vector<8x4xf32>
    %c6_221 = arith.constant 6 : index
    %c0_222 = arith.constant 0 : index
    %c0_223 = arith.constant 0 : index
    %279 = vector.load %arg14[%c6_221, %c0_222, %c0_223] : memref<8x8x4xf32, #tpu.memory_space<vmem>>, vector<1x8x4xf32>
    %280 = vector.shape_cast %279 : vector<1x8x4xf32> to vector<8x4xf32>
    %281 = vector.shape_cast %278 : vector<8x4xf32> to vector<1x8x4xf32>
    tpu.vector_store %arg14[%c6_221, %c0_222, %c0_223], %281 {strides = array<i32>} : memref<8x8x4xf32, #tpu.memory_space<vmem>>, vector<1x8x4xf32>,
    %c6_224 = arith.constant 6 : index
    %c0_225 = arith.constant 0 : index
    %c0_226 = arith.constant 0 : index
    %282 = vector.load %arg12[%c6_224, %c0_225, %c0_226] : memref<8x8x1xf32, #tpu.memory_space<vmem>>, vector<1x8x1xf32>
    %283 = vector.shape_cast %282 : vector<1x8x1xf32> to vector<8x1xf32>
    %284 = vector.shape_cast %258 : vector<8x1xf32> to vector<1x8x1xf32>
    tpu.vector_store %arg12[%c6_224, %c0_225, %c0_226], %284 {strides = array<i32>} : memref<8x8x1xf32, #tpu.memory_space<vmem>>, vector<1x8x1xf32>,
    %c7 = arith.constant 7 : index
    %c0_227 = arith.constant 0 : index
    %c0_228 = arith.constant 0 : index
    %285 = vector.load %arg6[%c7, %c0_227, %c0_228] : memref<8x32x4xf32, #tpu.memory_space<vmem>>, vector<1x32x4xf32>
    %286 = vector.shape_cast %285 : vector<1x32x4xf32> to vector<32x4xf32>
    %cst_229 = arith.constant dense<0.000000e+00> : vector<8x4xf32>
    %287 = tpu.matmul %4, %286, %cst_229 {dimension_numbers = #tpu.dot_dimension_numbers<[1], [0], [0], [1], [0, 0, 1, 1], [], []>} : vector<8x32xf32>, vector<32x4xf32>, vector<8x4xf32> -> vector<8x4xf32>
    %c7_230 = arith.constant 7 : index
    %c0_231 = arith.constant 0 : index
    %c0_232 = arith.constant 0 : index
    %288 = vector.load %arg7[%c7_230, %c0_231, %c0_232] : memref<8x32x4xf32, #tpu.memory_space<vmem>>, vector<1x32x4xf32>
    %289 = vector.shape_cast %288 : vector<1x32x4xf32> to vector<32x4xf32>
    %cst_233 = arith.constant dense<0.000000e+00> : vector<8x4xf32>
    %290 = tpu.matmul %4, %289, %cst_233 {dimension_numbers = #tpu.dot_dimension_numbers<[1], [0], [0], [1], [0, 0, 1, 1], [], []>} : vector<8x32xf32>, vector<32x4xf32>, vector<8x4xf32> -> vector<8x4xf32>
    %c7_234 = arith.constant 7 : index
    %c0_235 = arith.constant 0 : index
    %c0_236 = arith.constant 0 : index
    %291 = vector.load %arg11[%c7_234, %c0_235, %c0_236] : memref<8x8x4xf32, #tpu.memory_space<vmem>>, vector<1x8x4xf32>
    %292 = vector.shape_cast %291 : vector<1x8x4xf32> to vector<8x4xf32>
    %cst_237 = arith.constant dense<0.000000e+00> : vector<8x8xf32>
    %293 = tpu.matmul %292, %287, %cst_237 {dimension_numbers = #tpu.dot_dimension_numbers<[1], [1], [0], [0], [0, 0, 1, 0], [], []>} : vector<8x4xf32>, vector<8x4xf32>, vector<8x8xf32> -> vector<8x8xf32>
    %c7_238 = arith.constant 7 : index
    %c0_239 = arith.constant 0 : index
    %c0_240 = arith.constant 0 : index
    %294 = vector.load %arg12[%c7_238, %c0_239, %c0_240] : memref<8x8x1xf32, #tpu.memory_space<vmem>>, vector<1x8x1xf32>
    %295 = vector.shape_cast %294 : vector<1x8x1xf32> to vector<8x1xf32>
    %cst_241 = arith.constant dense<0xFF800000> : vector<8xf32>
    %296 = vector.multi_reduction <maximumf>, %293, %cst_241 [1] : vector<8x8xf32> to vector<8xf32>
    %297 = vector.shape_cast %296 : vector<8xf32> to vector<8x1xf32>
    %298 = arith.maximumf %295, %297 : vector<8x1xf32>
    %299 = arith.subf %295, %298 : vector<8x1xf32>
    %300 = math.exp %299 : vector<8x1xf32>
    %301 = vector.broadcast %298 : vector<8x1xf32> to vector<8x8xf32>
    %302 = arith.subf %293, %301 : vector<8x8xf32>
    %303 = math.exp %302 : vector<8x8xf32>
    %c7_242 = arith.constant 7 : index
    %c0_243 = arith.constant 0 : index
    %c0_244 = arith.constant 0 : index
    %304 = vector.load %arg13[%c7_242, %c0_243, %c0_244] : memref<8x8x1xf32, #tpu.memory_space<vmem>>, vector<1x8x1xf32>
    %305 = vector.shape_cast %304 : vector<1x8x1xf32> to vector<8x1xf32>
    %306 = arith.mulf %300, %305 : vector<8x1xf32>
    %cst_245 = arith.constant dense<0.000000e+00> : vector<8xf32>
    %307 = vector.multi_reduction <add>, %303, %cst_245 [1] : vector<8x8xf32> to vector<8xf32>
    %308 = vector.shape_cast %307 : vector<8xf32> to vector<8x1xf32>
    %309 = arith.addf %306, %308 : vector<8x1xf32>
    %c7_246 = arith.constant 7 : index
    %c0_247 = arith.constant 0 : index
    %c0_248 = arith.constant 0 : index
    %310 = vector.load %arg13[%c7_246, %c0_247, %c0_248] : memref<8x8x1xf32, #tpu.memory_space<vmem>>, vector<1x8x1xf32>
    %311 = vector.shape_cast %310 : vector<1x8x1xf32> to vector<8x1xf32>
    %312 = vector.shape_cast %309 : vector<8x1xf32> to vector<1x8x1xf32>
    tpu.vector_store %arg13[%c7_246, %c0_247, %c0_248], %312 {strides = array<i32>} : memref<8x8x1xf32, #tpu.memory_space<vmem>>, vector<1x8x1xf32>,
    %c7_249 = arith.constant 7 : index
    %c0_250 = arith.constant 0 : index
    %c0_251 = arith.constant 0 : index
    %313 = vector.load %arg14[%c7_249, %c0_250, %c0_251] : memref<8x8x4xf32, #tpu.memory_space<vmem>>, vector<1x8x4xf32>
    %314 = vector.shape_cast %313 : vector<1x8x4xf32> to vector<8x4xf32>
    %315 = vector.broadcast %300 : vector<8x1xf32> to vector<8x4xf32>
    %316 = arith.mulf %315, %314 : vector<8x4xf32>
    %cst_252 = arith.constant dense<0.000000e+00> : vector<8x4xf32>
    %317 = tpu.matmul %303, %290, %cst_252 {dimension_numbers = #tpu.dot_dimension_numbers<[1], [0], [0], [1], [0, 0, 1, 1], [], []>} : vector<8x8xf32>, vector<8x4xf32>, vector<8x4xf32> -> vector<8x4xf32>
    %318 = arith.addf %316, %317 : vector<8x4xf32>
    %c7_253 = arith.constant 7 : index
    %c0_254 = arith.constant 0 : index
    %c0_255 = arith.constant 0 : index
    %319 = vector.load %arg14[%c7_253, %c0_254, %c0_255] : memref<8x8x4xf32, #tpu.memory_space<vmem>>, vector<1x8x4xf32>
    %320 = vector.shape_cast %319 : vector<1x8x4xf32> to vector<8x4xf32>
    %321 = vector.shape_cast %318 : vector<8x4xf32> to vector<1x8x4xf32>
    tpu.vector_store %arg14[%c7_253, %c0_254, %c0_255], %321 {strides = array<i32>} : memref<8x8x4xf32, #tpu.memory_space<vmem>>, vector<1x8x4xf32>,
    %c7_256 = arith.constant 7 : index
    %c0_257 = arith.constant 0 : index
    %c0_258 = arith.constant 0 : index
    %322 = vector.load %arg12[%c7_256, %c0_257, %c0_258] : memref<8x8x1xf32, #tpu.memory_space<vmem>>, vector<1x8x1xf32>
    %323 = vector.shape_cast %322 : vector<1x8x1xf32> to vector<8x1xf32>
    %324 = vector.shape_cast %298 : vector<8x1xf32> to vector<1x8x1xf32>
    tpu.vector_store %arg12[%c7_256, %c0_257, %c0_258], %324 {strides = array<i32>} : memref<8x8x1xf32, #tpu.memory_space<vmem>>, vector<1x8x1xf32>,
    %c0_i32_259 = arith.constant 0 : i32
    %325 = arith.cmpi eq, %arg2, %c0_i32_259 : i32
    %326 = arith.extui %325 : i1 to i32
    %c0_i32_260 = arith.constant 0 : i32
    %327 = arith.cmpi ne, %326, %c0_i32_260 : i32
    scf.if %327 {
      %c0_261 = arith.constant 0 : index
      %c0_262 = arith.constant 0 : index
      %c0_263 = arith.constant 0 : index
      %328 = vector.load %arg13[%c0_261, %c0_262, %c0_263] : memref<8x8x1xf32, #tpu.memory_space<vmem>>, vector<1x8x1xf32>
      %329 = vector.shape_cast %328 : vector<1x8x1xf32> to vector<8x1xf32>
      %330 = tpu.reciprocal %329 {approx = true} : vector<8x1xf32> -> vector<8x1xf32>
      %c0_264 = arith.constant 0 : index
      %c0_265 = arith.constant 0 : index
      %c0_266 = arith.constant 0 : index
      %331 = vector.load %arg14[%c0_264, %c0_265, %c0_266] : memref<8x8x4xf32, #tpu.memory_space<vmem>>, vector<1x8x4xf32>
      %332 = vector.shape_cast %331 : vector<1x8x4xf32> to vector<8x4xf32>
      %333 = vector.broadcast %330 : vector<8x1xf32> to vector<8x4xf32>
      %334 = arith.mulf %332, %333 : vector<8x4xf32>
      %c0_267 = arith.constant 0 : index
      %c0_268 = arith.constant 0 : index
      %c0_269 = arith.constant 0 : index
      %335 = vector.load %arg8[%c0_267, %c0_268, %c0_269] : memref<8x4x32xf32, #tpu.memory_space<vmem>>, vector<1x4x32xf32>
      %336 = vector.shape_cast %335 : vector<1x4x32xf32> to vector<4x32xf32>
      %cst_270 = arith.constant dense<0.000000e+00> : vector<8x32xf32>
      %337 = tpu.matmul %334, %336, %cst_270 {dimension_numbers = #tpu.dot_dimension_numbers<[1], [0], [0], [1], [0, 0, 1, 1], [], []>} : vector<8x4xf32>, vector<4x32xf32>, vector<8x32xf32> -> vector<8x32xf32>
      %c1_271 = arith.constant 1 : index
      %c0_272 = arith.constant 0 : index
      %c0_273 = arith.constant 0 : index
      %338 = vector.load %arg13[%c1_271, %c0_272, %c0_273] : memref<8x8x1xf32, #tpu.memory_space<vmem>>, vector<1x8x1xf32>
      %339 = vector.shape_cast %338 : vector<1x8x1xf32> to vector<8x1xf32>
      %340 = tpu.reciprocal %339 {approx = true} : vector<8x1xf32> -> vector<8x1xf32>
      %c1_274 = arith.constant 1 : index
      %c0_275 = arith.constant 0 : index
      %c0_276 = arith.constant 0 : index
      %341 = vector.load %arg14[%c1_274, %c0_275, %c0_276] : memref<8x8x4xf32, #tpu.memory_space<vmem>>, vector<1x8x4xf32>
      %342 = vector.shape_cast %341 : vector<1x8x4xf32> to vector<8x4xf32>
      %343 = vector.broadcast %340 : vector<8x1xf32> to vector<8x4xf32>
      %344 = arith.mulf %342, %343 : vector<8x4xf32>
      %c1_277 = arith.constant 1 : index
      %c0_278 = arith.constant 0 : index
      %c0_279 = arith.constant 0 : index
      %345 = vector.load %arg8[%c1_277, %c0_278, %c0_279] : memref<8x4x32xf32, #tpu.memory_space<vmem>>, vector<1x4x32xf32>
      %346 = vector.shape_cast %345 : vector<1x4x32xf32> to vector<4x32xf32>
      %cst_280 = arith.constant dense<0.000000e+00> : vector<8x32xf32>
      %347 = tpu.matmul %344, %346, %cst_280 {dimension_numbers = #tpu.dot_dimension_numbers<[1], [0], [0], [1], [0, 0, 1, 1], [], []>} : vector<8x4xf32>, vector<4x32xf32>, vector<8x32xf32> -> vector<8x32xf32>
      %348 = arith.addf %337, %347 : vector<8x32xf32>
      %c2_281 = arith.constant 2 : index
      %c0_282 = arith.constant 0 : index
      %c0_283 = arith.constant 0 : index
      %349 = vector.load %arg13[%c2_281, %c0_282, %c0_283] : memref<8x8x1xf32, #tpu.memory_space<vmem>>, vector<1x8x1xf32>
      %350 = vector.shape_cast %349 : vector<1x8x1xf32> to vector<8x1xf32>
      %351 = tpu.reciprocal %350 {approx = true} : vector<8x1xf32> -> vector<8x1xf32>
      %c2_284 = arith.constant 2 : index
      %c0_285 = arith.constant 0 : index
      %c0_286 = arith.constant 0 : index
      %352 = vector.load %arg14[%c2_284, %c0_285, %c0_286] : memref<8x8x4xf32, #tpu.memory_space<vmem>>, vector<1x8x4xf32>
      %353 = vector.shape_cast %352 : vector<1x8x4xf32> to vector<8x4xf32>
      %354 = vector.broadcast %351 : vector<8x1xf32> to vector<8x4xf32>
      %355 = arith.mulf %353, %354 : vector<8x4xf32>
      %c2_287 = arith.constant 2 : index
      %c0_288 = arith.constant 0 : index
      %c0_289 = arith.constant 0 : index
      %356 = vector.load %arg8[%c2_287, %c0_288, %c0_289] : memref<8x4x32xf32, #tpu.memory_space<vmem>>, vector<1x4x32xf32>
      %357 = vector.shape_cast %356 : vector<1x4x32xf32> to vector<4x32xf32>
      %cst_290 = arith.constant dense<0.000000e+00> : vector<8x32xf32>
      %358 = tpu.matmul %355, %357, %cst_290 {dimension_numbers = #tpu.dot_dimension_numbers<[1], [0], [0], [1], [0, 0, 1, 1], [], []>} : vector<8x4xf32>, vector<4x32xf32>, vector<8x32xf32> -> vector<8x32xf32>
      %359 = arith.addf %348, %358 : vector<8x32xf32>
      %c3_291 = arith.constant 3 : index
      %c0_292 = arith.constant 0 : index
      %c0_293 = arith.constant 0 : index
      %360 = vector.load %arg13[%c3_291, %c0_292, %c0_293] : memref<8x8x1xf32, #tpu.memory_space<vmem>>, vector<1x8x1xf32>
      %361 = vector.shape_cast %360 : vector<1x8x1xf32> to vector<8x1xf32>
      %362 = tpu.reciprocal %361 {approx = true} : vector<8x1xf32> -> vector<8x1xf32>
      %c3_294 = arith.constant 3 : index
      %c0_295 = arith.constant 0 : index
      %c0_296 = arith.constant 0 : index
      %363 = vector.load %arg14[%c3_294, %c0_295, %c0_296] : memref<8x8x4xf32, #tpu.memory_space<vmem>>, vector<1x8x4xf32>
      %364 = vector.shape_cast %363 : vector<1x8x4xf32> to vector<8x4xf32>
      %365 = vector.broadcast %362 : vector<8x1xf32> to vector<8x4xf32>
      %366 = arith.mulf %364, %365 : vector<8x4xf32>
      %c3_297 = arith.constant 3 : index
      %c0_298 = arith.constant 0 : index
      %c0_299 = arith.constant 0 : index
      %367 = vector.load %arg8[%c3_297, %c0_298, %c0_299] : memref<8x4x32xf32, #tpu.memory_space<vmem>>, vector<1x4x32xf32>
      %368 = vector.shape_cast %367 : vector<1x4x32xf32> to vector<4x32xf32>
      %cst_300 = arith.constant dense<0.000000e+00> : vector<8x32xf32>
      %369 = tpu.matmul %366, %368, %cst_300 {dimension_numbers = #tpu.dot_dimension_numbers<[1], [0], [0], [1], [0, 0, 1, 1], [], []>} : vector<8x4xf32>, vector<4x32xf32>, vector<8x32xf32> -> vector<8x32xf32>
      %370 = arith.addf %359, %369 : vector<8x32xf32>
      %c4_301 = arith.constant 4 : index
      %c0_302 = arith.constant 0 : index
      %c0_303 = arith.constant 0 : index
      %371 = vector.load %arg13[%c4_301, %c0_302, %c0_303] : memref<8x8x1xf32, #tpu.memory_space<vmem>>, vector<1x8x1xf32>
      %372 = vector.shape_cast %371 : vector<1x8x1xf32> to vector<8x1xf32>
      %373 = tpu.reciprocal %372 {approx = true} : vector<8x1xf32> -> vector<8x1xf32>
      %c4_304 = arith.constant 4 : index
      %c0_305 = arith.constant 0 : index
      %c0_306 = arith.constant 0 : index
      %374 = vector.load %arg14[%c4_304, %c0_305, %c0_306] : memref<8x8x4xf32, #tpu.memory_space<vmem>>, vector<1x8x4xf32>
      %375 = vector.shape_cast %374 : vector<1x8x4xf32> to vector<8x4xf32>
      %376 = vector.broadcast %373 : vector<8x1xf32> to vector<8x4xf32>
      %377 = arith.mulf %375, %376 : vector<8x4xf32>
      %c4_307 = arith.constant 4 : index
      %c0_308 = arith.constant 0 : index
      %c0_309 = arith.constant 0 : index
      %378 = vector.load %arg8[%c4_307, %c0_308, %c0_309] : memref<8x4x32xf32, #tpu.memory_space<vmem>>, vector<1x4x32xf32>
      %379 = vector.shape_cast %378 : vector<1x4x32xf32> to vector<4x32xf32>
      %cst_310 = arith.constant dense<0.000000e+00> : vector<8x32xf32>
      %380 = tpu.matmul %377, %379, %cst_310 {dimension_numbers = #tpu.dot_dimension_numbers<[1], [0], [0], [1], [0, 0, 1, 1], [], []>} : vector<8x4xf32>, vector<4x32xf32>, vector<8x32xf32> -> vector<8x32xf32>
      %381 = arith.addf %370, %380 : vector<8x32xf32>
      %c5_311 = arith.constant 5 : index
      %c0_312 = arith.constant 0 : index
      %c0_313 = arith.constant 0 : index
      %382 = vector.load %arg13[%c5_311, %c0_312, %c0_313] : memref<8x8x1xf32, #tpu.memory_space<vmem>>, vector<1x8x1xf32>
      %383 = vector.shape_cast %382 : vector<1x8x1xf32> to vector<8x1xf32>
      %384 = tpu.reciprocal %383 {approx = true} : vector<8x1xf32> -> vector<8x1xf32>
      %c5_314 = arith.constant 5 : index
      %c0_315 = arith.constant 0 : index
      %c0_316 = arith.constant 0 : index
      %385 = vector.load %arg14[%c5_314, %c0_315, %c0_316] : memref<8x8x4xf32, #tpu.memory_space<vmem>>, vector<1x8x4xf32>
      %386 = vector.shape_cast %385 : vector<1x8x4xf32> to vector<8x4xf32>
      %387 = vector.broadcast %384 : vector<8x1xf32> to vector<8x4xf32>
      %388 = arith.mulf %386, %387 : vector<8x4xf32>
      %c5_317 = arith.constant 5 : index
      %c0_318 = arith.constant 0 : index
      %c0_319 = arith.constant 0 : index
      %389 = vector.load %arg8[%c5_317, %c0_318, %c0_319] : memref<8x4x32xf32, #tpu.memory_space<vmem>>, vector<1x4x32xf32>
      %390 = vector.shape_cast %389 : vector<1x4x32xf32> to vector<4x32xf32>
      %cst_320 = arith.constant dense<0.000000e+00> : vector<8x32xf32>
      %391 = tpu.matmul %388, %390, %cst_320 {dimension_numbers = #tpu.dot_dimension_numbers<[1], [0], [0], [1], [0, 0, 1, 1], [], []>} : vector<8x4xf32>, vector<4x32xf32>, vector<8x32xf32> -> vector<8x32xf32>
      %392 = arith.addf %381, %391 : vector<8x32xf32>
      %c6_321 = arith.constant 6 : index
      %c0_322 = arith.constant 0 : index
      %c0_323 = arith.constant 0 : index
      %393 = vector.load %arg13[%c6_321, %c0_322, %c0_323] : memref<8x8x1xf32, #tpu.memory_space<vmem>>, vector<1x8x1xf32>
      %394 = vector.shape_cast %393 : vector<1x8x1xf32> to vector<8x1xf32>
      %395 = tpu.reciprocal %394 {approx = true} : vector<8x1xf32> -> vector<8x1xf32>
      %c6_324 = arith.constant 6 : index
      %c0_325 = arith.constant 0 : index
      %c0_326 = arith.constant 0 : index
      %396 = vector.load %arg14[%c6_324, %c0_325, %c0_326] : memref<8x8x4xf32, #tpu.memory_space<vmem>>, vector<1x8x4xf32>
      %397 = vector.shape_cast %396 : vector<1x8x4xf32> to vector<8x4xf32>
      %398 = vector.broadcast %395 : vector<8x1xf32> to vector<8x4xf32>
      %399 = arith.mulf %397, %398 : vector<8x4xf32>
      %c6_327 = arith.constant 6 : index
      %c0_328 = arith.constant 0 : index
      %c0_329 = arith.constant 0 : index
      %400 = vector.load %arg8[%c6_327, %c0_328, %c0_329] : memref<8x4x32xf32, #tpu.memory_space<vmem>>, vector<1x4x32xf32>
      %401 = vector.shape_cast %400 : vector<1x4x32xf32> to vector<4x32xf32>
      %cst_330 = arith.constant dense<0.000000e+00> : vector<8x32xf32>
      %402 = tpu.matmul %399, %401, %cst_330 {dimension_numbers = #tpu.dot_dimension_numbers<[1], [0], [0], [1], [0, 0, 1, 1], [], []>} : vector<8x4xf32>, vector<4x32xf32>, vector<8x32xf32> -> vector<8x32xf32>
      %403 = arith.addf %392, %402 : vector<8x32xf32>
      %c7_331 = arith.constant 7 : index
      %c0_332 = arith.constant 0 : index
      %c0_333 = arith.constant 0 : index
      %404 = vector.load %arg13[%c7_331, %c0_332, %c0_333] : memref<8x8x1xf32, #tpu.memory_space<vmem>>, vector<1x8x1xf32>
      %405 = vector.shape_cast %404 : vector<1x8x1xf32> to vector<8x1xf32>
      %406 = tpu.reciprocal %405 {approx = true} : vector<8x1xf32> -> vector<8x1xf32>
      %c7_334 = arith.constant 7 : index
      %c0_335 = arith.constant 0 : index
      %c0_336 = arith.constant 0 : index
      %407 = vector.load %arg14[%c7_334, %c0_335, %c0_336] : memref<8x8x4xf32, #tpu.memory_space<vmem>>, vector<1x8x4xf32>
      %408 = vector.shape_cast %407 : vector<1x8x4xf32> to vector<8x4xf32>
      %409 = vector.broadcast %406 : vector<8x1xf32> to vector<8x4xf32>
      %410 = arith.mulf %408, %409 : vector<8x4xf32>
      %c7_337 = arith.constant 7 : index
      %c0_338 = arith.constant 0 : index
      %c0_339 = arith.constant 0 : index
      %411 = vector.load %arg8[%c7_337, %c0_338, %c0_339] : memref<8x4x32xf32, #tpu.memory_space<vmem>>, vector<1x4x32xf32>
      %412 = vector.shape_cast %411 : vector<1x4x32xf32> to vector<4x32xf32>
      %cst_340 = arith.constant dense<0.000000e+00> : vector<8x32xf32>
      %413 = tpu.matmul %410, %412, %cst_340 {dimension_numbers = #tpu.dot_dimension_numbers<[1], [0], [0], [1], [0, 0, 1, 1], [], []>} : vector<8x4xf32>, vector<4x32xf32>, vector<8x32xf32> -> vector<8x32xf32>
      %414 = arith.addf %403, %413 : vector<8x32xf32>
      %c0_341 = arith.constant 0 : index
      %c0_342 = arith.constant 0 : index
      %415 = vector.load %arg9[%c0_341, %c0_342] : memref<1x32xf32, #tpu.memory_space<vmem>>, vector<1x32xf32>
      %416 = vector.broadcast %415 : vector<1x32xf32> to vector<8x32xf32>
      %417 = arith.addf %414, %416 : vector<8x32xf32>
      %c0_343 = arith.constant 0 : index
      %c0_344 = arith.constant 0 : index
      %c0_345 = arith.constant 0 : index
      %418 = vector.load %arg10[%c0_343, %c0_344, %c0_345] : memref<1x8x32xf32, #tpu.memory_space<vmem>>, vector<1x8x32xf32>
      %419 = vector.shape_cast %418 : vector<1x8x32xf32> to vector<8x32xf32>
      %420 = vector.shape_cast %417 : vector<8x32xf32> to vector<1x8x32xf32>
      tpu.vector_store %arg10[%c0_343, %c0_344, %c0_345], %420 {strides = array<i32>} : memref<1x8x32xf32, #tpu.memory_space<vmem>>, vector<1x8x32xf32>,
    } else {
    }
    return
  }
  func.func @transform_0(%arg0: i32, %arg1: i32, %arg2: i32) -> (i32, i32, i32) {
    %c0_i32 = arith.constant 0 : i32
    %c0_i32_0 = arith.constant 0 : i32
    return %arg0, %arg1, %c0_i32 : i32, i32, i32
  }
  func.func @transform_1(%arg0: i32, %arg1: i32, %arg2: i32) -> (i32, i32, i32) {
    %c0_i32 = arith.constant 0 : i32
    %c0_i32_0 = arith.constant 0 : i32
    return %arg0, %arg2, %c0_i32 : i32, i32, i32
  }
  func.func @transform_2(%arg0: i32, %arg1: i32, %arg2: i32) -> (i32, i32, i32) {
    %c0_i32 = arith.constant 0 : i32
    %c0_i32_0 = arith.constant 0 : i32
    %c0_i32_1 = arith.constant 0 : i32
    %c0_i32_2 = arith.constant 0 : i32
    return %c0_i32, %c0_i32_0, %c0_i32_1 : i32, i32, i32
  }
  func.func @transform_3(%arg0: i32, %arg1: i32, %arg2: i32) -> (i32, i32, i32) {
    %c0_i32 = arith.constant 0 : i32
    %c0_i32_0 = arith.constant 0 : i32
    %c0_i32_1 = arith.constant 0 : i32
    %c0_i32_2 = arith.constant 0 : i32
    return %c0_i32, %c0_i32_0, %c0_i32_1 : i32, i32, i32
  }
  func.func @transform_4(%arg0: i32, %arg1: i32, %arg2: i32) -> (i32, i32, i32) {
    %c0_i32 = arith.constant 0 : i32
    %c0_i32_0 = arith.constant 0 : i32
    %c0_i32_1 = arith.constant 0 : i32
    %c0_i32_2 = arith.constant 0 : i32
    return %c0_i32, %c0_i32_0, %c0_i32_1 : i32, i32, i32
  }
  func.func @transform_5(%arg0: i32, %arg1: i32, %arg2: i32) -> (i32, i32, i32) {
    %c0_i32 = arith.constant 0 : i32
    %c0_i32_0 = arith.constant 0 : i32
    %c0_i32_1 = arith.constant 0 : i32
    %c0_i32_2 = arith.constant 0 : i32
    return %c0_i32, %c0_i32_0, %c0_i32_1 : i32, i32, i32
  }
  func.func @transform_6(%arg0: i32, %arg1: i32, %arg2: i32) -> (i32, i32) {
    %c0_i32 = arith.constant 0 : i32
    %c0_i32_0 = arith.constant 0 : i32
    %c0_i32_1 = arith.constant 0 : i32
    return %c0_i32, %c0_i32_0 : i32, i32
  }
  func.func @transform_7(%arg0: i32, %arg1: i32, %arg2: i32) -> (i32, i32, i32) {
    %c0_i32 = arith.constant 0 : i32
    %c0_i32_0 = arith.constant 0 : i32
    return %arg0, %arg1, %c0_i32 : i32, i32, i32
  }
}

</mosaic_0001>

<llo_original>
// kernel: tpu_custom_call.1
$region0: #{tpu_custom_call.1}
  #allocation0 [shape = 'u32[]', space=smem, size = 0x4, offset = 0x4, fixed_abs, tag = 'smem constant byte address 0x4 - core index']
  #allocation1 [shape = 'u32[144,128]{1,0:T(1,128)}', space=vmem, size = 0x12000, scoped, tag = 'internal scratch']
  #allocation2 [shape = 'f32[8,8,4]{2,1,0:T(8,128)}', space=vmem, size = 0x8000, scoped, tag = 'scratch operand']
  #allocation3 [shape = 'f32[8,8,1]{2,1,0:T(8,128)}', space=vmem, size = 0x8000, scoped, tag = 'scratch operand']
  #allocation4 [shape = 'f32[8,8,1]{2,1,0:T(8,128)}', space=vmem, size = 0x8000, scoped, tag = 'scratch operand']
  #allocation5 [shape = 'f32[8,8,4]{2,1,0:T(8,128)}', space=vmem, size = 0x8000, scoped, tag = 'scratch operand']
  %s0 = inlined_call_operand.vmem [shape: f32[2,8,32], index: 0, kind: input, shape index: {}]
  %s1 = inlined_call_operand.vmem [shape: f32[2,8,32], index: 1, kind: input, shape index: {}]
  %s2 = inlined_call_operand.vmem [shape: f32[8,32,4], index: 2, kind: input, shape index: {}]
  %s3 = inlined_call_operand.vmem [shape: f32[8,32,4], index: 3, kind: input, shape index: {}]
  %s4 = inlined_call_operand.vmem [shape: f32[8,32,4], index: 4, kind: input, shape index: {}]
  %s5 = inlined_call_operand.vmem [shape: f32[8,4,32], index: 5, kind: input, shape index: {}]
  %s6 = inlined_call_operand.vmem [shape: f32[1,32], index: 6, kind: input, shape index: {}]
  %s7 = inlined_call_operand.hbm [shape: f32[2,8,32], index: 7, kind: output, shape index: {}]
  %s8 = sld [smem:[#allocation0]]
  $region69: #{tpu_custom_call.1} parent=0
    _
  %s10 = ssub.s32 1, %s8
  %s11 = scalar_select 0, %s10, %s8
  $region1: #{tpu_custom_call.1} parent=0
    #allocation6 [shape = 'u8[8192]{0}', space=vmem, size = 0x2000, scoped, tag = 'output window, operand 0']
    #allocation7 [shape = 's32[2]{0}', space=sflag, size = 0x8, scoped, tag = 'scoped memory for tpu_custom_call.1']
    %12 = vsyncpa [#allocation7], 0
    %s13 = scalar_lea.sflag [#allocation7], 1
    %14 = vsyncpa %s13, 0
    loop: start=0, step=1, limit=4
    $region2: #{tpu_custom_call.1} parent=1 // loop_pre_header
      _
    $region3: #{tpu_custom_call.1} parent=1 // loop_header
      %s16 = sphi 0, %s20
      %p17 = scmp.ge.s32.totalorder %s16, 4
      %s23 = sphi 0, %s42
      %s24 = sphi 0, %s38
      %s25 = sphi 0, %s34
      %s26 = sphi 0, %s23
      %s27 = sphi 0, %s24
      %s28 = sphi 0, %s25
      %s29 = sphi 0, %s26
      %s30 = sphi 0, %s27
      %s31 = sphi 0, %s28
      %s47 = sphi 0, %s49
      %s50 = sphi 0, %s47
      %s51 = sphi 0, %s50
      %s67 = sphi 0, %s51
      %s75 = sphi 0, %s77
      %s78 = sphi 0, %s75
      %s79 = sphi 0, %s78
      %s95 = sphi 0, %s79
      %s99 = sphi 0, %s99
      %s101 = sphi 0, %s99
      %s102 = sphi 0, %s101
      %s116 = sphi 0, %s102
      %s120 = sphi 0, %s120
      %s122 = sphi 0, %s120
      %s123 = sphi 0, %s122
      %s137 = sphi 0, %s123
      %s141 = sphi 0, %s141
      %s143 = sphi 0, %s141
      %s144 = sphi 0, %s143
      %s158 = sphi 0, %s144
      %s162 = sphi 0, %s162
      %s164 = sphi 0, %s162
      %s165 = sphi 0, %s164
      %s179 = sphi 0, %s165
      %s183 = sphi 0, %s183
      %s185 = sphi 0, %s183
      %s186 = sphi 0, %s185
      %s200 = sphi 0, %s186
      %s208 = sphi 0, %s210
      %s211 = sphi 0, %s208
      %s212 = sphi 0, %s211
      %s228 = sphi 0, %s212
    $region4: #{tpu_custom_call.1} parent=1 // loop_header_branch
      %19 = sbr.rel (%p17) target = $region8
    $region5: #{tpu_custom_call.1} parent=1 // loop_body
      %s21 = ssub.s32 %s16, 1
      %s22 = ssub.s32 %s16, 2
      %s32 = sadd.s32 1, %s25
      %p33 = scmp.ge.s32.totalorder %s32, 1
      %s34 = scalar_select %p33, 0, %s32
      %s35 = sadd.s32 1, %s24
      %s36 = scalar_select %p33, %s35, %s24
      %p37 = scmp.ge.s32.totalorder %s36, 1
      %s38 = scalar_select %p37, 0, %s36
      %s39 = sadd.s32 1, %s23
      %s40 = scalar_select %p37, %s39, %s23
      %p41 = scmp.ge.s32.totalorder %s40, 2
      %s42 = scalar_select %p41, 0, %s40
      %s43 = ssub.s32 %s23, %s42
      %s44 = ssub.s32 %s24, %s38
      %s45 = sor.u32 %s43, %s44
      %p46 = scmp.eq.s32.totalorder %s45, 0
      %s48 = sadd.s32 %s47, 1
      %s49 = scalar_select %p46, %s47, %s48
      %p52 = pneg %p46
      %p53 = scmp.eq.s32.totalorder %s16, 1
      %p54 = por %p52, %p53
      %p55 = scmp.ne.s32.totalorder %s47, %s50
      %p56 = scmp.eq.s32.totalorder %s16, 0
      %p57 = por %p55, %p56
      %p58 = scmp.ne.s32.totalorder %s47, %s50
      %p59 = scmp.eq.s32.totalorder %s21, 1
      %p60 = por %p58, %p59
      %p61 = scmp.ne.s32.totalorder %s50, %s51
      %p62 = scmp.eq.s32.totalorder %s21, 0
      %p63 = por %p61, %p62
      %p64 = scmp.ne.s32.totalorder %s50, %s51
      %p65 = scmp.eq.s32.totalorder %s22, 1
      %p66 = por %p64, %p65
      %p68 = scmp.ne.s32.totalorder %s51, %s67
      %p69 = scmp.eq.s32.totalorder %s22, 0
      %p70 = por %p68, %p69
      %s71 = ssub.s32 %s23, %s42
      %s72 = ssub.s32 %s25, %s34
      %s73 = sor.u32 %s71, %s72
      %p74 = scmp.eq.s32.totalorder %s73, 0
      %s76 = sadd.s32 %s75, 1
      %s77 = scalar_select %p74, %s75, %s76
      %p80 = pneg %p74
      %p81 = scmp.eq.s32.totalorder %s16, 1
      %p82 = por %p80, %p81
      %p83 = scmp.ne.s32.totalorder %s75, %s78
      %p84 = scmp.eq.s32.totalorder %s16, 0
      %p85 = por %p83, %p84
      %p86 = scmp.ne.s32.totalorder %s75, %s78
      %p87 = scmp.eq.s32.totalorder %s21, 1
      %p88 = por %p86, %p87
      %p89 = scmp.ne.s32.totalorder %s78, %s79
      %p90 = scmp.eq.s32.totalorder %s21, 0
      %p91 = por %p89, %p90
      %p92 = scmp.ne.s32.totalorder %s78, %s79
      %p93 = scmp.eq.s32.totalorder %s22, 1
      %p94 = por %p92, %p93
      %p96 = scmp.ne.s32.totalorder %s79, %s95
      %p97 = scmp.eq.s32.totalorder %s22, 0
      %p98 = por %p96, %p97
      %s100 = sadd.s32 %s99, 1
      %p103 = scmp.eq.s32.totalorder %s16, 1
      %p104 = scmp.ne.s32.totalorder %s99, %s101
      %p105 = scmp.eq.s32.totalorder %s16, 0
      %p106 = por %p104, %p105
      %p107 = scmp.ne.s32.totalorder %s99, %s101
      %p108 = scmp.eq.s32.totalorder %s21, 1
      %p109 = por %p107, %p108
      %p110 = scmp.ne.s32.totalorder %s101, %s102
      %p111 = scmp.eq.s32.totalorder %s21, 0
      %p112 = por %p110, %p111
      %p113 = scmp.ne.s32.totalorder %s101, %s102
      %p114 = scmp.eq.s32.totalorder %s22, 1
      %p115 = por %p113, %p114
      %p117 = scmp.ne.s32.totalorder %s102, %s116
      %p118 = scmp.eq.s32.totalorder %s22, 0
      %p119 = por %p117, %p118
      %s121 = sadd.s32 %s120, 1
      %p124 = scmp.eq.s32.totalorder %s16, 1
      %p125 = scmp.ne.s32.totalorder %s120, %s122
      %p126 = scmp.eq.s32.totalorder %s16, 0
      %p127 = por %p125, %p126
      %p128 = scmp.ne.s32.totalorder %s120, %s122
      %p129 = scmp.eq.s32.totalorder %s21, 1
      %p130 = por %p128, %p129
      %p131 = scmp.ne.s32.totalorder %s122, %s123
      %p132 = scmp.eq.s32.totalorder %s21, 0
      %p133 = por %p131, %p132
      %p134 = scmp.ne.s32.totalorder %s122, %s123
      %p135 = scmp.eq.s32.totalorder %s22, 1
      %p136 = por %p134, %p135
      %p138 = scmp.ne.s32.totalorder %s123, %s137
      %p139 = scmp.eq.s32.totalorder %s22, 0
      %p140 = por %p138, %p139
      %s142 = sadd.s32 %s141, 1
      %p145 = scmp.eq.s32.totalorder %s16, 1
      %p146 = scmp.ne.s32.totalorder %s141, %s143
      %p147 = scmp.eq.s32.totalorder %s16, 0
      %p148 = por %p146, %p147
      %p149 = scmp.ne.s32.totalorder %s141, %s143
      %p150 = scmp.eq.s32.totalorder %s21, 1
      %p151 = por %p149, %p150
      %p152 = scmp.ne.s32.totalorder %s143, %s144
      %p153 = scmp.eq.s32.totalorder %s21, 0
      %p154 = por %p152, %p153
      %p155 = scmp.ne.s32.totalorder %s143, %s144
      %p156 = scmp.eq.s32.totalorder %s22, 1
      %p157 = por %p155, %p156
      %p159 = scmp.ne.s32.totalorder %s144, %s158
      %p160 = scmp.eq.s32.totalorder %s22, 0
      %p161 = por %p159, %p160
      %s163 = sadd.s32 %s162, 1
      %p166 = scmp.eq.s32.totalorder %s16, 1
      %p167 = scmp.ne.s32.totalorder %s162, %s164
      %p168 = scmp.eq.s32.totalorder %s16, 0
      %p169 = por %p167, %p168
      %p170 = scmp.ne.s32.totalorder %s162, %s164
      %p171 = scmp.eq.s32.totalorder %s21, 1
      %p172 = por %p170, %p171
      %p173 = scmp.ne.s32.totalorder %s164, %s165
      %p174 = scmp.eq.s32.totalorder %s21, 0
      %p175 = por %p173, %p174
      %p176 = scmp.ne.s32.totalorder %s164, %s165
      %p177 = scmp.eq.s32.totalorder %s22, 1
      %p178 = por %p176, %p177
      %p180 = scmp.ne.s32.totalorder %s165, %s179
      %p181 = scmp.eq.s32.totalorder %s22, 0
      %p182 = por %p180, %p181
      %s184 = sadd.s32 %s183, 1
      %p187 = scmp.eq.s32.totalorder %s16, 1
      %p188 = scmp.ne.s32.totalorder %s183, %s185
      %p189 = scmp.eq.s32.totalorder %s16, 0
      %p190 = por %p188, %p189
      %p191 = scmp.ne.s32.totalorder %s183, %s185
      %p192 = scmp.eq.s32.totalorder %s21, 1
      %p193 = por %p191, %p192
      %p194 = scmp.ne.s32.totalorder %s185, %s186
      %p195 = scmp.eq.s32.totalorder %s21, 0
      %p196 = por %p194, %p195
      %p197 = scmp.ne.s32.totalorder %s185, %s186
      %p198 = scmp.eq.s32.totalorder %s22, 1
      %p199 = por %p197, %p198
      %p201 = scmp.ne.s32.totalorder %s186, %s200
      %p202 = scmp.eq.s32.totalorder %s22, 0
      %p203 = por %p201, %p202
      %s204 = ssub.s32 %s23, %s42
      %s205 = ssub.s32 %s24, %s38
      %s206 = sor.u32 %s204, %s205
      %p207 = scmp.eq.s32.totalorder %s206, 0
      %s209 = sadd.s32 %s208, 1
      %s210 = scalar_select %p207, %s208, %s209
      %p213 = pneg %p207
      %p214 = scmp.eq.s32.totalorder %s16, 1
      %p215 = por %p213, %p214
      %p216 = scmp.ne.s32.totalorder %s208, %s211
      %p217 = scmp.eq.s32.totalorder %s16, 0
      %p218 = por %p216, %p217
      %p219 = scmp.ne.s32.totalorder %s208, %s211
      %p220 = scmp.eq.s32.totalorder %s21, 1
      %p221 = por %p219, %p220
      %p222 = scmp.ne.s32.totalorder %s211, %s212
      %p223 = scmp.eq.s32.totalorder %s21, 0
      %p224 = por %p222, %p223
      %p225 = scmp.ne.s32.totalorder %s211, %s212
      %p226 = scmp.eq.s32.totalorder %s22, 1
      %p227 = por %p225, %p226
      %p229 = scmp.ne.s32.totalorder %s212, %s228
      %p230 = scmp.eq.s32.totalorder %s22, 0
      %p231 = por %p229, %p230
      %p232 = scmp.le.s32.totalorder 1, %s16
      %p233 = scmp.lt.s32.totalorder %s16, 3
      %p234 = pnand %p232, %p233
      %p235 = pneg %p234
      // Predicated region
      $region9: #{tpu_custom_call.1} parent=5 // pred_check
        _
      $region10: #{tpu_custom_call.1} parent=5 // pred_check_branch
        %237 = sbr.rel (%p234) target = $region12
      $region11: #{tpu_custom_call.1} parent=5 // pred_region
        %s238 = ssub.s32 %s16, 1
        // Predicated region
        $region13: #{tpu_custom_call.1} parent=11 // pred_check
          %p239 = pneg %p112
        $region14: #{tpu_custom_call.1} parent=11 // pred_check_branch
          %241 = sbr.rel (%p239) target = $region16
        $region15: #{tpu_custom_call.1} parent=11 // pred_region
          _
        $region16: #{tpu_custom_call.1} parent=11 // pred_fallthru
          _
        // Predicated region
        $region17: #{tpu_custom_call.1} parent=11 // pred_check
          %p242 = pneg %p133
        $region18: #{tpu_custom_call.1} parent=11 // pred_check_branch
          %244 = sbr.rel (%p242) target = $region20
        $region19: #{tpu_custom_call.1} parent=11 // pred_region
          _
        $region20: #{tpu_custom_call.1} parent=11 // pred_fallthru
          _
        // Predicated region
        $region21: #{tpu_custom_call.1} parent=11 // pred_check
          %p245 = pneg %p154
        $region22: #{tpu_custom_call.1} parent=11 // pred_check_branch
          %247 = sbr.rel (%p245) target = $region24
        $region23: #{tpu_custom_call.1} parent=11 // pred_region
          _
        $region24: #{tpu_custom_call.1} parent=11 // pred_fallthru
          _
        // Predicated region
        $region25: #{tpu_custom_call.1} parent=11 // pred_check
          %p248 = pneg %p175
        $region26: #{tpu_custom_call.1} parent=11 // pred_check_branch
          %250 = sbr.rel (%p248) target = $region28
        $region27: #{tpu_custom_call.1} parent=11 // pred_region
          _
        $region28: #{tpu_custom_call.1} parent=11 // pred_fallthru
          _
        // Predicated region
        $region29: #{tpu_custom_call.1} parent=11 // pred_check
          %p251 = pneg %p196
        $region30: #{tpu_custom_call.1} parent=11 // pred_check_branch
          %253 = sbr.rel (%p251) target = $region32
        $region31: #{tpu_custom_call.1} parent=11 // pred_region
          _
        $region32: #{tpu_custom_call.1} parent=11 // pred_fallthru
          _
      $region12: #{tpu_custom_call.1} parent=5 // pred_fallthru
        _
      %p254 = scmp.lt.s32.totalorder %s16, 2
      // Predicated region
      $region33: #{tpu_custom_call.1} parent=5 // pred_check
        %p255 = pneg %p254
      $region34: #{tpu_custom_call.1} parent=5 // pred_check_branch
        %257 = sbr.rel (%p255) target = $region36
      $region35: #{tpu_custom_call.1} parent=5 // pred_region
        // Predicated region
        $region37: #{tpu_custom_call.1} parent=35 // pred_check
          %p258 = pneg %p57
        $region38: #{tpu_custom_call.1} parent=35 // pred_check_branch
          %260 = sbr.rel (%p258) target = $region40
        $region39: #{tpu_custom_call.1} parent=35 // pred_region
          %p261 = scmp.lt.s32.totalorder %s23, 1
          %s262 = scalar_select %p261, %s23, 1
          %p263 = scmp.lt.s32.totalorder %s24, 0
          %s264 = scalar_select %p263, %s24, 0
          %s265 = sadd.s32 %s264, %s262
          %s266 = smul.addr %s265, 8
          %s267 = scalar_lea.vmem %s0, %s266
        $region40: #{tpu_custom_call.1} parent=35 // pred_fallthru
          _
        // Predicated region
        $region41: #{tpu_custom_call.1} parent=35 // pred_check
          %p268 = pneg %p85
        $region42: #{tpu_custom_call.1} parent=35 // pred_check_branch
          %270 = sbr.rel (%p268) target = $region44
        $region43: #{tpu_custom_call.1} parent=35 // pred_region
          %p271 = scmp.lt.s32.totalorder %s23, 1
          %s272 = scalar_select %p271, %s23, 1
          %p273 = scmp.lt.s32.totalorder %s25, 0
          %s274 = scalar_select %p273, %s25, 0
          %s275 = sadd.s32 %s274, %s272
          %s276 = smul.addr %s275, 8
          %s277 = scalar_lea.vmem %s1, %s276
        $region44: #{tpu_custom_call.1} parent=35 // pred_fallthru
          _
      $region36: #{tpu_custom_call.1} parent=5 // pred_fallthru
        _
      %p278 = scmp.le.s32.totalorder 1, %s16
      %p279 = scmp.lt.s32.totalorder %s16, 3
      %p280 = pnand %p278, %p279
      %p281 = pneg %p280
      // Predicated region
      $region45: #{tpu_custom_call.1} parent=5 // pred_check
        _
      $region46: #{tpu_custom_call.1} parent=5 // pred_check_branch
        %283 = sbr.rel (%p280) target = $region48
      $region47: #{tpu_custom_call.1} parent=5 // pred_region
        %s284 = ssub.s32 %s16, 1
        %p285 = scmp.lt.s32.totalorder %s26, 1
        %s286 = scalar_select %p285, %s26, 1
        %p287 = scmp.lt.s32.totalorder %s27, 0
        %s288 = scalar_select %p287, %s27, 0
        %s289 = sadd.s32 %s288, %s286
        %s290 = smul.addr %s289, 8
        %s291 = scalar_lea.vmem %s0, %s290
        %p292 = pneg %p63
        %p293 = pneg %p60
        %p294 = scmp.lt.s32.totalorder %s26, 1
        %s295 = scalar_select %p294, %s26, 1
        %p296 = scmp.lt.s32.totalorder %s28, 0
        %s297 = scalar_select %p296, %s28, 0
        %s298 = sadd.s32 %s297, %s295
        %s299 = smul.addr %s298, 8
        %s300 = scalar_lea.vmem %s1, %s299
        %p301 = pneg %p91
        %p302 = pneg %p88
        %p303 = pneg %p112
        %p304 = pneg %p109
        %p305 = pneg %p133
        %p306 = pneg %p130
        %p307 = pneg %p154
        %p308 = pneg %p151
        %p309 = pneg %p175
        %p310 = pneg %p172
        %p311 = pneg %p196
        %p312 = pneg %p193
        %p313 = pneg %p224
        %p314 = pneg %p221
        %s315 = sand.u32 %s211, 1
        %s316 = scalar_lea.sflag [#allocation7], %s315
        %s317 = sand.u32 %s211, 1
        %s318 = smul.addr %s317, 8
        %s319 = scalar_lea.vmem [#allocation6], %s318
        %p320 = scmp.lt.s32.totalorder %s26, 1
        %s321 = scalar_select %p320, %s26, 1
        %p322 = scmp.lt.s32.totalorder %s27, 0
        %s323 = scalar_select %p322, %s27, 0
        %s324 = sadd.s32 %s323, %s321
        %s325 = smul.addr %s324, 8
        %s326 = scalar_lea.vmem %s0, %s325
        %p327 = scmp.lt.s32.totalorder %s26, 1
        %s328 = scalar_select %p327, %s26, 1
        %p329 = scmp.lt.s32.totalorder %s28, 0
        %s330 = scalar_select %p329, %s28, 0
        %s331 = sadd.s32 %s330, %s328
        %s332 = smul.addr %s331, 8
        %s333 = scalar_lea.vmem %s1, %s332
        %p334 = scmp.eq.s32.totalorder %s28, 0
        // Predicated region
        $region49: #{tpu_custom_call.1} parent=47 // pred_check
          %p335 = pneg %p334
        $region50: #{tpu_custom_call.1} parent=47 // pred_check_branch
          %337 = sbr.rel (%p335) target = $region52
        $region51: #{tpu_custom_call.1} parent=47 // pred_region
          %vm338 = vcmask 7168
          %339 = vst.msk [vmem:[#allocation3] sm:$0xff] %vm338, -inf
          %340 = vst.msk [vmem:[#allocation3 + $0x8] sm:$0xff] %vm338, -inf
          %341 = vst.msk [vmem:[#allocation3 + $0x10] sm:$0xff] %vm338, -inf
          %342 = vst.msk [vmem:[#allocation3 + $0x18] sm:$0xff] %vm338, -inf
          %343 = vst.msk [vmem:[#allocation3 + $0x20] sm:$0xff] %vm338, -inf
          %344 = vst.msk [vmem:[#allocation3 + $0x28] sm:$0xff] %vm338, -inf
          %345 = vst.msk [vmem:[#allocation3 + $0x30] sm:$0xff] %vm338, -inf
          %346 = vst.msk [vmem:[#allocation3 + $0x38] sm:$0xff] %vm338, -inf
          %347 = vst.msk [vmem:[#allocation4] sm:$0xff] %vm338, 0.0
          %348 = vst.msk [vmem:[#allocation4 + $0x8] sm:$0xff] %vm338, 0.0
          %349 = vst.msk [vmem:[#allocation4 + $0x10] sm:$0xff] %vm338, 0.0
          %350 = vst.msk [vmem:[#allocation4 + $0x18] sm:$0xff] %vm338, 0.0
          %351 = vst.msk [vmem:[#allocation4 + $0x20] sm:$0xff] %vm338, 0.0
          %352 = vst.msk [vmem:[#allocation4 + $0x28] sm:$0xff] %vm338, 0.0
          %353 = vst.msk [vmem:[#allocation4 + $0x30] sm:$0xff] %vm338, 0.0
          %354 = vst.msk [vmem:[#allocation4 + $0x38] sm:$0xff] %vm338, 0.0
          %vm355 = vcmask 31744
          %356 = vst.msk [vmem:[#allocation5] sm:$0xff] %vm355, 0.0
          %357 = vst.msk [vmem:[#allocation5 + $0x8] sm:$0xff] %vm355, 0.0
          %358 = vst.msk [vmem:[#allocation5 + $0x10] sm:$0xff] %vm355, 0.0
          %359 = vst.msk [vmem:[#allocation5 + $0x18] sm:$0xff] %vm355, 0.0
          %360 = vst.msk [vmem:[#allocation5 + $0x20] sm:$0xff] %vm355, 0.0
          %361 = vst.msk [vmem:[#allocation5 + $0x28] sm:$0xff] %vm355, 0.0
          %362 = vst.msk [vmem:[#allocation5 + $0x30] sm:$0xff] %vm355, 0.0
          %363 = vst.msk [vmem:[#allocation5 + $0x38] sm:$0xff] %vm355, 0.0
          %v364 = vld [vmem:[%s326] sm:$0xff]
          %v365 = vld [vmem:[%s2] sm:$0xff]
          %v366 = vld [vmem:[%s2 + $0x8] sm:$0xff]
          %v367 = vld [vmem:[%s2 + $0x10] sm:$0xff]
          %v368 = vld [vmem:[%s2 + $0x18] sm:$0xff]
          %vm369 = vcmask 261120
          %v371 = vsel %vm369, %v364, 0
          %373 = vmatprep.subr.mxu0 0.0
          %374 = vmatpush1.msra.mxu0 0.0
          %375 = vmatprep.subr.mxu0 0.0
          %376 = vmatpush1.msra.mxu0 0.0
          %377 = vmatprep.subr.mxu0 0.0
          %378 = vmatpush1.msra.mxu0 0.0
          %379 = vmatprep.subr.mxu0 0.0
          %380 = vmatpush1.msra.mxu0 0.0
          %381 = vmatprep.subr.mxu0 0.0
          %382 = vmatpush1.msra.mxu0 0.0
          %383 = vmatprep.subr.mxu0 0.0
          %384 = vmatpush1.msra.mxu0 0.0
          %385 = vmatprep.subr.mxu0 0.0
          %386 = vmatpush1.msra.mxu0 0.0
          %387 = vmatprep.subr.mxu0 0.0
          %388 = vmatpush1.msra.mxu0 0.0
          %389 = vmatprep.subr.mxu0 0.0
          %390 = vmatpush1.msra.mxu0 0.0
          %391 = vmatprep.subr.mxu0 0.0
          %392 = vmatpush1.msra.mxu0 0.0
          %393 = vmatprep.subr.mxu0 0.0
          %394 = vmatpush1.msra.mxu0 0.0
          %395 = vmatprep.subr.mxu0 0.0
          %396 = vmatpush1.msra.mxu0 0.0
          %397 = vmatprep.subr.mxu0 0.0
          %398 = vmatpush1.msra.mxu0 %v368
          %399 = vmatprep.subr.mxu0 0.0
          %400 = vmatpush1.msra.mxu0 %v367
          %401 = vmatprep.subr.mxu0 0.0
          %402 = vmatpush1.msra.mxu0 %v366
          %403 = vmatprep.subr.mxu0 0.0
          %404 = vmatpush1.msra.mxu0 %v365
          %405 = vmatprep.subr.mxu0 0.0
          %406 = vmatpush2.msra.mxu0 0.0
          %407 = vmatprep.subr.mxu0 0.0
          %408 = vmatpush2.msra.mxu0 0.0
          %409 = vmatprep.subr.mxu0 0.0
          %410 = vmatpush2.msra.mxu0 0.0
          %411 = vmatprep.subr.mxu0 0.0
          %412 = vmatpush2.msra.mxu0 0.0
          %413 = vmatprep.subr.mxu0 0.0
          %414 = vmatpush2.msra.mxu0 0.0
          %415 = vmatprep.subr.mxu0 0.0
          %416 = vmatpush2.msra.mxu0 0.0
          %417 = vmatprep.subr.mxu0 0.0
          %418 = vmatpush2.msra.mxu0 0.0
          %419 = vmatprep.subr.mxu0 0.0
          %420 = vmatpush2.msra.mxu0 0.0
          %421 = vmatprep.subr.mxu0 0.0
          %422 = vmatpush2.msra.mxu0 0.0
          %423 = vmatprep.subr.mxu0 0.0
          %424 = vmatpush2.msra.mxu0 0.0
          %425 = vmatprep.subr.mxu0 0.0
          %426 = vmatpush2.msra.mxu0 0.0
          %427 = vmatprep.subr.mxu0 0.0
          %428 = vmatpush2.msra.mxu0 0.0
          %429 = vmatprep.subr.mxu0 0.0
          %430 = vmatpush2.msra.mxu0 0.0
          %431 = vmatprep.subr.mxu0 0.0
          %432 = vmatpush2.msra.mxu0 0.0
          %433 = vmatprep.subr.mxu0 0.0
          %434 = vmatpush2.msra.mxu0 0.0
          %435 = vmatprep.subr.mxu0 0.0
          %436 = vmatpush2.msra.mxu0 0.0
          %437 = vmatprep.mubr.f32.mxu0 0.0
          %438 = vmatmul.mubr.f32.gmra.mxu0 %v371
          %v439 = vpop.f32.mrf.mxu0
          %v440 = vadd.f32 0.0, %v439
          %v441 = vpop.f32.mrf.mxu0
          %442 = vdwg.mxu0
          %v443 = vmul.f32 %v440, 0.17677669
          %444 = vst.msk [vmem:[#allocation2] sm:$0xff] %vm355, %v443
          %s445 = scalar_lea.vmem %s2, 32
          %v446 = vld [vmem:[%s445] sm:$0xff]
          %v447 = vld [vmem:[%s445 + $0x8] sm:$0xff]
          %v448 = vld [vmem:[%s445 + $0x10] sm:$0xff]
          %v449 = vld [vmem:[%s445 + $0x18] sm:$0xff]
          %450 = vmatprep.subr.mxu0 0.0
          %451 = vmatpush1.msra.mxu0 0.0
          %452 = vmatprep.subr.mxu0 0.0
          %453 = vmatpush1.msra.mxu0 0.0
          %454 = vmatprep.subr.mxu0 0.0
          %455 = vmatpush1.msra.mxu0 0.0
          %456 = vmatprep.subr.mxu0 0.0
          %457 = vmatpush1.msra.mxu0 0.0
          %458 = vmatprep.subr.mxu0 0.0
          %459 = vmatpush1.msra.mxu0 0.0
          %460 = vmatprep.subr.mxu0 0.0
          %461 = vmatpush1.msra.mxu0 0.0
          %462 = vmatprep.subr.mxu0 0.0
          %463 = vmatpush1.msra.mxu0 0.0
          %464 = vmatprep.subr.mxu0 0.0
          %465 = vmatpush1.msra.mxu0 0.0
          %466 = vmatprep.subr.mxu0 0.0
          %467 = vmatpush1.msra.mxu0 0.0
          %468 = vmatprep.subr.mxu0 0.0
          %469 = vmatpush1.msra.mxu0 0.0
          %470 = vmatprep.subr.mxu0 0.0
          %471 = vmatpush1.msra.mxu0 0.0
          %472 = vmatprep.subr.mxu0 0.0
          %473 = vmatpush1.msra.mxu0 0.0
          %474 = vmatprep.subr.mxu0 0.0
          %475 = vmatpush1.msra.mxu0 %v449
          %476 = vmatprep.subr.mxu0 0.0
          %477 = vmatpush1.msra.mxu0 %v448
          %478 = vmatprep.subr.mxu0 0.0
          %479 = vmatpush1.msra.mxu0 %v447
          %480 = vmatprep.subr.mxu0 0.0
          %481 = vmatpush1.msra.mxu0 %v446
          %482 = vmatprep.subr.mxu0 0.0
          %483 = vmatpush2.msra.mxu0 0.0
          %484 = vmatprep.subr.mxu0 0.0
          %485 = vmatpush2.msra.mxu0 0.0
          %486 = vmatprep.subr.mxu0 0.0
          %487 = vmatpush2.msra.mxu0 0.0
          %488 = vmatprep.subr.mxu0 0.0
          %489 = vmatpush2.msra.mxu0 0.0
          %490 = vmatprep.subr.mxu0 0.0
          %491 = vmatpush2.msra.mxu0 0.0
          %492 = vmatprep.subr.mxu0 0.0
          %493 = vmatpush2.msra.mxu0 0.0
          %494 = vmatprep.subr.mxu0 0.0
          %495 = vmatpush2.msra.mxu0 0.0
          %496 = vmatprep.subr.mxu0 0.0
          %497 = vmatpush2.msra.mxu0 0.0
          %498 = vmatprep.subr.mxu0 0.0
          %499 = vmatpush2.msra.mxu0 0.0
          %500 = vmatprep.subr.mxu0 0.0
          %501 = vmatpush2.msra.mxu0 0.0
          %502 = vmatprep.subr.mxu0 0.0
          %503 = vmatpush2.msra.mxu0 0.0
          %504 = vmatprep.subr.mxu0 0.0
          %505 = vmatpush2.msra.mxu0 0.0
          %506 = vmatprep.subr.mxu0 0.0
          %507 = vmatpush2.msra.mxu0 0.0
          %508 = vmatprep.subr.mxu0 0.0
          %509 = vmatpush2.msra.mxu0 0.0
          %510 = vmatprep.subr.mxu0 0.0
          %511 = vmatpush2.msra.mxu0 0.0
          %512 = vmatprep.subr.mxu0 0.0
          %513 = vmatpush2.msra.mxu0 0.0
          %514 = vmatprep.mubr.f32.mxu0 0.0
          %515 = vmatmul.mubr.f32.gmra.mxu0 %v371
          %v516 = vpop.f32.mrf.mxu0
          %v517 = vadd.f32 0.0, %v516
          %v518 = vpop.f32.mrf.mxu0
          %519 = vdwg.mxu0
          %v520 = vmul.f32 %v517, 0.17677669
          %s521 = scalar_lea.vmem [#allocation2], 8
          %522 = vst.msk [vmem:[%s521] sm:$0xff] %vm355, %v520
          %s523 = scalar_lea.vmem %s2, 64
          %v524 = vld [vmem:[%s523] sm:$0xff]
          %v525 = vld [vmem:[%s523 + $0x8] sm:$0xff]
          %v526 = vld [vmem:[%s523 + $0x10] sm:$0xff]
          %v527 = vld [vmem:[%s523 + $0x18] sm:$0xff]
          %528 = vmatprep.subr.mxu0 0.0
          %529 = vmatpush1.msra.mxu0 0.0
          %530 = vmatprep.subr.mxu0 0.0
          %531 = vmatpush1.msra.mxu0 0.0
          %532 = vmatprep.subr.mxu0 0.0
          %533 = vmatpush1.msra.mxu0 0.0
          %534 = vmatprep.subr.mxu0 0.0
          %535 = vmatpush1.msra.mxu0 0.0
          %536 = vmatprep.subr.mxu0 0.0
          %537 = vmatpush1.msra.mxu0 0.0
          %538 = vmatprep.subr.mxu0 0.0
          %539 = vmatpush1.msra.mxu0 0.0
          %540 = vmatprep.subr.mxu0 0.0
          %541 = vmatpush1.msra.mxu0 0.0
          %542 = vmatprep.subr.mxu0 0.0
          %543 = vmatpush1.msra.mxu0 0.0
          %544 = vmatprep.subr.mxu0 0.0
          %545 = vmatpush1.msra.mxu0 0.0
          %546 = vmatprep.subr.mxu0 0.0
          %547 = vmatpush1.msra.mxu0 0.0
          %548 = vmatprep.subr.mxu0 0.0
          %549 = vmatpush1.msra.mxu0 0.0
          %550 = vmatprep.subr.mxu0 0.0
          %551 = vmatpush1.msra.mxu0 0.0
          %552 = vmatprep.subr.mxu0 0.0
          %553 = vmatpush1.msra.mxu0 %v527
          %554 = vmatprep.subr.mxu0 0.0
          %555 = vmatpush1.msra.mxu0 %v526
          %556 = vmatprep.subr.mxu0 0.0
          %557 = vmatpush1.msra.mxu0 %v525
          %558 = vmatprep.subr.mxu0 0.0
          %559 = vmatpush1.msra.mxu0 %v524
          %560 = vmatprep.subr.mxu0 0.0
          %561 = vmatpush2.msra.mxu0 0.0
          %562 = vmatprep.subr.mxu0 0.0
          %563 = vmatpush2.msra.mxu0 0.0
          %564 = vmatprep.subr.mxu0 0.0
          %565 = vmatpush2.msra.mxu0 0.0
          %566 = vmatprep.subr.mxu0 0.0
          %567 = vmatpush2.msra.mxu0 0.0
          %568 = vmatprep.subr.mxu0 0.0
          %569 = vmatpush2.msra.mxu0 0.0
          %570 = vmatprep.subr.mxu0 0.0
          %571 = vmatpush2.msra.mxu0 0.0
          %572 = vmatprep.subr.mxu0 0.0
          %573 = vmatpush2.msra.mxu0 0.0
          %574 = vmatprep.subr.mxu0 0.0
          %575 = vmatpush2.msra.mxu0 0.0
          %576 = vmatprep.subr.mxu0 0.0
          %577 = vmatpush2.msra.mxu0 0.0
          %578 = vmatprep.subr.mxu0 0.0
          %579 = vmatpush2.msra.mxu0 0.0
          %580 = vmatprep.subr.mxu0 0.0
          %581 = vmatpush2.msra.mxu0 0.0
          %582 = vmatprep.subr.mxu0 0.0
          %583 = vmatpush2.msra.mxu0 0.0
          %584 = vmatprep.subr.mxu0 0.0
          %585 = vmatpush2.msra.mxu0 0.0
          %586 = vmatprep.subr.mxu0 0.0
          %587 = vmatpush2.msra.mxu0 0.0
          %588 = vmatprep.subr.mxu0 0.0
          %589 = vmatpush2.msra.mxu0 0.0
          %590 = vmatprep.subr.mxu0 0.0
          %591 = vmatpush2.msra.mxu0 0.0
          %592 = vmatprep.mubr.f32.mxu0 0.0
          %593 = vmatmul.mubr.f32.gmra.mxu0 %v371
          %v594 = vpop.f32.mrf.mxu0
          %v595 = vadd.f32 0.0, %v594
          %v596 = vpop.f32.mrf.mxu0
          %597 = vdwg.mxu0
          %v598 = vmul.f32 %v595, 0.17677669
          %s599 = scalar_lea.vmem [#allocation2], 16
          %600 = vst.msk [vmem:[%s599] sm:$0xff] %vm355, %v598
          %s601 = scalar_lea.vmem %s2, 96
          %v602 = vld [vmem:[%s601] sm:$0xff]
          %v603 = vld [vmem:[%s601 + $0x8] sm:$0xff]
          %v604 = vld [vmem:[%s601 + $0x10] sm:$0xff]
          %v605 = vld [vmem:[%s601 + $0x18] sm:$0xff]
          %606 = vmatprep.subr.mxu0 0.0
          %607 = vmatpush1.msra.mxu0 0.0
          %608 = vmatprep.subr.mxu0 0.0
          %609 = vmatpush1.msra.mxu0 0.0
          %610 = vmatprep.subr.mxu0 0.0
          %611 = vmatpush1.msra.mxu0 0.0
          %612 = vmatprep.subr.mxu0 0.0
          %613 = vmatpush1.msra.mxu0 0.0
          %614 = vmatprep.subr.mxu0 0.0
          %615 = vmatpush1.msra.mxu0 0.0
          %616 = vmatprep.subr.mxu0 0.0
          %617 = vmatpush1.msra.mxu0 0.0
          %618 = vmatprep.subr.mxu0 0.0
          %619 = vmatpush1.msra.mxu0 0.0
          %620 = vmatprep.subr.mxu0 0.0
          %621 = vmatpush1.msra.mxu0 0.0
          %622 = vmatprep.subr.mxu0 0.0
          %623 = vmatpush1.msra.mxu0 0.0
          %624 = vmatprep.subr.mxu0 0.0
          %625 = vmatpush1.msra.mxu0 0.0
          %626 = vmatprep.subr.mxu0 0.0
          %627 = vmatpush1.msra.mxu0 0.0
          %628 = vmatprep.subr.mxu0 0.0
          %629 = vmatpush1.msra.mxu0 0.0
          %630 = vmatprep.subr.mxu0 0.0
          %631 = vmatpush1.msra.mxu0 %v605
          %632 = vmatprep.subr.mxu0 0.0
          %633 = vmatpush1.msra.mxu0 %v604
          %634 = vmatprep.subr.mxu0 0.0
          %635 = vmatpush1.msra.mxu0 %v603
          %636 = vmatprep.subr.mxu0 0.0
          %637 = vmatpush1.msra.mxu0 %v602
          %638 = vmatprep.subr.mxu0 0.0
          %639 = vmatpush2.msra.mxu0 0.0
          %640 = vmatprep.subr.mxu0 0.0
          %641 = vmatpush2.msra.mxu0 0.0
          %642 = vmatprep.subr.mxu0 0.0
          %643 = vmatpush2.msra.mxu0 0.0
          %644 = vmatprep.subr.mxu0 0.0
          %645 = vmatpush2.msra.mxu0 0.0
          %646 = vmatprep.subr.mxu0 0.0
          %647 = vmatpush2.msra.mxu0 0.0
          %648 = vmatprep.subr.mxu0 0.0
          %649 = vmatpush2.msra.mxu0 0.0
          %650 = vmatprep.subr.mxu0 0.0
          %651 = vmatpush2.msra.mxu0 0.0
          %652 = vmatprep.subr.mxu0 0.0
          %653 = vmatpush2.msra.mxu0 0.0
          %654 = vmatprep.subr.mxu0 0.0
          %655 = vmatpush2.msra.mxu0 0.0
          %656 = vmatprep.subr.mxu0 0.0
          %657 = vmatpush2.msra.mxu0 0.0
          %658 = vmatprep.subr.mxu0 0.0
          %659 = vmatpush2.msra.mxu0 0.0
          %660 = vmatprep.subr.mxu0 0.0
          %661 = vmatpush2.msra.mxu0 0.0
          %662 = vmatprep.subr.mxu0 0.0
          %663 = vmatpush2.msra.mxu0 0.0
          %664 = vmatprep.subr.mxu0 0.0
          %665 = vmatpush2.msra.mxu0 0.0
          %666 = vmatprep.subr.mxu0 0.0
          %667 = vmatpush2.msra.mxu0 0.0
          %668 = vmatprep.subr.mxu0 0.0
          %669 = vmatpush2.msra.mxu0 0.0
          %670 = vmatprep.mubr.f32.mxu0 0.0
          %671 = vmatmul.mubr.f32.gmra.mxu0 %v371
          %v672 = vpop.f32.mrf.mxu0
          %v673 = vadd.f32 0.0, %v672
          %v674 = vpop.f32.mrf.mxu0
          %675 = vdwg.mxu0
          %v676 = vmul.f32 %v673, 0.17677669
          %s677 = scalar_lea.vmem [#allocation2], 24
          %678 = vst.msk [vmem:[%s677] sm:$0xff] %vm355, %v676
          %s679 = scalar_lea.vmem %s2, 128
          %v680 = vld [vmem:[%s679] sm:$0xff]
          %v681 = vld [vmem:[%s679 + $0x8] sm:$0xff]
          %v682 = vld [vmem:[%s679 + $0x10] sm:$0xff]
          %v683 = vld [vmem:[%s679 + $0x18] sm:$0xff]
          %684 = vmatprep.subr.mxu0 0.0
          %685 = vmatpush1.msra.mxu0 0.0
          %686 = vmatprep.subr.mxu0 0.0
          %687 = vmatpush1.msra.mxu0 0.0
          %688 = vmatprep.subr.mxu0 0.0
          %689 = vmatpush1.msra.mxu0 0.0
          %690 = vmatprep.subr.mxu0 0.0
          %691 = vmatpush1.msra.mxu0 0.0
          %692 = vmatprep.subr.mxu0 0.0
          %693 = vmatpush1.msra.mxu0 0.0
          %694 = vmatprep.subr.mxu0 0.0
          %695 = vmatpush1.msra.mxu0 0.0
          %696 = vmatprep.subr.mxu0 0.0
          %697 = vmatpush1.msra.mxu0 0.0
          %698 = vmatprep.subr.mxu0 0.0
          %699 = vmatpush1.msra.mxu0 0.0
          %700 = vmatprep.subr.mxu0 0.0
          %701 = vmatpush1.msra.mxu0 0.0
          %702 = vmatprep.subr.mxu0 0.0
          %703 = vmatpush1.msra.mxu0 0.0
          %704 = vmatprep.subr.mxu0 0.0
          %705 = vmatpush1.msra.mxu0 0.0
          %706 = vmatprep.subr.mxu0 0.0
          %707 = vmatpush1.msra.mxu0 0.0
          %708 = vmatprep.subr.mxu0 0.0
          %709 = vmatpush1.msra.mxu0 %v683
          %710 = vmatprep.subr.mxu0 0.0
          %711 = vmatpush1.msra.mxu0 %v682
          %712 = vmatprep.subr.mxu0 0.0
          %713 = vmatpush1.msra.mxu0 %v681
          %714 = vmatprep.subr.mxu0 0.0
          %715 = vmatpush1.msra.mxu0 %v680
          %716 = vmatprep.subr.mxu0 0.0
          %717 = vmatpush2.msra.mxu0 0.0
          %718 = vmatprep.subr.mxu0 0.0
          %719 = vmatpush2.msra.mxu0 0.0
          %720 = vmatprep.subr.mxu0 0.0
          %721 = vmatpush2.msra.mxu0 0.0
          %722 = vmatprep.subr.mxu0 0.0
          %723 = vmatpush2.msra.mxu0 0.0
          %724 = vmatprep.subr.mxu0 0.0
          %725 = vmatpush2.msra.mxu0 0.0
          %726 = vmatprep.subr.mxu0 0.0
          %727 = vmatpush2.msra.mxu0 0.0
          %728 = vmatprep.subr.mxu0 0.0
          %729 = vmatpush2.msra.mxu0 0.0
          %730 = vmatprep.subr.mxu0 0.0
          %731 = vmatpush2.msra.mxu0 0.0
          %732 = vmatprep.subr.mxu0 0.0
          %733 = vmatpush2.msra.mxu0 0.0
          %734 = vmatprep.subr.mxu0 0.0
          %735 = vmatpush2.msra.mxu0 0.0
          %736 = vmatprep.subr.mxu0 0.0
          %737 = vmatpush2.msra.mxu0 0.0
          %738 = vmatprep.subr.mxu0 0.0
          %739 = vmatpush2.msra.mxu0 0.0
          %740 = vmatprep.subr.mxu0 0.0
          %741 = vmatpush2.msra.mxu0 0.0
          %742 = vmatprep.subr.mxu0 0.0
          %743 = vmatpush2.msra.mxu0 0.0
          %744 = vmatprep.subr.mxu0 0.0
          %745 = vmatpush2.msra.mxu0 0.0
          %746 = vmatprep.subr.mxu0 0.0
          %747 = vmatpush2.msra.mxu0 0.0
          %748 = vmatprep.mubr.f32.mxu0 0.0
          %749 = vmatmul.mubr.f32.gmra.mxu0 %v371
          %v750 = vpop.f32.mrf.mxu0
          %v751 = vadd.f32 0.0, %v750
          %v752 = vpop.f32.mrf.mxu0
          %753 = vdwg.mxu0
          %v754 = vmul.f32 %v751, 0.17677669
          %s755 = scalar_lea.vmem [#allocation2], 32
          %756 = vst.msk [vmem:[%s755] sm:$0xff] %vm355, %v754
          %s757 = scalar_lea.vmem %s2, 160
          %v758 = vld [vmem:[%s757] sm:$0xff]
          %v759 = vld [vmem:[%s757 + $0x8] sm:$0xff]
          %v760 = vld [vmem:[%s757 + $0x10] sm:$0xff]
          %v761 = vld [vmem:[%s757 + $0x18] sm:$0xff]
          %762 = vmatprep.subr.mxu0 0.0
          %763 = vmatpush1.msra.mxu0 0.0
          %764 = vmatprep.subr.mxu0 0.0
          %765 = vmatpush1.msra.mxu0 0.0
          %766 = vmatprep.subr.mxu0 0.0
          %767 = vmatpush1.msra.mxu0 0.0
          %768 = vmatprep.subr.mxu0 0.0
          %769 = vmatpush1.msra.mxu0 0.0
          %770 = vmatprep.subr.mxu0 0.0
          %771 = vmatpush1.msra.mxu0 0.0
          %772 = vmatprep.subr.mxu0 0.0
          %773 = vmatpush1.msra.mxu0 0.0
          %774 = vmatprep.subr.mxu0 0.0
          %775 = vmatpush1.msra.mxu0 0.0
          %776 = vmatprep.subr.mxu0 0.0
          %777 = vmatpush1.msra.mxu0 0.0
          %778 = vmatprep.subr.mxu0 0.0
          %779 = vmatpush1.msra.mxu0 0.0
          %780 = vmatprep.subr.mxu0 0.0
          %781 = vmatpush1.msra.mxu0 0.0
          %782 = vmatprep.subr.mxu0 0.0
          %783 = vmatpush1.msra.mxu0 0.0
          %784 = vmatprep.subr.mxu0 0.0
          %785 = vmatpush1.msra.mxu0 0.0
          %786 = vmatprep.subr.mxu0 0.0
          %787 = vmatpush1.msra.mxu0 %v761
          %788 = vmatprep.subr.mxu0 0.0
          %789 = vmatpush1.msra.mxu0 %v760
          %790 = vmatprep.subr.mxu0 0.0
          %791 = vmatpush1.msra.mxu0 %v759
          %792 = vmatprep.subr.mxu0 0.0
          %793 = vmatpush1.msra.mxu0 %v758
          %794 = vmatprep.subr.mxu0 0.0
          %795 = vmatpush2.msra.mxu0 0.0
          %796 = vmatprep.subr.mxu0 0.0
          %797 = vmatpush2.msra.mxu0 0.0
          %798 = vmatprep.subr.mxu0 0.0
          %799 = vmatpush2.msra.mxu0 0.0
          %800 = vmatprep.subr.mxu0 0.0
          %801 = vmatpush2.msra.mxu0 0.0
          %802 = vmatprep.subr.mxu0 0.0
          %803 = vmatpush2.msra.mxu0 0.0
          %804 = vmatprep.subr.mxu0 0.0
          %805 = vmatpush2.msra.mxu0 0.0
          %806 = vmatprep.subr.mxu0 0.0
          %807 = vmatpush2.msra.mxu0 0.0
          %808 = vmatprep.subr.mxu0 0.0
          %809 = vmatpush2.msra.mxu0 0.0
          %810 = vmatprep.subr.mxu0 0.0
          %811 = vmatpush2.msra.mxu0 0.0
          %812 = vmatprep.subr.mxu0 0.0
          %813 = vmatpush2.msra.mxu0 0.0
          %814 = vmatprep.subr.mxu0 0.0
          %815 = vmatpush2.msra.mxu0 0.0
          %816 = vmatprep.subr.mxu0 0.0
          %817 = vmatpush2.msra.mxu0 0.0
          %818 = vmatprep.subr.mxu0 0.0
          %819 = vmatpush2.msra.mxu0 0.0
          %820 = vmatprep.subr.mxu0 0.0
          %821 = vmatpush2.msra.mxu0 0.0
          %822 = vmatprep.subr.mxu0 0.0
          %823 = vmatpush2.msra.mxu0 0.0
          %824 = vmatprep.subr.mxu0 0.0
          %825 = vmatpush2.msra.mxu0 0.0
          %826 = vmatprep.mubr.f32.mxu0 0.0
          %827 = vmatmul.mubr.f32.gmra.mxu0 %v371
          %v828 = vpop.f32.mrf.mxu0
          %v829 = vadd.f32 0.0, %v828
          %v830 = vpop.f32.mrf.mxu0
          %831 = vdwg.mxu0
          %v832 = vmul.f32 %v829, 0.17677669
          %s833 = scalar_lea.vmem [#allocation2], 40
          %834 = vst.msk [vmem:[%s833] sm:$0xff] %vm355, %v832
          %s835 = scalar_lea.vmem %s2, 192
          %v836 = vld [vmem:[%s835] sm:$0xff]
          %v837 = vld [vmem:[%s835 + $0x8] sm:$0xff]
          %v838 = vld [vmem:[%s835 + $0x10] sm:$0xff]
          %v839 = vld [vmem:[%s835 + $0x18] sm:$0xff]
          %840 = vmatprep.subr.mxu0 0.0
          %841 = vmatpush1.msra.mxu0 0.0
          %842 = vmatprep.subr.mxu0 0.0
          %843 = vmatpush1.msra.mxu0 0.0
          %844 = vmatprep.subr.mxu0 0.0
          %845 = vmatpush1.msra.mxu0 0.0
          %846 = vmatprep.subr.mxu0 0.0
          %847 = vmatpush1.msra.mxu0 0.0
          %848 = vmatprep.subr.mxu0 0.0
          %849 = vmatpush1.msra.mxu0 0.0
          %850 = vmatprep.subr.mxu0 0.0
          %851 = vmatpush1.msra.mxu0 0.0
          %852 = vmatprep.subr.mxu0 0.0
          %853 = vmatpush1.msra.mxu0 0.0
          %854 = vmatprep.subr.mxu0 0.0
          %855 = vmatpush1.msra.mxu0 0.0
          %856 = vmatprep.subr.mxu0 0.0
          %857 = vmatpush1.msra.mxu0 0.0
          %858 = vmatprep.subr.mxu0 0.0
          %859 = vmatpush1.msra.mxu0 0.0
          %860 = vmatprep.subr.mxu0 0.0
          %861 = vmatpush1.msra.mxu0 0.0
          %862 = vmatprep.subr.mxu0 0.0
          %863 = vmatpush1.msra.mxu0 0.0
          %864 = vmatprep.subr.mxu0 0.0
          %865 = vmatpush1.msra.mxu0 %v839
          %866 = vmatprep.subr.mxu0 0.0
          %867 = vmatpush1.msra.mxu0 %v838
          %868 = vmatprep.subr.mxu0 0.0
          %869 = vmatpush1.msra.mxu0 %v837
          %870 = vmatprep.subr.mxu0 0.0
          %871 = vmatpush1.msra.mxu0 %v836
          %872 = vmatprep.subr.mxu0 0.0
          %873 = vmatpush2.msra.mxu0 0.0
          %874 = vmatprep.subr.mxu0 0.0
          %875 = vmatpush2.msra.mxu0 0.0
          %876 = vmatprep.subr.mxu0 0.0
          %877 = vmatpush2.msra.mxu0 0.0
          %878 = vmatprep.subr.mxu0 0.0
          %879 = vmatpush2.msra.mxu0 0.0
          %880 = vmatprep.subr.mxu0 0.0
          %881 = vmatpush2.msra.mxu0 0.0
          %882 = vmatprep.subr.mxu0 0.0
          %883 = vmatpush2.msra.mxu0 0.0
          %884 = vmatprep.subr.mxu0 0.0
          %885 = vmatpush2.msra.mxu0 0.0
          %886 = vmatprep.subr.mxu0 0.0
          %887 = vmatpush2.msra.mxu0 0.0
          %888 = vmatprep.subr.mxu0 0.0
          %889 = vmatpush2.msra.mxu0 0.0
          %890 = vmatprep.subr.mxu0 0.0
          %891 = vmatpush2.msra.mxu0 0.0
          %892 = vmatprep.subr.mxu0 0.0
          %893 = vmatpush2.msra.mxu0 0.0
          %894 = vmatprep.subr.mxu0 0.0
          %895 = vmatpush2.msra.mxu0 0.0
          %896 = vmatprep.subr.mxu0 0.0
          %897 = vmatpush2.msra.mxu0 0.0
          %898 = vmatprep.subr.mxu0 0.0
          %899 = vmatpush2.msra.mxu0 0.0
          %900 = vmatprep.subr.mxu0 0.0
          %901 = vmatpush2.msra.mxu0 0.0
          %902 = vmatprep.subr.mxu0 0.0
          %903 = vmatpush2.msra.mxu0 0.0
          %904 = vmatprep.mubr.f32.mxu0 0.0
          %905 = vmatmul.mubr.f32.gmra.mxu0 %v371
          %v906 = vpop.f32.mrf.mxu0
          %v907 = vadd.f32 0.0, %v906
          %v908 = vpop.f32.mrf.mxu0
          %909 = vdwg.mxu0
          %v910 = vmul.f32 %v907, 0.17677669
          %s911 = scalar_lea.vmem [#allocation2], 48
          %912 = vst.msk [vmem:[%s911] sm:$0xff] %vm355, %v910
          %s913 = scalar_lea.vmem %s2, 224
          %v914 = vld [vmem:[%s913] sm:$0xff]
          %v915 = vld [vmem:[%s913 + $0x8] sm:$0xff]
          %v916 = vld [vmem:[%s913 + $0x10] sm:$0xff]
          %v917 = vld [vmem:[%s913 + $0x18] sm:$0xff]
          %918 = vmatprep.subr.mxu0 0.0
          %919 = vmatpush1.msra.mxu0 0.0
          %920 = vmatprep.subr.mxu0 0.0
          %921 = vmatpush1.msra.mxu0 0.0
          %922 = vmatprep.subr.mxu0 0.0
          %923 = vmatpush1.msra.mxu0 0.0
          %924 = vmatprep.subr.mxu0 0.0
          %925 = vmatpush1.msra.mxu0 0.0
          %926 = vmatprep.subr.mxu0 0.0
          %927 = vmatpush1.msra.mxu0 0.0
          %928 = vmatprep.subr.mxu0 0.0
          %929 = vmatpush1.msra.mxu0 0.0
          %930 = vmatprep.subr.mxu0 0.0
          %931 = vmatpush1.msra.mxu0 0.0
          %932 = vmatprep.subr.mxu0 0.0
          %933 = vmatpush1.msra.mxu0 0.0
          %934 = vmatprep.subr.mxu0 0.0
          %935 = vmatpush1.msra.mxu0 0.0
          %936 = vmatprep.subr.mxu0 0.0
          %937 = vmatpush1.msra.mxu0 0.0
          %938 = vmatprep.subr.mxu0 0.0
          %939 = vmatpush1.msra.mxu0 0.0
          %940 = vmatprep.subr.mxu0 0.0
          %941 = vmatpush1.msra.mxu0 0.0
          %942 = vmatprep.subr.mxu0 0.0
          %943 = vmatpush1.msra.mxu0 %v917
          %944 = vmatprep.subr.mxu0 0.0
          %945 = vmatpush1.msra.mxu0 %v916
          %946 = vmatprep.subr.mxu0 0.0
          %947 = vmatpush1.msra.mxu0 %v915
          %948 = vmatprep.subr.mxu0 0.0
          %949 = vmatpush1.msra.mxu0 %v914
          %950 = vmatprep.subr.mxu0 0.0
          %951 = vmatpush2.msra.mxu0 0.0
          %952 = vmatprep.subr.mxu0 0.0
          %953 = vmatpush2.msra.mxu0 0.0
          %954 = vmatprep.subr.mxu0 0.0
          %955 = vmatpush2.msra.mxu0 0.0
          %956 = vmatprep.subr.mxu0 0.0
          %957 = vmatpush2.msra.mxu0 0.0
          %958 = vmatprep.subr.mxu0 0.0
          %959 = vmatpush2.msra.mxu0 0.0
          %960 = vmatprep.subr.mxu0 0.0
          %961 = vmatpush2.msra.mxu0 0.0
          %962 = vmatprep.subr.mxu0 0.0
          %963 = vmatpush2.msra.mxu0 0.0
          %964 = vmatprep.subr.mxu0 0.0
          %965 = vmatpush2.msra.mxu0 0.0
          %966 = vmatprep.subr.mxu0 0.0
          %967 = vmatpush2.msra.mxu0 0.0
          %968 = vmatprep.subr.mxu0 0.0
          %969 = vmatpush2.msra.mxu0 0.0
          %970 = vmatprep.subr.mxu0 0.0
          %971 = vmatpush2.msra.mxu0 0.0
          %972 = vmatprep.subr.mxu0 0.0
          %973 = vmatpush2.msra.mxu0 0.0
          %974 = vmatprep.subr.mxu0 0.0
          %975 = vmatpush2.msra.mxu0 0.0
          %976 = vmatprep.subr.mxu0 0.0
          %977 = vmatpush2.msra.mxu0 0.0
          %978 = vmatprep.subr.mxu0 0.0
          %979 = vmatpush2.msra.mxu0 0.0
          %980 = vmatprep.subr.mxu0 0.0
          %981 = vmatpush2.msra.mxu0 0.0
          %982 = vmatprep.mubr.f32.mxu0 0.0
          %983 = vmatmul.mubr.f32.gmra.mxu0 %v371
          %v984 = vpop.f32.mrf.mxu0
          %v985 = vadd.f32 0.0, %v984
          %v986 = vpop.f32.mrf.mxu0
          %987 = vdwg.mxu0
          %v988 = vmul.f32 %v985, 0.17677669
          %s989 = scalar_lea.vmem [#allocation2], 56
          %990 = vst.msk [vmem:[%s989] sm:$0xff] %vm355, %v988
        $region52: #{tpu_custom_call.1} parent=47 // pred_fallthru
          _
        %v991 = vld [vmem:[%s333] sm:$0xff]
        %v992 = vld [vmem:[%s3] sm:$0xff]
        %v993 = vld [vmem:[%s3 + $0x8] sm:$0xff]
        %v994 = vld [vmem:[%s3 + $0x10] sm:$0xff]
        %v995 = vld [vmem:[%s3 + $0x18] sm:$0xff]
        %vm996 = vcmask 261120
        %v998 = vsel %vm996, %v991, 0
        %1000 = vmatprep.subr.mxu0 0.0
        %1001 = vmatpush1.msra.mxu0 0.0
        %1002 = vmatprep.subr.mxu0 0.0
        %1003 = vmatpush1.msra.mxu0 0.0
        %1004 = vmatprep.subr.mxu0 0.0
        %1005 = vmatpush1.msra.mxu0 0.0
        %1006 = vmatprep.subr.mxu0 0.0
        %1007 = vmatpush1.msra.mxu0 0.0
        %1008 = vmatprep.subr.mxu0 0.0
        %1009 = vmatpush1.msra.mxu0 0.0
        %1010 = vmatprep.subr.mxu0 0.0
        %1011 = vmatpush1.msra.mxu0 0.0
        %1012 = vmatprep.subr.mxu0 0.0
        %1013 = vmatpush1.msra.mxu0 0.0
        %1014 = vmatprep.subr.mxu0 0.0
        %1015 = vmatpush1.msra.mxu0 0.0
        %1016 = vmatprep.subr.mxu0 0.0
        %1017 = vmatpush1.msra.mxu0 0.0
        %1018 = vmatprep.subr.mxu0 0.0
        %1019 = vmatpush1.msra.mxu0 0.0
        %1020 = vmatprep.subr.mxu0 0.0
        %1021 = vmatpush1.msra.mxu0 0.0
        %1022 = vmatprep.subr.mxu0 0.0
        %1023 = vmatpush1.msra.mxu0 0.0
        %1024 = vmatprep.subr.mxu0 0.0
        %1025 = vmatpush1.msra.mxu0 %v995
        %1026 = vmatprep.subr.mxu0 0.0
        %1027 = vmatpush1.msra.mxu0 %v994
        %1028 = vmatprep.subr.mxu0 0.0
        %1029 = vmatpush1.msra.mxu0 %v993
        %1030 = vmatprep.subr.mxu0 0.0
        %1031 = vmatpush1.msra.mxu0 %v992
        %1032 = vmatprep.subr.mxu0 0.0
        %1033 = vmatpush2.msra.mxu0 0.0
        %1034 = vmatprep.subr.mxu0 0.0
        %1035 = vmatpush2.msra.mxu0 0.0
        %1036 = vmatprep.subr.mxu0 0.0
        %1037 = vmatpush2.msra.mxu0 0.0
        %1038 = vmatprep.subr.mxu0 0.0
        %1039 = vmatpush2.msra.mxu0 0.0
        %1040 = vmatprep.subr.mxu0 0.0
        %1041 = vmatpush2.msra.mxu0 0.0
        %1042 = vmatprep.subr.mxu0 0.0
        %1043 = vmatpush2.msra.mxu0 0.0
        %1044 = vmatprep.subr.mxu0 0.0
        %1045 = vmatpush2.msra.mxu0 0.0
        %1046 = vmatprep.subr.mxu0 0.0
        %1047 = vmatpush2.msra.mxu0 0.0
        %1048 = vmatprep.subr.mxu0 0.0
        %1049 = vmatpush2.msra.mxu0 0.0
        %1050 = vmatprep.subr.mxu0 0.0
        %1051 = vmatpush2.msra.mxu0 0.0
        %1052 = vmatprep.subr.mxu0 0.0
        %1053 = vmatpush2.msra.mxu0 0.0
        %1054 = vmatprep.subr.mxu0 0.0
        %1055 = vmatpush2.msra.mxu0 0.0
        %1056 = vmatprep.subr.mxu0 0.0
        %1057 = vmatpush2.msra.mxu0 0.0
        %1058 = vmatprep.subr.mxu0 0.0
        %1059 = vmatpush2.msra.mxu0 0.0
        %1060 = vmatprep.subr.mxu0 0.0
        %1061 = vmatpush2.msra.mxu0 0.0
        %1062 = vmatprep.subr.mxu0 0.0
        %1063 = vmatpush2.msra.mxu0 0.0
        %1064 = vmatprep.mubr.f32.mxu0 0.0
        %1065 = vmatmul.mubr.f32.gmra.mxu0 %v998
        %v1066 = vpop.f32.mrf.mxu0
        %v1067 = vadd.f32 0.0, %v1066
        %v1068 = vpop.f32.mrf.mxu0
        %1069 = vdwg.mxu0
        %v1070 = vld [vmem:[%s4] sm:$0xff]
        %v1071 = vld [vmem:[%s4 + $0x8] sm:$0xff]
        %v1072 = vld [vmem:[%s4 + $0x10] sm:$0xff]
        %v1073 = vld [vmem:[%s4 + $0x18] sm:$0xff]
        %1074 = vmatprep.subr.mxu0 0.0
        %1075 = vmatpush1.msra.mxu0 0.0
        %1076 = vmatprep.subr.mxu0 0.0
        %1077 = vmatpush1.msra.mxu0 0.0
        %1078 = vmatprep.subr.mxu0 0.0
        %1079 = vmatpush1.msra.mxu0 0.0
        %1080 = vmatprep.subr.mxu0 0.0
        %1081 = vmatpush1.msra.mxu0 0.0
        %1082 = vmatprep.subr.mxu0 0.0
        %1083 = vmatpush1.msra.mxu0 0.0
        %1084 = vmatprep.subr.mxu0 0.0
        %1085 = vmatpush1.msra.mxu0 0.0
        %1086 = vmatprep.subr.mxu0 0.0
        %1087 = vmatpush1.msra.mxu0 0.0
        %1088 = vmatprep.subr.mxu0 0.0
        %1089 = vmatpush1.msra.mxu0 0.0
        %1090 = vmatprep.subr.mxu0 0.0
        %1091 = vmatpush1.msra.mxu0 0.0
        %1092 = vmatprep.subr.mxu0 0.0
        %1093 = vmatpush1.msra.mxu0 0.0
        %1094 = vmatprep.subr.mxu0 0.0
        %1095 = vmatpush1.msra.mxu0 0.0
        %1096 = vmatprep.subr.mxu0 0.0
        %1097 = vmatpush1.msra.mxu0 0.0
        %1098 = vmatprep.subr.mxu0 0.0
        %1099 = vmatpush1.msra.mxu0 %v1073
        %1100 = vmatprep.subr.mxu0 0.0
        %1101 = vmatpush1.msra.mxu0 %v1072
        %1102 = vmatprep.subr.mxu0 0.0
        %1103 = vmatpush1.msra.mxu0 %v1071
        %1104 = vmatprep.subr.mxu0 0.0
        %1105 = vmatpush1.msra.mxu0 %v1070
        %1106 = vmatprep.subr.mxu0 0.0
        %1107 = vmatpush2.msra.mxu0 0.0
        %1108 = vmatprep.subr.mxu0 0.0
        %1109 = vmatpush2.msra.mxu0 0.0
        %1110 = vmatprep.subr.mxu0 0.0
        %1111 = vmatpush2.msra.mxu0 0.0
        %1112 = vmatprep.subr.mxu0 0.0
        %1113 = vmatpush2.msra.mxu0 0.0
        %1114 = vmatprep.subr.mxu0 0.0
        %1115 = vmatpush2.msra.mxu0 0.0
        %1116 = vmatprep.subr.mxu0 0.0
        %1117 = vmatpush2.msra.mxu0 0.0
        %1118 = vmatprep.subr.mxu0 0.0
        %1119 = vmatpush2.msra.mxu0 0.0
        %1120 = vmatprep.subr.mxu0 0.0
        %1121 = vmatpush2.msra.mxu0 0.0
        %1122 = vmatprep.subr.mxu0 0.0
        %1123 = vmatpush2.msra.mxu0 0.0
        %1124 = vmatprep.subr.mxu0 0.0
        %1125 = vmatpush2.msra.mxu0 0.0
        %1126 = vmatprep.subr.mxu0 0.0
        %1127 = vmatpush2.msra.mxu0 0.0
        %1128 = vmatprep.subr.mxu0 0.0
        %1129 = vmatpush2.msra.mxu0 0.0
        %1130 = vmatprep.subr.mxu0 0.0
        %1131 = vmatpush2.msra.mxu0 0.0
        %1132 = vmatprep.subr.mxu0 0.0
        %1133 = vmatpush2.msra.mxu0 0.0
        %1134 = vmatprep.subr.mxu0 0.0
        %1135 = vmatpush2.msra.mxu0 0.0
        %1136 = vmatprep.subr.mxu0 0.0
        %1137 = vmatpush2.msra.mxu0 0.0
        %1138 = vmatprep.mubr.f32.mxu0 0.0
        %1139 = vmatmul.mubr.f32.gmra.mxu0 %v998
        %v1140 = vpop.f32.mrf.mxu0
        %v1141 = vadd.f32 0.0, %v1140
        %v1142 = vpop.f32.mrf.mxu0
        %1143 = vdwg.mxu0
        %v1144 = vld [vmem:[#allocation2] sm:$0xff]
        %vm1145 = vcmask 31744
        %v1147 = vsel %vm1145, %v1144, 0
        %v1150 = vsel %vm1145, %v1067, 0
        %1152 = vmatprep.subr.mxu0 0.0
        %1153 = vmatpush1.xpose.msra.mxu0 0.0
        %1154 = vmatprep.subr.mxu0 0.0
        %1155 = vmatpush1.xpose.msra.mxu0 0.0
        %1156 = vmatprep.subr.mxu0 0.0
        %1157 = vmatpush1.xpose.msra.mxu0 0.0
        %1158 = vmatprep.subr.mxu0 0.0
        %1159 = vmatpush1.xpose.msra.mxu0 0.0
        %1160 = vmatprep.subr.mxu0 0.0
        %1161 = vmatpush1.xpose.msra.mxu0 0.0
        %1162 = vmatprep.subr.mxu0 0.0
        %1163 = vmatpush1.xpose.msra.mxu0 0.0
        %1164 = vmatprep.subr.mxu0 0.0
        %1165 = vmatpush1.xpose.msra.mxu0 0.0
        %1166 = vmatprep.subr.mxu0 0.0
        %1167 = vmatpush1.xpose.msra.mxu0 0.0
        %1168 = vmatprep.subr.mxu0 0.0
        %1169 = vmatpush1.xpose.msra.mxu0 0.0
        %1170 = vmatprep.subr.mxu0 0.0
        %1171 = vmatpush1.xpose.msra.mxu0 0.0
        %1172 = vmatprep.subr.mxu0 0.0
        %1173 = vmatpush1.xpose.msra.mxu0 0.0
        %1174 = vmatprep.subr.mxu0 0.0
        %1175 = vmatpush1.xpose.msra.mxu0 0.0
        %1176 = vmatprep.subr.mxu0 0.0
        %1177 = vmatpush1.xpose.msra.mxu0 0.0
        %1178 = vmatprep.subr.mxu0 0.0
        %1179 = vmatpush1.xpose.msra.mxu0 0.0
        %1180 = vmatprep.subr.mxu0 0.0
        %1181 = vmatpush1.xpose.msra.mxu0 0.0
        %1182 = vmatprep.subr.mxu0 0.0
        %1183 = vmatpush1.xpose.msra.mxu0 %v1150
        %1184 = vmatprep.subr.mxu0 0.0
        %1185 = vmatpush2.xpose.msra.mxu0 0.0
        %1186 = vmatprep.subr.mxu0 0.0
        %1187 = vmatpush2.xpose.msra.mxu0 0.0
        %1188 = vmatprep.subr.mxu0 0.0
        %1189 = vmatpush2.xpose.msra.mxu0 0.0
        %1190 = vmatprep.subr.mxu0 0.0
        %1191 = vmatpush2.xpose.msra.mxu0 0.0
        %1192 = vmatprep.subr.mxu0 0.0
        %1193 = vmatpush2.xpose.msra.mxu0 0.0
        %1194 = vmatprep.subr.mxu0 0.0
        %1195 = vmatpush2.xpose.msra.mxu0 0.0
        %1196 = vmatprep.subr.mxu0 0.0
        %1197 = vmatpush2.xpose.msra.mxu0 0.0
        %1198 = vmatprep.subr.mxu0 0.0
        %1199 = vmatpush2.xpose.msra.mxu0 0.0
        %1200 = vmatprep.subr.mxu0 0.0
        %1201 = vmatpush2.xpose.msra.mxu0 0.0
        %1202 = vmatprep.subr.mxu0 0.0
        %1203 = vmatpush2.xpose.msra.mxu0 0.0
        %1204 = vmatprep.subr.mxu0 0.0
        %1205 = vmatpush2.xpose.msra.mxu0 0.0
        %1206 = vmatprep.subr.mxu0 0.0
        %1207 = vmatpush2.xpose.msra.mxu0 0.0
        %1208 = vmatprep.subr.mxu0 0.0
        %1209 = vmatpush2.xpose.msra.mxu0 0.0
        %1210 = vmatprep.subr.mxu0 0.0
        %1211 = vmatpush2.xpose.msra.mxu0 0.0
        %1212 = vmatprep.subr.mxu0 0.0
        %1213 = vmatpush2.xpose.msra.mxu0 0.0
        %1214 = vmatprep.subr.mxu0 0.0
        %1215 = vmatpush2.xpose.msra.mxu0 0.0
        %1216 = vmatprep.mubr.f32.mxu0 0.0
        %1217 = vmatmul.mubr.f32.gmra.mxu0 %v1147
        %v1218 = vpop.f32.mrf.mxu0
        %v1219 = vadd.f32 0.0, %v1218
        %v1220 = vpop.f32.mrf.mxu0
        %1221 = vdwg.mxu0
        %v1222 = vld [vmem:[#allocation3] sm:$0xff]
        %vm1223 = vcmask 64512
        %v1224 = vsel %vm1223, %v1219, -inf
        %1225 = vmax.xlane.f32.xlu0 %v1224
        %v1226 = vpop.xlane.xlu0 %1225
        %v1227 = vmax.f32 %v1222, %v1226
        %v1228 = vsub.f32 %v1222, %v1227
        %v1229 = vmul.f32 %v1228, 1.442695
        %v1230 = vpow.pop %v1229
        %1232 = vset.pattern.permute.xlu0 0
        %1233 = vperm.xlu0 %1232, %v1227
        %v1234 = vpop.permute.xlu0 %1233
        %v1236 = vsub.f32 %v1219, %v1234
        %v1237 = vmul.f32 %v1236, 1.442695
        %v1238 = vpow.pop %v1237
        %v1239 = vld [vmem:[#allocation4] sm:$0xff]
        %v1240 = vmul.f32 %v1230, %v1239
        %v1241 = vsel %vm1223, %v1238, 0.0
        %1242 = vadd.xlane.f32.xlu0 %v1241
        %v1243 = vpop.xlane.xlu0 %1242
        %v1244 = vadd.f32 %v1240, %v1243
        %vm1245 = vcmask 7168
        %1246 = vst.msk [vmem:[#allocation4] sm:$0xff] %vm1245, %v1244
        %v1247 = vld [vmem:[#allocation5] sm:$0xff]
        %1249 = vset.pattern.permute.xlu0 0
        %1250 = vperm.xlu0 %1249, %v1230
        %v1251 = vpop.permute.xlu0 %1250
        %v1253 = vmul.f32 %v1251, %v1247
        %v1255 = vsel %vm1223, %v1238, 0
        %1257 = vmatprep.subr.mxu0 0.0
        %1258 = vmatpush1.msra.mxu0 0.0
        %1259 = vmatprep.subr.mxu0 0.0
        %1260 = vmatpush1.msra.mxu0 0.0
        %1261 = vmatprep.subr.mxu0 0.0
        %1262 = vmatpush1.msra.mxu0 0.0
        %1263 = vmatprep.subr.mxu0 0.0
        %1264 = vmatpush1.msra.mxu0 0.0
        %1265 = vmatprep.subr.mxu0 0.0
        %1266 = vmatpush1.msra.mxu0 0.0
        %1267 = vmatprep.subr.mxu0 0.0
        %1268 = vmatpush1.msra.mxu0 0.0
        %1269 = vmatprep.subr.mxu0 0.0
        %1270 = vmatpush1.msra.mxu0 0.0
        %1271 = vmatprep.subr.mxu0 0.0
        %1272 = vmatpush1.msra.mxu0 0.0
        %1273 = vmatprep.subr.mxu0 0.0
        %1274 = vmatpush1.msra.mxu0 0.0
        %1275 = vmatprep.subr.mxu0 0.0
        %1276 = vmatpush1.msra.mxu0 0.0
        %1277 = vmatprep.subr.mxu0 0.0
        %1278 = vmatpush1.msra.mxu0 0.0
        %1279 = vmatprep.subr.mxu0 0.0
        %1280 = vmatpush1.msra.mxu0 0.0
        %1281 = vmatprep.subr.mxu0 0.0
        %1282 = vmatpush1.msra.mxu0 0.0
        %1283 = vmatprep.subr.mxu0 0.0
        %1284 = vmatpush1.msra.mxu0 0.0
        %1285 = vmatprep.subr.mxu0 0.0
        %1286 = vmatpush1.msra.mxu0 0.0
        %1287 = vmatprep.subr.mxu0 0.0
        %1288 = vmatpush1.msra.mxu0 %v1141
        %1289 = vmatprep.subr.mxu0 0.0
        %1290 = vmatpush2.msra.mxu0 0.0
        %1291 = vmatprep.subr.mxu0 0.0
        %1292 = vmatpush2.msra.mxu0 0.0
        %1293 = vmatprep.subr.mxu0 0.0
        %1294 = vmatpush2.msra.mxu0 0.0
        %1295 = vmatprep.subr.mxu0 0.0
        %1296 = vmatpush2.msra.mxu0 0.0
        %1297 = vmatprep.subr.mxu0 0.0
        %1298 = vmatpush2.msra.mxu0 0.0
        %1299 = vmatprep.subr.mxu0 0.0
        %1300 = vmatpush2.msra.mxu0 0.0
        %1301 = vmatprep.subr.mxu0 0.0
        %1302 = vmatpush2.msra.mxu0 0.0
        %1303 = vmatprep.subr.mxu0 0.0
        %1304 = vmatpush2.msra.mxu0 0.0
        %1305 = vmatprep.subr.mxu0 0.0
        %1306 = vmatpush2.msra.mxu0 0.0
        %1307 = vmatprep.subr.mxu0 0.0
        %1308 = vmatpush2.msra.mxu0 0.0
        %1309 = vmatprep.subr.mxu0 0.0
        %1310 = vmatpush2.msra.mxu0 0.0
        %1311 = vmatprep.subr.mxu0 0.0
        %1312 = vmatpush2.msra.mxu0 0.0
        %1313 = vmatprep.subr.mxu0 0.0
        %1314 = vmatpush2.msra.mxu0 0.0
        %1315 = vmatprep.subr.mxu0 0.0
        %1316 = vmatpush2.msra.mxu0 0.0
        %1317 = vmatprep.subr.mxu0 0.0
        %1318 = vmatpush2.msra.mxu0 0.0
        %1319 = vmatprep.subr.mxu0 0.0
        %1320 = vmatpush2.msra.mxu0 0.0
        %1321 = vmatprep.mubr.f32.mxu0 0.0
        %1322 = vmatmul.mubr.f32.gmra.mxu0 %v1255
        %v1323 = vpop.f32.mrf.mxu0
        %v1324 = vadd.f32 0.0, %v1323
        %v1325 = vpop.f32.mrf.mxu0
        %1326 = vdwg.mxu0
        %v1327 = vadd.f32 %v1253, %v1324
        %1328 = vst.msk [vmem:[#allocation5] sm:$0xff] %vm1145, %v1327
        %1329 = vst.msk [vmem:[#allocation3] sm:$0xff] %vm1245, %v1227
        %s1330 = scalar_lea.vmem %s3, 32
        %v1331 = vld [vmem:[%s1330] sm:$0xff]
        %v1332 = vld [vmem:[%s1330 + $0x8] sm:$0xff]
        %v1333 = vld [vmem:[%s1330 + $0x10] sm:$0xff]
        %v1334 = vld [vmem:[%s1330 + $0x18] sm:$0xff]
        %1335 = vmatprep.subr.mxu0 0.0
        %1336 = vmatpush1.msra.mxu0 0.0
        %1337 = vmatprep.subr.mxu0 0.0
        %1338 = vmatpush1.msra.mxu0 0.0
        %1339 = vmatprep.subr.mxu0 0.0
        %1340 = vmatpush1.msra.mxu0 0.0
        %1341 = vmatprep.subr.mxu0 0.0
        %1342 = vmatpush1.msra.mxu0 0.0
        %1343 = vmatprep.subr.mxu0 0.0
        %1344 = vmatpush1.msra.mxu0 0.0
        %1345 = vmatprep.subr.mxu0 0.0
        %1346 = vmatpush1.msra.mxu0 0.0
        %1347 = vmatprep.subr.mxu0 0.0
        %1348 = vmatpush1.msra.mxu0 0.0
        %1349 = vmatprep.subr.mxu0 0.0
        %1350 = vmatpush1.msra.mxu0 0.0
        %1351 = vmatprep.subr.mxu0 0.0
        %1352 = vmatpush1.msra.mxu0 0.0
        %1353 = vmatprep.subr.mxu0 0.0
        %1354 = vmatpush1.msra.mxu0 0.0
        %1355 = vmatprep.subr.mxu0 0.0
        %1356 = vmatpush1.msra.mxu0 0.0
        %1357 = vmatprep.subr.mxu0 0.0
        %1358 = vmatpush1.msra.mxu0 0.0
        %1359 = vmatprep.subr.mxu0 0.0
        %1360 = vmatpush1.msra.mxu0 %v1334
        %1361 = vmatprep.subr.mxu0 0.0
        %1362 = vmatpush1.msra.mxu0 %v1333
        %1363 = vmatprep.subr.mxu0 0.0
        %1364 = vmatpush1.msra.mxu0 %v1332
        %1365 = vmatprep.subr.mxu0 0.0
        %1366 = vmatpush1.msra.mxu0 %v1331
        %1367 = vmatprep.subr.mxu0 0.0
        %1368 = vmatpush2.msra.mxu0 0.0
        %1369 = vmatprep.subr.mxu0 0.0
        %1370 = vmatpush2.msra.mxu0 0.0
        %1371 = vmatprep.subr.mxu0 0.0
        %1372 = vmatpush2.msra.mxu0 0.0
        %1373 = vmatprep.subr.mxu0 0.0
        %1374 = vmatpush2.msra.mxu0 0.0
        %1375 = vmatprep.subr.mxu0 0.0
        %1376 = vmatpush2.msra.mxu0 0.0
        %1377 = vmatprep.subr.mxu0 0.0
        %1378 = vmatpush2.msra.mxu0 0.0
        %1379 = vmatprep.subr.mxu0 0.0
        %1380 = vmatpush2.msra.mxu0 0.0
        %1381 = vmatprep.subr.mxu0 0.0
        %1382 = vmatpush2.msra.mxu0 0.0
        %1383 = vmatprep.subr.mxu0 0.0
        %1384 = vmatpush2.msra.mxu0 0.0
        %1385 = vmatprep.subr.mxu0 0.0
        %1386 = vmatpush2.msra.mxu0 0.0
        %1387 = vmatprep.subr.mxu0 0.0
        %1388 = vmatpush2.msra.mxu0 0.0
        %1389 = vmatprep.subr.mxu0 0.0
        %1390 = vmatpush2.msra.mxu0 0.0
        %1391 = vmatprep.subr.mxu0 0.0
        %1392 = vmatpush2.msra.mxu0 0.0
        %1393 = vmatprep.subr.mxu0 0.0
        %1394 = vmatpush2.msra.mxu0 0.0
        %1395 = vmatprep.subr.mxu0 0.0
        %1396 = vmatpush2.msra.mxu0 0.0
        %1397 = vmatprep.subr.mxu0 0.0
        %1398 = vmatpush2.msra.mxu0 0.0
        %1399 = vmatprep.mubr.f32.mxu0 0.0
        %1400 = vmatmul.mubr.f32.gmra.mxu0 %v998
        %v1401 = vpop.f32.mrf.mxu0
        %v1402 = vadd.f32 0.0, %v1401
        %v1403 = vpop.f32.mrf.mxu0
        %1404 = vdwg.mxu0
        %s1405 = scalar_lea.vmem %s4, 32
        %v1406 = vld [vmem:[%s1405] sm:$0xff]
        %v1407 = vld [vmem:[%s1405 + $0x8] sm:$0xff]
        %v1408 = vld [vmem:[%s1405 + $0x10] sm:$0xff]
        %v1409 = vld [vmem:[%s1405 + $0x18] sm:$0xff]
        %1410 = vmatprep.subr.mxu0 0.0
        %1411 = vmatpush1.msra.mxu0 0.0
        %1412 = vmatprep.subr.mxu0 0.0
        %1413 = vmatpush1.msra.mxu0 0.0
        %1414 = vmatprep.subr.mxu0 0.0
        %1415 = vmatpush1.msra.mxu0 0.0
        %1416 = vmatprep.subr.mxu0 0.0
        %1417 = vmatpush1.msra.mxu0 0.0
        %1418 = vmatprep.subr.mxu0 0.0
        %1419 = vmatpush1.msra.mxu0 0.0
        %1420 = vmatprep.subr.mxu0 0.0
        %1421 = vmatpush1.msra.mxu0 0.0
        %1422 = vmatprep.subr.mxu0 0.0
        %1423 = vmatpush1.msra.mxu0 0.0
        %1424 = vmatprep.subr.mxu0 0.0
        %1425 = vmatpush1.msra.mxu0 0.0
        %1426 = vmatprep.subr.mxu0 0.0
        %1427 = vmatpush1.msra.mxu0 0.0
        %1428 = vmatprep.subr.mxu0 0.0
        %1429 = vmatpush1.msra.mxu0 0.0
        %1430 = vmatprep.subr.mxu0 0.0
        %1431 = vmatpush1.msra.mxu0 0.0
        %1432 = vmatprep.subr.mxu0 0.0
        %1433 = vmatpush1.msra.mxu0 0.0
        %1434 = vmatprep.subr.mxu0 0.0
        %1435 = vmatpush1.msra.mxu0 %v1409
        %1436 = vmatprep.subr.mxu0 0.0
        %1437 = vmatpush1.msra.mxu0 %v1408
        %1438 = vmatprep.subr.mxu0 0.0
        %1439 = vmatpush1.msra.mxu0 %v1407
        %1440 = vmatprep.subr.mxu0 0.0
        %1441 = vmatpush1.msra.mxu0 %v1406
        %1442 = vmatprep.subr.mxu0 0.0
        %1443 = vmatpush2.msra.mxu0 0.0
        %1444 = vmatprep.subr.mxu0 0.0
        %1445 = vmatpush2.msra.mxu0 0.0
        %1446 = vmatprep.subr.mxu0 0.0
        %1447 = vmatpush2.msra.mxu0 0.0
        %1448 = vmatprep.subr.mxu0 0.0
        %1449 = vmatpush2.msra.mxu0 0.0
        %1450 = vmatprep.subr.mxu0 0.0
        %1451 = vmatpush2.msra.mxu0 0.0
        %1452 = vmatprep.subr.mxu0 0.0
        %1453 = vmatpush2.msra.mxu0 0.0
        %1454 = vmatprep.subr.mxu0 0.0
        %1455 = vmatpush2.msra.mxu0 0.0
        %1456 = vmatprep.subr.mxu0 0.0
        %1457 = vmatpush2.msra.mxu0 0.0
        %1458 = vmatprep.subr.mxu0 0.0
        %1459 = vmatpush2.msra.mxu0 0.0
        %1460 = vmatprep.subr.mxu0 0.0
        %1461 = vmatpush2.msra.mxu0 0.0
        %1462 = vmatprep.subr.mxu0 0.0
        %1463 = vmatpush2.msra.mxu0 0.0
        %1464 = vmatprep.subr.mxu0 0.0
        %1465 = vmatpush2.msra.mxu0 0.0
        %1466 = vmatprep.subr.mxu0 0.0
        %1467 = vmatpush2.msra.mxu0 0.0
        %1468 = vmatprep.subr.mxu0 0.0
        %1469 = vmatpush2.msra.mxu0 0.0
        %1470 = vmatprep.subr.mxu0 0.0
        %1471 = vmatpush2.msra.mxu0 0.0
        %1472 = vmatprep.subr.mxu0 0.0
        %1473 = vmatpush2.msra.mxu0 0.0
        %1474 = vmatprep.mubr.f32.mxu0 0.0
        %1475 = vmatmul.mubr.f32.gmra.mxu0 %v998
        %v1476 = vpop.f32.mrf.mxu0
        %v1477 = vadd.f32 0.0, %v1476
        %v1478 = vpop.f32.mrf.mxu0
        %1479 = vdwg.mxu0
        %s1480 = scalar_lea.vmem [#allocation2], 8
        %v1481 = vld [vmem:[%s1480] sm:$0xff]
        %v1483 = vsel %vm1145, %v1481, 0
        %v1486 = vsel %vm1145, %v1402, 0
        %1488 = vmatprep.subr.mxu0 0.0
        %1489 = vmatpush1.xpose.msra.mxu0 0.0
        %1490 = vmatprep.subr.mxu0 0.0
        %1491 = vmatpush1.xpose.msra.mxu0 0.0
        %1492 = vmatprep.subr.mxu0 0.0
        %1493 = vmatpush1.xpose.msra.mxu0 0.0
        %1494 = vmatprep.subr.mxu0 0.0
        %1495 = vmatpush1.xpose.msra.mxu0 0.0
        %1496 = vmatprep.subr.mxu0 0.0
        %1497 = vmatpush1.xpose.msra.mxu0 0.0
        %1498 = vmatprep.subr.mxu0 0.0
        %1499 = vmatpush1.xpose.msra.mxu0 0.0
        %1500 = vmatprep.subr.mxu0 0.0
        %1501 = vmatpush1.xpose.msra.mxu0 0.0
        %1502 = vmatprep.subr.mxu0 0.0
        %1503 = vmatpush1.xpose.msra.mxu0 0.0
        %1504 = vmatprep.subr.mxu0 0.0
        %1505 = vmatpush1.xpose.msra.mxu0 0.0
        %1506 = vmatprep.subr.mxu0 0.0
        %1507 = vmatpush1.xpose.msra.mxu0 0.0
        %1508 = vmatprep.subr.mxu0 0.0
        %1509 = vmatpush1.xpose.msra.mxu0 0.0
        %1510 = vmatprep.subr.mxu0 0.0
        %1511 = vmatpush1.xpose.msra.mxu0 0.0
        %1512 = vmatprep.subr.mxu0 0.0
        %1513 = vmatpush1.xpose.msra.mxu0 0.0
        %1514 = vmatprep.subr.mxu0 0.0
        %1515 = vmatpush1.xpose.msra.mxu0 0.0
        %1516 = vmatprep.subr.mxu0 0.0
        %1517 = vmatpush1.xpose.msra.mxu0 0.0
        %1518 = vmatprep.subr.mxu0 0.0
        %1519 = vmatpush1.xpose.msra.mxu0 %v1486
        %1520 = vmatprep.subr.mxu0 0.0
        %1521 = vmatpush2.xpose.msra.mxu0 0.0
        %1522 = vmatprep.subr.mxu0 0.0
        %1523 = vmatpush2.xpose.msra.mxu0 0.0
        %1524 = vmatprep.subr.mxu0 0.0
        %1525 = vmatpush2.xpose.msra.mxu0 0.0
        %1526 = vmatprep.subr.mxu0 0.0
        %1527 = vmatpush2.xpose.msra.mxu0 0.0
        %1528 = vmatprep.subr.mxu0 0.0
        %1529 = vmatpush2.xpose.msra.mxu0 0.0
        %1530 = vmatprep.subr.mxu0 0.0
        %1531 = vmatpush2.xpose.msra.mxu0 0.0
        %1532 = vmatprep.subr.mxu0 0.0
        %1533 = vmatpush2.xpose.msra.mxu0 0.0
        %1534 = vmatprep.subr.mxu0 0.0
        %1535 = vmatpush2.xpose.msra.mxu0 0.0
        %1536 = vmatprep.subr.mxu0 0.0
        %1537 = vmatpush2.xpose.msra.mxu0 0.0
        %1538 = vmatprep.subr.mxu0 0.0
        %1539 = vmatpush2.xpose.msra.mxu0 0.0
        %1540 = vmatprep.subr.mxu0 0.0
        %1541 = vmatpush2.xpose.msra.mxu0 0.0
        %1542 = vmatprep.subr.mxu0 0.0
        %1543 = vmatpush2.xpose.msra.mxu0 0.0
        %1544 = vmatprep.subr.mxu0 0.0
        %1545 = vmatpush2.xpose.msra.mxu0 0.0
        %1546 = vmatprep.subr.mxu0 0.0
        %1547 = vmatpush2.xpose.msra.mxu0 0.0
        %1548 = vmatprep.subr.mxu0 0.0
        %1549 = vmatpush2.xpose.msra.mxu0 0.0
        %1550 = vmatprep.subr.mxu0 0.0
        %1551 = vmatpush2.xpose.msra.mxu0 0.0
        %1552 = vmatprep.mubr.f32.mxu0 0.0
        %1553 = vmatmul.mubr.f32.gmra.mxu0 %v1483
        %v1554 = vpop.f32.mrf.mxu0
        %v1555 = vadd.f32 0.0, %v1554
        %v1556 = vpop.f32.mrf.mxu0
        %1557 = vdwg.mxu0
        %s1558 = scalar_lea.vmem [#allocation3], 8
        %v1559 = vld [vmem:[%s1558] sm:$0xff]
        %v1560 = vsel %vm1223, %v1555, -inf
        %1561 = vmax.xlane.f32.xlu0 %v1560
        %v1562 = vpop.xlane.xlu0 %1561
        %v1563 = vmax.f32 %v1559, %v1562
        %v1564 = vsub.f32 %v1559, %v1563
        %v1565 = vmul.f32 %v1564, 1.442695
        %v1566 = vpow.pop %v1565
        %1568 = vset.pattern.permute.xlu0 0
        %1569 = vperm.xlu0 %1568, %v1563
        %v1570 = vpop.permute.xlu0 %1569
        %v1572 = vsub.f32 %v1555, %v1570
        %v1573 = vmul.f32 %v1572, 1.442695
        %v1574 = vpow.pop %v1573
        %s1575 = scalar_lea.vmem [#allocation4], 8
        %v1576 = vld [vmem:[%s1575] sm:$0xff]
        %v1577 = vmul.f32 %v1566, %v1576
        %v1578 = vsel %vm1223, %v1574, 0.0
        %1579 = vadd.xlane.f32.xlu0 %v1578
        %v1580 = vpop.xlane.xlu0 %1579
        %v1581 = vadd.f32 %v1577, %v1580
        %1582 = vst.msk [vmem:[%s1575] sm:$0xff] %vm1245, %v1581
        %s1583 = scalar_lea.vmem [#allocation5], 8
        %v1584 = vld [vmem:[%s1583] sm:$0xff]
        %1586 = vset.pattern.permute.xlu0 0
        %1587 = vperm.xlu0 %1586, %v1566
        %v1588 = vpop.permute.xlu0 %1587
        %v1590 = vmul.f32 %v1588, %v1584
        %v1592 = vsel %vm1223, %v1574, 0
        %1594 = vmatprep.subr.mxu0 0.0
        %1595 = vmatpush1.msra.mxu0 0.0
        %1596 = vmatprep.subr.mxu0 0.0
        %1597 = vmatpush1.msra.mxu0 0.0
        %1598 = vmatprep.subr.mxu0 0.0
        %1599 = vmatpush1.msra.mxu0 0.0
        %1600 = vmatprep.subr.mxu0 0.0
        %1601 = vmatpush1.msra.mxu0 0.0
        %1602 = vmatprep.subr.mxu0 0.0
        %1603 = vmatpush1.msra.mxu0 0.0
        %1604 = vmatprep.subr.mxu0 0.0
        %1605 = vmatpush1.msra.mxu0 0.0
        %1606 = vmatprep.subr.mxu0 0.0
        %1607 = vmatpush1.msra.mxu0 0.0
        %1608 = vmatprep.subr.mxu0 0.0
        %1609 = vmatpush1.msra.mxu0 0.0
        %1610 = vmatprep.subr.mxu0 0.0
        %1611 = vmatpush1.msra.mxu0 0.0
        %1612 = vmatprep.subr.mxu0 0.0
        %1613 = vmatpush1.msra.mxu0 0.0
        %1614 = vmatprep.subr.mxu0 0.0
        %1615 = vmatpush1.msra.mxu0 0.0
        %1616 = vmatprep.subr.mxu0 0.0
        %1617 = vmatpush1.msra.mxu0 0.0
        %1618 = vmatprep.subr.mxu0 0.0
        %1619 = vmatpush1.msra.mxu0 0.0
        %1620 = vmatprep.subr.mxu0 0.0
        %1621 = vmatpush1.msra.mxu0 0.0
        %1622 = vmatprep.subr.mxu0 0.0
        %1623 = vmatpush1.msra.mxu0 0.0
        %1624 = vmatprep.subr.mxu0 0.0
        %1625 = vmatpush1.msra.mxu0 %v1477
        %1626 = vmatprep.subr.mxu0 0.0
        %1627 = vmatpush2.msra.mxu0 0.0
        %1628 = vmatprep.subr.mxu0 0.0
        %1629 = vmatpush2.msra.mxu0 0.0
        %1630 = vmatprep.subr.mxu0 0.0
        %1631 = vmatpush2.msra.mxu0 0.0
        %1632 = vmatprep.subr.mxu0 0.0
        %1633 = vmatpush2.msra.mxu0 0.0
        %1634 = vmatprep.subr.mxu0 0.0
        %1635 = vmatpush2.msra.mxu0 0.0
        %1636 = vmatprep.subr.mxu0 0.0
        %1637 = vmatpush2.msra.mxu0 0.0
        %1638 = vmatprep.subr.mxu0 0.0
        %1639 = vmatpush2.msra.mxu0 0.0
        %1640 = vmatprep.subr.mxu0 0.0
        %1641 = vmatpush2.msra.mxu0 0.0
        %1642 = vmatprep.subr.mxu0 0.0
        %1643 = vmatpush2.msra.mxu0 0.0
        %1644 = vmatprep.subr.mxu0 0.0
        %1645 = vmatpush2.msra.mxu0 0.0
        %1646 = vmatprep.subr.mxu0 0.0
        %1647 = vmatpush2.msra.mxu0 0.0
        %1648 = vmatprep.subr.mxu0 0.0
        %1649 = vmatpush2.msra.mxu0 0.0
        %1650 = vmatprep.subr.mxu0 0.0
        %1651 = vmatpush2.msra.mxu0 0.0
        %1652 = vmatprep.subr.mxu0 0.0
        %1653 = vmatpush2.msra.mxu0 0.0
        %1654 = vmatprep.subr.mxu0 0.0
        %1655 = vmatpush2.msra.mxu0 0.0
        %1656 = vmatprep.subr.mxu0 0.0
        %1657 = vmatpush2.msra.mxu0 0.0
        %1658 = vmatprep.mubr.f32.mxu0 0.0
        %1659 = vmatmul.mubr.f32.gmra.mxu0 %v1592
        %v1660 = vpop.f32.mrf.mxu0
        %v1661 = vadd.f32 0.0, %v1660
        %v1662 = vpop.f32.mrf.mxu0
        %1663 = vdwg.mxu0
        %v1664 = vadd.f32 %v1590, %v1661
        %1665 = vst.msk [vmem:[%s1583] sm:$0xff] %vm1145, %v1664
        %1666 = vst.msk [vmem:[%s1558] sm:$0xff] %vm1245, %v1563
        %s1667 = scalar_lea.vmem %s3, 64
        %v1668 = vld [vmem:[%s1667] sm:$0xff]
        %v1669 = vld [vmem:[%s1667 + $0x8] sm:$0xff]
        %v1670 = vld [vmem:[%s1667 + $0x10] sm:$0xff]
        %v1671 = vld [vmem:[%s1667 + $0x18] sm:$0xff]
        %1672 = vmatprep.subr.mxu0 0.0
        %1673 = vmatpush1.msra.mxu0 0.0
        %1674 = vmatprep.subr.mxu0 0.0
        %1675 = vmatpush1.msra.mxu0 0.0
        %1676 = vmatprep.subr.mxu0 0.0
        %1677 = vmatpush1.msra.mxu0 0.0
        %1678 = vmatprep.subr.mxu0 0.0
        %1679 = vmatpush1.msra.mxu0 0.0
        %1680 = vmatprep.subr.mxu0 0.0
        %1681 = vmatpush1.msra.mxu0 0.0
        %1682 = vmatprep.subr.mxu0 0.0
        %1683 = vmatpush1.msra.mxu0 0.0
        %1684 = vmatprep.subr.mxu0 0.0
        %1685 = vmatpush1.msra.mxu0 0.0
        %1686 = vmatprep.subr.mxu0 0.0
        %1687 = vmatpush1.msra.mxu0 0.0
        %1688 = vmatprep.subr.mxu0 0.0
        %1689 = vmatpush1.msra.mxu0 0.0
        %1690 = vmatprep.subr.mxu0 0.0
        %1691 = vmatpush1.msra.mxu0 0.0
        %1692 = vmatprep.subr.mxu0 0.0
        %1693 = vmatpush1.msra.mxu0 0.0
        %1694 = vmatprep.subr.mxu0 0.0
        %1695 = vmatpush1.msra.mxu0 0.0
        %1696 = vmatprep.subr.mxu0 0.0
        %1697 = vmatpush1.msra.mxu0 %v1671
        %1698 = vmatprep.subr.mxu0 0.0
        %1699 = vmatpush1.msra.mxu0 %v1670
        %1700 = vmatprep.subr.mxu0 0.0
        %1701 = vmatpush1.msra.mxu0 %v1669
        %1702 = vmatprep.subr.mxu0 0.0
        %1703 = vmatpush1.msra.mxu0 %v1668
        %1704 = vmatprep.subr.mxu0 0.0
        %1705 = vmatpush2.msra.mxu0 0.0
        %1706 = vmatprep.subr.mxu0 0.0
        %1707 = vmatpush2.msra.mxu0 0.0
        %1708 = vmatprep.subr.mxu0 0.0
        %1709 = vmatpush2.msra.mxu0 0.0
        %1710 = vmatprep.subr.mxu0 0.0
        %1711 = vmatpush2.msra.mxu0 0.0
        %1712 = vmatprep.subr.mxu0 0.0
        %1713 = vmatpush2.msra.mxu0 0.0
        %1714 = vmatprep.subr.mxu0 0.0
        %1715 = vmatpush2.msra.mxu0 0.0
        %1716 = vmatprep.subr.mxu0 0.0
        %1717 = vmatpush2.msra.mxu0 0.0
        %1718 = vmatprep.subr.mxu0 0.0
        %1719 = vmatpush2.msra.mxu0 0.0
        %1720 = vmatprep.subr.mxu0 0.0
        %1721 = vmatpush2.msra.mxu0 0.0
        %1722 = vmatprep.subr.mxu0 0.0
        %1723 = vmatpush2.msra.mxu0 0.0
        %1724 = vmatprep.subr.mxu0 0.0
        %1725 = vmatpush2.msra.mxu0 0.0
        %1726 = vmatprep.subr.mxu0 0.0
        %1727 = vmatpush2.msra.mxu0 0.0
        %1728 = vmatprep.subr.mxu0 0.0
        %1729 = vmatpush2.msra.mxu0 0.0
        %1730 = vmatprep.subr.mxu0 0.0
        %1731 = vmatpush2.msra.mxu0 0.0
        %1732 = vmatprep.subr.mxu0 0.0
        %1733 = vmatpush2.msra.mxu0 0.0
        %1734 = vmatprep.subr.mxu0 0.0
        %1735 = vmatpush2.msra.mxu0 0.0
        %1736 = vmatprep.mubr.f32.mxu0 0.0
        %1737 = vmatmul.mubr.f32.gmra.mxu0 %v998
        %v1738 = vpop.f32.mrf.mxu0
        %v1739 = vadd.f32 0.0, %v1738
        %v1740 = vpop.f32.mrf.mxu0
        %1741 = vdwg.mxu0
        %s1742 = scalar_lea.vmem %s4, 64
        %v1743 = vld [vmem:[%s1742] sm:$0xff]
        %v1744 = vld [vmem:[%s1742 + $0x8] sm:$0xff]
        %v1745 = vld [vmem:[%s1742 + $0x10] sm:$0xff]
        %v1746 = vld [vmem:[%s1742 + $0x18] sm:$0xff]
        %1747 = vmatprep.subr.mxu0 0.0
        %1748 = vmatpush1.msra.mxu0 0.0
        %1749 = vmatprep.subr.mxu0 0.0
        %1750 = vmatpush1.msra.mxu0 0.0
        %1751 = vmatprep.subr.mxu0 0.0
        %1752 = vmatpush1.msra.mxu0 0.0
        %1753 = vmatprep.subr.mxu0 0.0
        %1754 = vmatpush1.msra.mxu0 0.0
        %1755 = vmatprep.subr.mxu0 0.0
        %1756 = vmatpush1.msra.mxu0 0.0
        %1757 = vmatprep.subr.mxu0 0.0
        %1758 = vmatpush1.msra.mxu0 0.0
        %1759 = vmatprep.subr.mxu0 0.0
        %1760 = vmatpush1.msra.mxu0 0.0
        %1761 = vmatprep.subr.mxu0 0.0
        %1762 = vmatpush1.msra.mxu0 0.0
        %1763 = vmatprep.subr.mxu0 0.0
        %1764 = vmatpush1.msra.mxu0 0.0
        %1765 = vmatprep.subr.mxu0 0.0
        %1766 = vmatpush1.msra.mxu0 0.0
        %1767 = vmatprep.subr.mxu0 0.0
        %1768 = vmatpush1.msra.mxu0 0.0
        %1769 = vmatprep.subr.mxu0 0.0
        %1770 = vmatpush1.msra.mxu0 0.0
        %1771 = vmatprep.subr.mxu0 0.0
        %1772 = vmatpush1.msra.mxu0 %v1746
        %1773 = vmatprep.subr.mxu0 0.0
        %1774 = vmatpush1.msra.mxu0 %v1745
        %1775 = vmatprep.subr.mxu0 0.0
        %1776 = vmatpush1.msra.mxu0 %v1744
        %1777 = vmatprep.subr.mxu0 0.0
        %1778 = vmatpush1.msra.mxu0 %v1743
        %1779 = vmatprep.subr.mxu0 0.0
        %1780 = vmatpush2.msra.mxu0 0.0
        %1781 = vmatprep.subr.mxu0 0.0
        %1782 = vmatpush2.msra.mxu0 0.0
        %1783 = vmatprep.subr.mxu0 0.0
        %1784 = vmatpush2.msra.mxu0 0.0
        %1785 = vmatprep.subr.mxu0 0.0
        %1786 = vmatpush2.msra.mxu0 0.0
        %1787 = vmatprep.subr.mxu0 0.0
        %1788 = vmatpush2.msra.mxu0 0.0
        %1789 = vmatprep.subr.mxu0 0.0
        %1790 = vmatpush2.msra.mxu0 0.0
        %1791 = vmatprep.subr.mxu0 0.0
        %1792 = vmatpush2.msra.mxu0 0.0
        %1793 = vmatprep.subr.mxu0 0.0
        %1794 = vmatpush2.msra.mxu0 0.0
        %1795 = vmatprep.subr.mxu0 0.0
        %1796 = vmatpush2.msra.mxu0 0.0
        %1797 = vmatprep.subr.mxu0 0.0
        %1798 = vmatpush2.msra.mxu0 0.0
        %1799 = vmatprep.subr.mxu0 0.0
        %1800 = vmatpush2.msra.mxu0 0.0
        %1801 = vmatprep.subr.mxu0 0.0
        %1802 = vmatpush2.msra.mxu0 0.0
        %1803 = vmatprep.subr.mxu0 0.0
        %1804 = vmatpush2.msra.mxu0 0.0
        %1805 = vmatprep.subr.mxu0 0.0
        %1806 = vmatpush2.msra.mxu0 0.0
        %1807 = vmatprep.subr.mxu0 0.0
        %1808 = vmatpush2.msra.mxu0 0.0
        %1809 = vmatprep.subr.mxu0 0.0
        %1810 = vmatpush2.msra.mxu0 0.0
        %1811 = vmatprep.mubr.f32.mxu0 0.0
        %1812 = vmatmul.mubr.f32.gmra.mxu0 %v998
        %v1813 = vpop.f32.mrf.mxu0
        %v1814 = vadd.f32 0.0, %v1813
        %v1815 = vpop.f32.mrf.mxu0
        %1816 = vdwg.mxu0
        %s1817 = scalar_lea.vmem [#allocation2], 16
        %v1818 = vld [vmem:[%s1817] sm:$0xff]
        %v1820 = vsel %vm1145, %v1818, 0
        %v1823 = vsel %vm1145, %v1739, 0
        %1825 = vmatprep.subr.mxu0 0.0
        %1826 = vmatpush1.xpose.msra.mxu0 0.0
        %1827 = vmatprep.subr.mxu0 0.0
        %1828 = vmatpush1.xpose.msra.mxu0 0.0
        %1829 = vmatprep.subr.mxu0 0.0
        %1830 = vmatpush1.xpose.msra.mxu0 0.0
        %1831 = vmatprep.subr.mxu0 0.0
        %1832 = vmatpush1.xpose.msra.mxu0 0.0
        %1833 = vmatprep.subr.mxu0 0.0
        %1834 = vmatpush1.xpose.msra.mxu0 0.0
        %1835 = vmatprep.subr.mxu0 0.0
        %1836 = vmatpush1.xpose.msra.mxu0 0.0
        %1837 = vmatprep.subr.mxu0 0.0
        %1838 = vmatpush1.xpose.msra.mxu0 0.0
        %1839 = vmatprep.subr.mxu0 0.0
        %1840 = vmatpush1.xpose.msra.mxu0 0.0
        %1841 = vmatprep.subr.mxu0 0.0
        %1842 = vmatpush1.xpose.msra.mxu0 0.0
        %1843 = vmatprep.subr.mxu0 0.0
        %1844 = vmatpush1.xpose.msra.mxu0 0.0
        %1845 = vmatprep.subr.mxu0 0.0
        %1846 = vmatpush1.xpose.msra.mxu0 0.0
        %1847 = vmatprep.subr.mxu0 0.0
        %1848 = vmatpush1.xpose.msra.mxu0 0.0
        %1849 = vmatprep.subr.mxu0 0.0
        %1850 = vmatpush1.xpose.msra.mxu0 0.0
        %1851 = vmatprep.subr.mxu0 0.0
        %1852 = vmatpush1.xpose.msra.mxu0 0.0
        %1853 = vmatprep.subr.mxu0 0.0
        %1854 = vmatpush1.xpose.msra.mxu0 0.0
        %1855 = vmatprep.subr.mxu0 0.0
        %1856 = vmatpush1.xpose.msra.mxu0 %v1823
        %1857 = vmatprep.subr.mxu0 0.0
        %1858 = vmatpush2.xpose.msra.mxu0 0.0
        %1859 = vmatprep.subr.mxu0 0.0
        %1860 = vmatpush2.xpose.msra.mxu0 0.0
        %1861 = vmatprep.subr.mxu0 0.0
        %1862 = vmatpush2.xpose.msra.mxu0 0.0
        %1863 = vmatprep.subr.mxu0 0.0
        %1864 = vmatpush2.xpose.msra.mxu0 0.0
        %1865 = vmatprep.subr.mxu0 0.0
        %1866 = vmatpush2.xpose.msra.mxu0 0.0
        %1867 = vmatprep.subr.mxu0 0.0
        %1868 = vmatpush2.xpose.msra.mxu0 0.0
        %1869 = vmatprep.subr.mxu0 0.0
        %1870 = vmatpush2.xpose.msra.mxu0 0.0
        %1871 = vmatprep.subr.mxu0 0.0
        %1872 = vmatpush2.xpose.msra.mxu0 0.0
        %1873 = vmatprep.subr.mxu0 0.0
        %1874 = vmatpush2.xpose.msra.mxu0 0.0
        %1875 = vmatprep.subr.mxu0 0.0
        %1876 = vmatpush2.xpose.msra.mxu0 0.0
        %1877 = vmatprep.subr.mxu0 0.0
        %1878 = vmatpush2.xpose.msra.mxu0 0.0
        %1879 = vmatprep.subr.mxu0 0.0
        %1880 = vmatpush2.xpose.msra.mxu0 0.0
        %1881 = vmatprep.subr.mxu0 0.0
        %1882 = vmatpush2.xpose.msra.mxu0 0.0
        %1883 = vmatprep.subr.mxu0 0.0
        %1884 = vmatpush2.xpose.msra.mxu0 0.0
        %1885 = vmatprep.subr.mxu0 0.0
        %1886 = vmatpush2.xpose.msra.mxu0 0.0
        %1887 = vmatprep.subr.mxu0 0.0
        %1888 = vmatpush2.xpose.msra.mxu0 0.0
        %1889 = vmatprep.mubr.f32.mxu0 0.0
        %1890 = vmatmul.mubr.f32.gmra.mxu0 %v1820
        %v1891 = vpop.f32.mrf.mxu0
        %v1892 = vadd.f32 0.0, %v1891
        %v1893 = vpop.f32.mrf.mxu0
        %1894 = vdwg.mxu0
        %s1895 = scalar_lea.vmem [#allocation3], 16
        %v1896 = vld [vmem:[%s1895] sm:$0xff]
        %v1897 = vsel %vm1223, %v1892, -inf
        %1898 = vmax.xlane.f32.xlu0 %v1897
        %v1899 = vpop.xlane.xlu0 %1898
        %v1900 = vmax.f32 %v1896, %v1899
        %v1901 = vsub.f32 %v1896, %v1900
        %v1902 = vmul.f32 %v1901, 1.442695
        %v1903 = vpow.pop %v1902
        %1905 = vset.pattern.permute.xlu0 0
        %1906 = vperm.xlu0 %1905, %v1900
        %v1907 = vpop.permute.xlu0 %1906
        %v1909 = vsub.f32 %v1892, %v1907
        %v1910 = vmul.f32 %v1909, 1.442695
        %v1911 = vpow.pop %v1910
        %s1912 = scalar_lea.vmem [#allocation4], 16
        %v1913 = vld [vmem:[%s1912] sm:$0xff]
        %v1914 = vmul.f32 %v1903, %v1913
        %v1915 = vsel %vm1223, %v1911, 0.0
        %1916 = vadd.xlane.f32.xlu0 %v1915
        %v1917 = vpop.xlane.xlu0 %1916
        %v1918 = vadd.f32 %v1914, %v1917
        %1919 = vst.msk [vmem:[%s1912] sm:$0xff] %vm1245, %v1918
        %s1920 = scalar_lea.vmem [#allocation5], 16
        %v1921 = vld [vmem:[%s1920] sm:$0xff]
        %1923 = vset.pattern.permute.xlu0 0
        %1924 = vperm.xlu0 %1923, %v1903
        %v1925 = vpop.permute.xlu0 %1924
        %v1927 = vmul.f32 %v1925, %v1921
        %v1929 = vsel %vm1223, %v1911, 0
        %1931 = vmatprep.subr.mxu0 0.0
        %1932 = vmatpush1.msra.mxu0 0.0
        %1933 = vmatprep.subr.mxu0 0.0
        %1934 = vmatpush1.msra.mxu0 0.0
        %1935 = vmatprep.subr.mxu0 0.0
        %1936 = vmatpush1.msra.mxu0 0.0
        %1937 = vmatprep.subr.mxu0 0.0
        %1938 = vmatpush1.msra.mxu0 0.0
        %1939 = vmatprep.subr.mxu0 0.0
        %1940 = vmatpush1.msra.mxu0 0.0
        %1941 = vmatprep.subr.mxu0 0.0
        %1942 = vmatpush1.msra.mxu0 0.0
        %1943 = vmatprep.subr.mxu0 0.0
        %1944 = vmatpush1.msra.mxu0 0.0
        %1945 = vmatprep.subr.mxu0 0.0
        %1946 = vmatpush1.msra.mxu0 0.0
        %1947 = vmatprep.subr.mxu0 0.0
        %1948 = vmatpush1.msra.mxu0 0.0
        %1949 = vmatprep.subr.mxu0 0.0
        %1950 = vmatpush1.msra.mxu0 0.0
        %1951 = vmatprep.subr.mxu0 0.0
        %1952 = vmatpush1.msra.mxu0 0.0
        %1953 = vmatprep.subr.mxu0 0.0
        %1954 = vmatpush1.msra.mxu0 0.0
        %1955 = vmatprep.subr.mxu0 0.0
        %1956 = vmatpush1.msra.mxu0 0.0
        %1957 = vmatprep.subr.mxu0 0.0
        %1958 = vmatpush1.msra.mxu0 0.0
        %1959 = vmatprep.subr.mxu0 0.0
        %1960 = vmatpush1.msra.mxu0 0.0
        %1961 = vmatprep.subr.mxu0 0.0
        %1962 = vmatpush1.msra.mxu0 %v1814
        %1963 = vmatprep.subr.mxu0 0.0
        %1964 = vmatpush2.msra.mxu0 0.0
        %1965 = vmatprep.subr.mxu0 0.0
        %1966 = vmatpush2.msra.mxu0 0.0
        %1967 = vmatprep.subr.mxu0 0.0
        %1968 = vmatpush2.msra.mxu0 0.0
        %1969 = vmatprep.subr.mxu0 0.0
        %1970 = vmatpush2.msra.mxu0 0.0
        %1971 = vmatprep.subr.mxu0 0.0
        %1972 = vmatpush2.msra.mxu0 0.0
        %1973 = vmatprep.subr.mxu0 0.0
        %1974 = vmatpush2.msra.mxu0 0.0
        %1975 = vmatprep.subr.mxu0 0.0
        %1976 = vmatpush2.msra.mxu0 0.0
        %1977 = vmatprep.subr.mxu0 0.0
        %1978 = vmatpush2.msra.mxu0 0.0
        %1979 = vmatprep.subr.mxu0 0.0
        %1980 = vmatpush2.msra.mxu0 0.0
        %1981 = vmatprep.subr.mxu0 0.0
        %1982 = vmatpush2.msra.mxu0 0.0
        %1983 = vmatprep.subr.mxu0 0.0
        %1984 = vmatpush2.msra.mxu0 0.0
        %1985 = vmatprep.subr.mxu0 0.0
        %1986 = vmatpush2.msra.mxu0 0.0
        %1987 = vmatprep.subr.mxu0 0.0
        %1988 = vmatpush2.msra.mxu0 0.0
        %1989 = vmatprep.subr.mxu0 0.0
        %1990 = vmatpush2.msra.mxu0 0.0
        %1991 = vmatprep.subr.mxu0 0.0
        %1992 = vmatpush2.msra.mxu0 0.0
        %1993 = vmatprep.subr.mxu0 0.0
        %1994 = vmatpush2.msra.mxu0 0.0
        %1995 = vmatprep.mubr.f32.mxu0 0.0
        %1996 = vmatmul.mubr.f32.gmra.mxu0 %v1929
        %v1997 = vpop.f32.mrf.mxu0
        %v1998 = vadd.f32 0.0, %v1997
        %v1999 = vpop.f32.mrf.mxu0
        %2000 = vdwg.mxu0
        %v2001 = vadd.f32 %v1927, %v1998
        %2002 = vst.msk [vmem:[%s1920] sm:$0xff] %vm1145, %v2001
        %2003 = vst.msk [vmem:[%s1895] sm:$0xff] %vm1245, %v1900
        %s2004 = scalar_lea.vmem %s3, 96
        %v2005 = vld [vmem:[%s2004] sm:$0xff]
        %v2006 = vld [vmem:[%s2004 + $0x8] sm:$0xff]
        %v2007 = vld [vmem:[%s2004 + $0x10] sm:$0xff]
        %v2008 = vld [vmem:[%s2004 + $0x18] sm:$0xff]
        %2009 = vmatprep.subr.mxu0 0.0
        %2010 = vmatpush1.msra.mxu0 0.0
        %2011 = vmatprep.subr.mxu0 0.0
        %2012 = vmatpush1.msra.mxu0 0.0
        %2013 = vmatprep.subr.mxu0 0.0
        %2014 = vmatpush1.msra.mxu0 0.0
        %2015 = vmatprep.subr.mxu0 0.0
        %2016 = vmatpush1.msra.mxu0 0.0
        %2017 = vmatprep.subr.mxu0 0.0
        %2018 = vmatpush1.msra.mxu0 0.0
        %2019 = vmatprep.subr.mxu0 0.0
        %2020 = vmatpush1.msra.mxu0 0.0
        %2021 = vmatprep.subr.mxu0 0.0
        %2022 = vmatpush1.msra.mxu0 0.0
        %2023 = vmatprep.subr.mxu0 0.0
        %2024 = vmatpush1.msra.mxu0 0.0
        %2025 = vmatprep.subr.mxu0 0.0
        %2026 = vmatpush1.msra.mxu0 0.0
        %2027 = vmatprep.subr.mxu0 0.0
        %2028 = vmatpush1.msra.mxu0 0.0
        %2029 = vmatprep.subr.mxu0 0.0
        %2030 = vmatpush1.msra.mxu0 0.0
        %2031 = vmatprep.subr.mxu0 0.0
        %2032 = vmatpush1.msra.mxu0 0.0
        %2033 = vmatprep.subr.mxu0 0.0
        %2034 = vmatpush1.msra.mxu0 %v2008
        %2035 = vmatprep.subr.mxu0 0.0
        %2036 = vmatpush1.msra.mxu0 %v2007
        %2037 = vmatprep.subr.mxu0 0.0
        %2038 = vmatpush1.msra.mxu0 %v2006
        %2039 = vmatprep.subr.mxu0 0.0
        %2040 = vmatpush1.msra.mxu0 %v2005
        %2041 = vmatprep.subr.mxu0 0.0
        %2042 = vmatpush2.msra.mxu0 0.0
        %2043 = vmatprep.subr.mxu0 0.0
        %2044 = vmatpush2.msra.mxu0 0.0
        %2045 = vmatprep.subr.mxu0 0.0
        %2046 = vmatpush2.msra.mxu0 0.0
        %2047 = vmatprep.subr.mxu0 0.0
        %2048 = vmatpush2.msra.mxu0 0.0
        %2049 = vmatprep.subr.mxu0 0.0
        %2050 = vmatpush2.msra.mxu0 0.0
        %2051 = vmatprep.subr.mxu0 0.0
        %2052 = vmatpush2.msra.mxu0 0.0
        %2053 = vmatprep.subr.mxu0 0.0
        %2054 = vmatpush2.msra.mxu0 0.0
        %2055 = vmatprep.subr.mxu0 0.0
        %2056 = vmatpush2.msra.mxu0 0.0
        %2057 = vmatprep.subr.mxu0 0.0
        %2058 = vmatpush2.msra.mxu0 0.0
        %2059 = vmatprep.subr.mxu0 0.0
        %2060 = vmatpush2.msra.mxu0 0.0
        %2061 = vmatprep.subr.mxu0 0.0
        %2062 = vmatpush2.msra.mxu0 0.0
        %2063 = vmatprep.subr.mxu0 0.0
        %2064 = vmatpush2.msra.mxu0 0.0
        %2065 = vmatprep.subr.mxu0 0.0
        %2066 = vmatpush2.msra.mxu0 0.0
        %2067 = vmatprep.subr.mxu0 0.0
        %2068 = vmatpush2.msra.mxu0 0.0
        %2069 = vmatprep.subr.mxu0 0.0
        %2070 = vmatpush2.msra.mxu0 0.0
        %2071 = vmatprep.subr.mxu0 0.0
        %2072 = vmatpush2.msra.mxu0 0.0
        %2073 = vmatprep.mubr.f32.mxu0 0.0
        %2074 = vmatmul.mubr.f32.gmra.mxu0 %v998
        %v2075 = vpop.f32.mrf.mxu0
        %v2076 = vadd.f32 0.0, %v2075
        %v2077 = vpop.f32.mrf.mxu0
        %2078 = vdwg.mxu0
        %s2079 = scalar_lea.vmem %s4, 96
        %v2080 = vld [vmem:[%s2079] sm:$0xff]
        %v2081 = vld [vmem:[%s2079 + $0x8] sm:$0xff]
        %v2082 = vld [vmem:[%s2079 + $0x10] sm:$0xff]
        %v2083 = vld [vmem:[%s2079 + $0x18] sm:$0xff]
        %2084 = vmatprep.subr.mxu0 0.0
        %2085 = vmatpush1.msra.mxu0 0.0
        %2086 = vmatprep.subr.mxu0 0.0
        %2087 = vmatpush1.msra.mxu0 0.0
        %2088 = vmatprep.subr.mxu0 0.0
        %2089 = vmatpush1.msra.mxu0 0.0
        %2090 = vmatprep.subr.mxu0 0.0
        %2091 = vmatpush1.msra.mxu0 0.0
        %2092 = vmatprep.subr.mxu0 0.0
        %2093 = vmatpush1.msra.mxu0 0.0
        %2094 = vmatprep.subr.mxu0 0.0
        %2095 = vmatpush1.msra.mxu0 0.0
        %2096 = vmatprep.subr.mxu0 0.0
        %2097 = vmatpush1.msra.mxu0 0.0
        %2098 = vmatprep.subr.mxu0 0.0
        %2099 = vmatpush1.msra.mxu0 0.0
        %2100 = vmatprep.subr.mxu0 0.0
        %2101 = vmatpush1.msra.mxu0 0.0
        %2102 = vmatprep.subr.mxu0 0.0
        %2103 = vmatpush1.msra.mxu0 0.0
        %2104 = vmatprep.subr.mxu0 0.0
        %2105 = vmatpush1.msra.mxu0 0.0
        %2106 = vmatprep.subr.mxu0 0.0
        %2107 = vmatpush1.msra.mxu0 0.0
        %2108 = vmatprep.subr.mxu0 0.0
        %2109 = vmatpush1.msra.mxu0 %v2083
        %2110 = vmatprep.subr.mxu0 0.0
        %2111 = vmatpush1.msra.mxu0 %v2082
        %2112 = vmatprep.subr.mxu0 0.0
        %2113 = vmatpush1.msra.mxu0 %v2081
        %2114 = vmatprep.subr.mxu0 0.0
        %2115 = vmatpush1.msra.mxu0 %v2080
        %2116 = vmatprep.subr.mxu0 0.0
        %2117 = vmatpush2.msra.mxu0 0.0
        %2118 = vmatprep.subr.mxu0 0.0
        %2119 = vmatpush2.msra.mxu0 0.0
        %2120 = vmatprep.subr.mxu0 0.0
        %2121 = vmatpush2.msra.mxu0 0.0
        %2122 = vmatprep.subr.mxu0 0.0
        %2123 = vmatpush2.msra.mxu0 0.0
        %2124 = vmatprep.subr.mxu0 0.0
        %2125 = vmatpush2.msra.mxu0 0.0
        %2126 = vmatprep.subr.mxu0 0.0
        %2127 = vmatpush2.msra.mxu0 0.0
        %2128 = vmatprep.subr.mxu0 0.0
        %2129 = vmatpush2.msra.mxu0 0.0
        %2130 = vmatprep.subr.mxu0 0.0
        %2131 = vmatpush2.msra.mxu0 0.0
        %2132 = vmatprep.subr.mxu0 0.0
        %2133 = vmatpush2.msra.mxu0 0.0
        %2134 = vmatprep.subr.mxu0 0.0
        %2135 = vmatpush2.msra.mxu0 0.0
        %2136 = vmatprep.subr.mxu0 0.0
        %2137 = vmatpush2.msra.mxu0 0.0
        %2138 = vmatprep.subr.mxu0 0.0
        %2139 = vmatpush2.msra.mxu0 0.0
        %2140 = vmatprep.subr.mxu0 0.0
        %2141 = vmatpush2.msra.mxu0 0.0
        %2142 = vmatprep.subr.mxu0 0.0
        %2143 = vmatpush2.msra.mxu0 0.0
        %2144 = vmatprep.subr.mxu0 0.0
        %2145 = vmatpush2.msra.mxu0 0.0
        %2146 = vmatprep.subr.mxu0 0.0
        %2147 = vmatpush2.msra.mxu0 0.0
        %2148 = vmatprep.mubr.f32.mxu0 0.0
        %2149 = vmatmul.mubr.f32.gmra.mxu0 %v998
        %v2150 = vpop.f32.mrf.mxu0
        %v2151 = vadd.f32 0.0, %v2150
        %v2152 = vpop.f32.mrf.mxu0
        %2153 = vdwg.mxu0
        %s2154 = scalar_lea.vmem [#allocation2], 24
        %v2155 = vld [vmem:[%s2154] sm:$0xff]
        %v2157 = vsel %vm1145, %v2155, 0
        %v2160 = vsel %vm1145, %v2076, 0
        %2162 = vmatprep.subr.mxu0 0.0
        %2163 = vmatpush1.xpose.msra.mxu0 0.0
        %2164 = vmatprep.subr.mxu0 0.0
        %2165 = vmatpush1.xpose.msra.mxu0 0.0
        %2166 = vmatprep.subr.mxu0 0.0
        %2167 = vmatpush1.xpose.msra.mxu0 0.0
        %2168 = vmatprep.subr.mxu0 0.0
        %2169 = vmatpush1.xpose.msra.mxu0 0.0
        %2170 = vmatprep.subr.mxu0 0.0
        %2171 = vmatpush1.xpose.msra.mxu0 0.0
        %2172 = vmatprep.subr.mxu0 0.0
        %2173 = vmatpush1.xpose.msra.mxu0 0.0
        %2174 = vmatprep.subr.mxu0 0.0
        %2175 = vmatpush1.xpose.msra.mxu0 0.0
        %2176 = vmatprep.subr.mxu0 0.0
        %2177 = vmatpush1.xpose.msra.mxu0 0.0
        %2178 = vmatprep.subr.mxu0 0.0
        %2179 = vmatpush1.xpose.msra.mxu0 0.0
        %2180 = vmatprep.subr.mxu0 0.0
        %2181 = vmatpush1.xpose.msra.mxu0 0.0
        %2182 = vmatprep.subr.mxu0 0.0
        %2183 = vmatpush1.xpose.msra.mxu0 0.0
        %2184 = vmatprep.subr.mxu0 0.0
        %2185 = vmatpush1.xpose.msra.mxu0 0.0
        %2186 = vmatprep.subr.mxu0 0.0
        %2187 = vmatpush1.xpose.msra.mxu0 0.0
        %2188 = vmatprep.subr.mxu0 0.0
        %2189 = vmatpush1.xpose.msra.mxu0 0.0
        %2190 = vmatprep.subr.mxu0 0.0
        %2191 = vmatpush1.xpose.msra.mxu0 0.0
        %2192 = vmatprep.subr.mxu0 0.0
        %2193 = vmatpush1.xpose.msra.mxu0 %v2160
        %2194 = vmatprep.subr.mxu0 0.0
        %2195 = vmatpush2.xpose.msra.mxu0 0.0
        %2196 = vmatprep.subr.mxu0 0.0
        %2197 = vmatpush2.xpose.msra.mxu0 0.0
        %2198 = vmatprep.subr.mxu0 0.0
        %2199 = vmatpush2.xpose.msra.mxu0 0.0
        %2200 = vmatprep.subr.mxu0 0.0
        %2201 = vmatpush2.xpose.msra.mxu0 0.0
        %2202 = vmatprep.subr.mxu0 0.0
        %2203 = vmatpush2.xpose.msra.mxu0 0.0
        %2204 = vmatprep.subr.mxu0 0.0
        %2205 = vmatpush2.xpose.msra.mxu0 0.0
        %2206 = vmatprep.subr.mxu0 0.0
        %2207 = vmatpush2.xpose.msra.mxu0 0.0
        %2208 = vmatprep.subr.mxu0 0.0
        %2209 = vmatpush2.xpose.msra.mxu0 0.0
        %2210 = vmatprep.subr.mxu0 0.0
        %2211 = vmatpush2.xpose.msra.mxu0 0.0
        %2212 = vmatprep.subr.mxu0 0.0
        %2213 = vmatpush2.xpose.msra.mxu0 0.0
        %2214 = vmatprep.subr.mxu0 0.0
        %2215 = vmatpush2.xpose.msra.mxu0 0.0
        %2216 = vmatprep.subr.mxu0 0.0
        %2217 = vmatpush2.xpose.msra.mxu0 0.0
        %2218 = vmatprep.subr.mxu0 0.0
        %2219 = vmatpush2.xpose.msra.mxu0 0.0
        %2220 = vmatprep.subr.mxu0 0.0
        %2221 = vmatpush2.xpose.msra.mxu0 0.0
        %2222 = vmatprep.subr.mxu0 0.0
        %2223 = vmatpush2.xpose.msra.mxu0 0.0
        %2224 = vmatprep.subr.mxu0 0.0
        %2225 = vmatpush2.xpose.msra.mxu0 0.0
        %2226 = vmatprep.mubr.f32.mxu0 0.0
        %2227 = vmatmul.mubr.f32.gmra.mxu0 %v2157
        %v2228 = vpop.f32.mrf.mxu0
        %v2229 = vadd.f32 0.0, %v2228
        %v2230 = vpop.f32.mrf.mxu0
        %2231 = vdwg.mxu0
        %s2232 = scalar_lea.vmem [#allocation3], 24
        %v2233 = vld [vmem:[%s2232] sm:$0xff]
        %v2234 = vsel %vm1223, %v2229, -inf
        %2235 = vmax.xlane.f32.xlu0 %v2234
        %v2236 = vpop.xlane.xlu0 %2235
        %v2237 = vmax.f32 %v2233, %v2236
        %v2238 = vsub.f32 %v2233, %v2237
        %v2239 = vmul.f32 %v2238, 1.442695
        %v2240 = vpow.pop %v2239
        %2242 = vset.pattern.permute.xlu0 0
        %2243 = vperm.xlu0 %2242, %v2237
        %v2244 = vpop.permute.xlu0 %2243
        %v2246 = vsub.f32 %v2229, %v2244
        %v2247 = vmul.f32 %v2246, 1.442695
        %v2248 = vpow.pop %v2247
        %s2249 = scalar_lea.vmem [#allocation4], 24
        %v2250 = vld [vmem:[%s2249] sm:$0xff]
        %v2251 = vmul.f32 %v2240, %v2250
        %v2252 = vsel %vm1223, %v2248, 0.0
        %2253 = vadd.xlane.f32.xlu0 %v2252
        %v2254 = vpop.xlane.xlu0 %2253
        %v2255 = vadd.f32 %v2251, %v2254
        %2256 = vst.msk [vmem:[%s2249] sm:$0xff] %vm1245, %v2255
        %s2257 = scalar_lea.vmem [#allocation5], 24
        %v2258 = vld [vmem:[%s2257] sm:$0xff]
        %2260 = vset.pattern.permute.xlu0 0
        %2261 = vperm.xlu0 %2260, %v2240
        %v2262 = vpop.permute.xlu0 %2261
        %v2264 = vmul.f32 %v2262, %v2258
        %v2266 = vsel %vm1223, %v2248, 0
        %2268 = vmatprep.subr.mxu0 0.0
        %2269 = vmatpush1.msra.mxu0 0.0
        %2270 = vmatprep.subr.mxu0 0.0
        %2271 = vmatpush1.msra.mxu0 0.0
        %2272 = vmatprep.subr.mxu0 0.0
        %2273 = vmatpush1.msra.mxu0 0.0
        %2274 = vmatprep.subr.mxu0 0.0
        %2275 = vmatpush1.msra.mxu0 0.0
        %2276 = vmatprep.subr.mxu0 0.0
        %2277 = vmatpush1.msra.mxu0 0.0
        %2278 = vmatprep.subr.mxu0 0.0
        %2279 = vmatpush1.msra.mxu0 0.0
        %2280 = vmatprep.subr.mxu0 0.0
        %2281 = vmatpush1.msra.mxu0 0.0
        %2282 = vmatprep.subr.mxu0 0.0
        %2283 = vmatpush1.msra.mxu0 0.0
        %2284 = vmatprep.subr.mxu0 0.0
        %2285 = vmatpush1.msra.mxu0 0.0
        %2286 = vmatprep.subr.mxu0 0.0
        %2287 = vmatpush1.msra.mxu0 0.0
        %2288 = vmatprep.subr.mxu0 0.0
        %2289 = vmatpush1.msra.mxu0 0.0
        %2290 = vmatprep.subr.mxu0 0.0
        %2291 = vmatpush1.msra.mxu0 0.0
        %2292 = vmatprep.subr.mxu0 0.0
        %2293 = vmatpush1.msra.mxu0 0.0
        %2294 = vmatprep.subr.mxu0 0.0
        %2295 = vmatpush1.msra.mxu0 0.0
        %2296 = vmatprep.subr.mxu0 0.0
        %2297 = vmatpush1.msra.mxu0 0.0
        %2298 = vmatprep.subr.mxu0 0.0
        %2299 = vmatpush1.msra.mxu0 %v2151
        %2300 = vmatprep.subr.mxu0 0.0
        %2301 = vmatpush2.msra.mxu0 0.0
        %2302 = vmatprep.subr.mxu0 0.0
        %2303 = vmatpush2.msra.mxu0 0.0
        %2304 = vmatprep.subr.mxu0 0.0
        %2305 = vmatpush2.msra.mxu0 0.0
        %2306 = vmatprep.subr.mxu0 0.0
        %2307 = vmatpush2.msra.mxu0 0.0
        %2308 = vmatprep.subr.mxu0 0.0
        %2309 = vmatpush2.msra.mxu0 0.0
        %2310 = vmatprep.subr.mxu0 0.0
        %2311 = vmatpush2.msra.mxu0 0.0
        %2312 = vmatprep.subr.mxu0 0.0
        %2313 = vmatpush2.msra.mxu0 0.0
        %2314 = vmatprep.subr.mxu0 0.0
        %2315 = vmatpush2.msra.mxu0 0.0
        %2316 = vmatprep.subr.mxu0 0.0
        %2317 = vmatpush2.msra.mxu0 0.0
        %2318 = vmatprep.subr.mxu0 0.0
        %2319 = vmatpush2.msra.mxu0 0.0
        %2320 = vmatprep.subr.mxu0 0.0
        %2321 = vmatpush2.msra.mxu0 0.0
        %2322 = vmatprep.subr.mxu0 0.0
        %2323 = vmatpush2.msra.mxu0 0.0
        %2324 = vmatprep.subr.mxu0 0.0
        %2325 = vmatpush2.msra.mxu0 0.0
        %2326 = vmatprep.subr.mxu0 0.0
        %2327 = vmatpush2.msra.mxu0 0.0
        %2328 = vmatprep.subr.mxu0 0.0
        %2329 = vmatpush2.msra.mxu0 0.0
        %2330 = vmatprep.subr.mxu0 0.0
        %2331 = vmatpush2.msra.mxu0 0.0
        %2332 = vmatprep.mubr.f32.mxu0 0.0
        %2333 = vmatmul.mubr.f32.gmra.mxu0 %v2266
        %v2334 = vpop.f32.mrf.mxu0
        %v2335 = vadd.f32 0.0, %v2334
        %v2336 = vpop.f32.mrf.mxu0
        %2337 = vdwg.mxu0
        %v2338 = vadd.f32 %v2264, %v2335
        %2339 = vst.msk [vmem:[%s2257] sm:$0xff] %vm1145, %v2338
        %2340 = vst.msk [vmem:[%s2232] sm:$0xff] %vm1245, %v2237
        %s2341 = scalar_lea.vmem %s3, 128
        %v2342 = vld [vmem:[%s2341] sm:$0xff]
        %v2343 = vld [vmem:[%s2341 + $0x8] sm:$0xff]
        %v2344 = vld [vmem:[%s2341 + $0x10] sm:$0xff]
        %v2345 = vld [vmem:[%s2341 + $0x18] sm:$0xff]
        %2346 = vmatprep.subr.mxu0 0.0
        %2347 = vmatpush1.msra.mxu0 0.0
        %2348 = vmatprep.subr.mxu0 0.0
        %2349 = vmatpush1.msra.mxu0 0.0
        %2350 = vmatprep.subr.mxu0 0.0
        %2351 = vmatpush1.msra.mxu0 0.0
        %2352 = vmatprep.subr.mxu0 0.0
        %2353 = vmatpush1.msra.mxu0 0.0
        %2354 = vmatprep.subr.mxu0 0.0
        %2355 = vmatpush1.msra.mxu0 0.0
        %2356 = vmatprep.subr.mxu0 0.0
        %2357 = vmatpush1.msra.mxu0 0.0
        %2358 = vmatprep.subr.mxu0 0.0
        %2359 = vmatpush1.msra.mxu0 0.0
        %2360 = vmatprep.subr.mxu0 0.0
        %2361 = vmatpush1.msra.mxu0 0.0
        %2362 = vmatprep.subr.mxu0 0.0
        %2363 = vmatpush1.msra.mxu0 0.0
        %2364 = vmatprep.subr.mxu0 0.0
        %2365 = vmatpush1.msra.mxu0 0.0
        %2366 = vmatprep.subr.mxu0 0.0
        %2367 = vmatpush1.msra.mxu0 0.0
        %2368 = vmatprep.subr.mxu0 0.0
        %2369 = vmatpush1.msra.mxu0 0.0
        %2370 = vmatprep.subr.mxu0 0.0
        %2371 = vmatpush1.msra.mxu0 %v2345
        %2372 = vmatprep.subr.mxu0 0.0
        %2373 = vmatpush1.msra.mxu0 %v2344
        %2374 = vmatprep.subr.mxu0 0.0
        %2375 = vmatpush1.msra.mxu0 %v2343
        %2376 = vmatprep.subr.mxu0 0.0
        %2377 = vmatpush1.msra.mxu0 %v2342
        %2378 = vmatprep.subr.mxu0 0.0
        %2379 = vmatpush2.msra.mxu0 0.0
        %2380 = vmatprep.subr.mxu0 0.0
        %2381 = vmatpush2.msra.mxu0 0.0
        %2382 = vmatprep.subr.mxu0 0.0
        %2383 = vmatpush2.msra.mxu0 0.0
        %2384 = vmatprep.subr.mxu0 0.0
        %2385 = vmatpush2.msra.mxu0 0.0
        %2386 = vmatprep.subr.mxu0 0.0
        %2387 = vmatpush2.msra.mxu0 0.0
        %2388 = vmatprep.subr.mxu0 0.0
        %2389 = vmatpush2.msra.mxu0 0.0
        %2390 = vmatprep.subr.mxu0 0.0
        %2391 = vmatpush2.msra.mxu0 0.0
        %2392 = vmatprep.subr.mxu0 0.0
        %2393 = vmatpush2.msra.mxu0 0.0
        %2394 = vmatprep.subr.mxu0 0.0
        %2395 = vmatpush2.msra.mxu0 0.0
        %2396 = vmatprep.subr.mxu0 0.0
        %2397 = vmatpush2.msra.mxu0 0.0
        %2398 = vmatprep.subr.mxu0 0.0
        %2399 = vmatpush2.msra.mxu0 0.0
        %2400 = vmatprep.subr.mxu0 0.0
        %2401 = vmatpush2.msra.mxu0 0.0
        %2402 = vmatprep.subr.mxu0 0.0
        %2403 = vmatpush2.msra.mxu0 0.0
        %2404 = vmatprep.subr.mxu0 0.0
        %2405 = vmatpush2.msra.mxu0 0.0
        %2406 = vmatprep.subr.mxu0 0.0
        %2407 = vmatpush2.msra.mxu0 0.0
        %2408 = vmatprep.subr.mxu0 0.0
        %2409 = vmatpush2.msra.mxu0 0.0
        %2410 = vmatprep.mubr.f32.mxu0 0.0
        %2411 = vmatmul.mubr.f32.gmra.mxu0 %v998
        %v2412 = vpop.f32.mrf.mxu0
        %v2413 = vadd.f32 0.0, %v2412
        %v2414 = vpop.f32.mrf.mxu0
        %2415 = vdwg.mxu0
        %s2416 = scalar_lea.vmem %s4, 128
        %v2417 = vld [vmem:[%s2416] sm:$0xff]
        %v2418 = vld [vmem:[%s2416 + $0x8] sm:$0xff]
        %v2419 = vld [vmem:[%s2416 + $0x10] sm:$0xff]
        %v2420 = vld [vmem:[%s2416 + $0x18] sm:$0xff]
        %2421 = vmatprep.subr.mxu0 0.0
        %2422 = vmatpush1.msra.mxu0 0.0
        %2423 = vmatprep.subr.mxu0 0.0
        %2424 = vmatpush1.msra.mxu0 0.0
        %2425 = vmatprep.subr.mxu0 0.0
        %2426 = vmatpush1.msra.mxu0 0.0
        %2427 = vmatprep.subr.mxu0 0.0
        %2428 = vmatpush1.msra.mxu0 0.0
        %2429 = vmatprep.subr.mxu0 0.0
        %2430 = vmatpush1.msra.mxu0 0.0
        %2431 = vmatprep.subr.mxu0 0.0
        %2432 = vmatpush1.msra.mxu0 0.0
        %2433 = vmatprep.subr.mxu0 0.0
        %2434 = vmatpush1.msra.mxu0 0.0
        %2435 = vmatprep.subr.mxu0 0.0
        %2436 = vmatpush1.msra.mxu0 0.0
        %2437 = vmatprep.subr.mxu0 0.0
        %2438 = vmatpush1.msra.mxu0 0.0
        %2439 = vmatprep.subr.mxu0 0.0
        %2440 = vmatpush1.msra.mxu0 0.0
        %2441 = vmatprep.subr.mxu0 0.0
        %2442 = vmatpush1.msra.mxu0 0.0
        %2443 = vmatprep.subr.mxu0 0.0
        %2444 = vmatpush1.msra.mxu0 0.0
        %2445 = vmatprep.subr.mxu0 0.0
        %2446 = vmatpush1.msra.mxu0 %v2420
        %2447 = vmatprep.subr.mxu0 0.0
        %2448 = vmatpush1.msra.mxu0 %v2419
        %2449 = vmatprep.subr.mxu0 0.0
        %2450 = vmatpush1.msra.mxu0 %v2418
        %2451 = vmatprep.subr.mxu0 0.0
        %2452 = vmatpush1.msra.mxu0 %v2417
        %2453 = vmatprep.subr.mxu0 0.0
        %2454 = vmatpush2.msra.mxu0 0.0
        %2455 = vmatprep.subr.mxu0 0.0
        %2456 = vmatpush2.msra.mxu0 0.0
        %2457 = vmatprep.subr.mxu0 0.0
        %2458 = vmatpush2.msra.mxu0 0.0
        %2459 = vmatprep.subr.mxu0 0.0
        %2460 = vmatpush2.msra.mxu0 0.0
        %2461 = vmatprep.subr.mxu0 0.0
        %2462 = vmatpush2.msra.mxu0 0.0
        %2463 = vmatprep.subr.mxu0 0.0
        %2464 = vmatpush2.msra.mxu0 0.0
        %2465 = vmatprep.subr.mxu0 0.0
        %2466 = vmatpush2.msra.mxu0 0.0
        %2467 = vmatprep.subr.mxu0 0.0
        %2468 = vmatpush2.msra.mxu0 0.0
        %2469 = vmatprep.subr.mxu0 0.0
        %2470 = vmatpush2.msra.mxu0 0.0
        %2471 = vmatprep.subr.mxu0 0.0
        %2472 = vmatpush2.msra.mxu0 0.0
        %2473 = vmatprep.subr.mxu0 0.0
        %2474 = vmatpush2.msra.mxu0 0.0
        %2475 = vmatprep.subr.mxu0 0.0
        %2476 = vmatpush2.msra.mxu0 0.0
        %2477 = vmatprep.subr.mxu0 0.0
        %2478 = vmatpush2.msra.mxu0 0.0
        %2479 = vmatprep.subr.mxu0 0.0
        %2480 = vmatpush2.msra.mxu0 0.0
        %2481 = vmatprep.subr.mxu0 0.0
        %2482 = vmatpush2.msra.mxu0 0.0
        %2483 = vmatprep.subr.mxu0 0.0
        %2484 = vmatpush2.msra.mxu0 0.0
        %2485 = vmatprep.mubr.f32.mxu0 0.0
        %2486 = vmatmul.mubr.f32.gmra.mxu0 %v998
        %v2487 = vpop.f32.mrf.mxu0
        %v2488 = vadd.f32 0.0, %v2487
        %v2489 = vpop.f32.mrf.mxu0
        %2490 = vdwg.mxu0
        %s2491 = scalar_lea.vmem [#allocation2], 32
        %v2492 = vld [vmem:[%s2491] sm:$0xff]
        %v2494 = vsel %vm1145, %v2492, 0
        %v2497 = vsel %vm1145, %v2413, 0
        %2499 = vmatprep.subr.mxu0 0.0
        %2500 = vmatpush1.xpose.msra.mxu0 0.0
        %2501 = vmatprep.subr.mxu0 0.0
        %2502 = vmatpush1.xpose.msra.mxu0 0.0
        %2503 = vmatprep.subr.mxu0 0.0
        %2504 = vmatpush1.xpose.msra.mxu0 0.0
        %2505 = vmatprep.subr.mxu0 0.0
        %2506 = vmatpush1.xpose.msra.mxu0 0.0
        %2507 = vmatprep.subr.mxu0 0.0
        %2508 = vmatpush1.xpose.msra.mxu0 0.0
        %2509 = vmatprep.subr.mxu0 0.0
        %2510 = vmatpush1.xpose.msra.mxu0 0.0
        %2511 = vmatprep.subr.mxu0 0.0
        %2512 = vmatpush1.xpose.msra.mxu0 0.0
        %2513 = vmatprep.subr.mxu0 0.0
        %2514 = vmatpush1.xpose.msra.mxu0 0.0
        %2515 = vmatprep.subr.mxu0 0.0
        %2516 = vmatpush1.xpose.msra.mxu0 0.0
        %2517 = vmatprep.subr.mxu0 0.0
        %2518 = vmatpush1.xpose.msra.mxu0 0.0
        %2519 = vmatprep.subr.mxu0 0.0
        %2520 = vmatpush1.xpose.msra.mxu0 0.0
        %2521 = vmatprep.subr.mxu0 0.0
        %2522 = vmatpush1.xpose.msra.mxu0 0.0
        %2523 = vmatprep.subr.mxu0 0.0
        %2524 = vmatpush1.xpose.msra.mxu0 0.0
        %2525 = vmatprep.subr.mxu0 0.0
        %2526 = vmatpush1.xpose.msra.mxu0 0.0
        %2527 = vmatprep.subr.mxu0 0.0
        %2528 = vmatpush1.xpose.msra.mxu0 0.0
        %2529 = vmatprep.subr.mxu0 0.0
        %2530 = vmatpush1.xpose.msra.mxu0 %v2497
        %2531 = vmatprep.subr.mxu0 0.0
        %2532 = vmatpush2.xpose.msra.mxu0 0.0
        %2533 = vmatprep.subr.mxu0 0.0
        %2534 = vmatpush2.xpose.msra.mxu0 0.0
        %2535 = vmatprep.subr.mxu0 0.0
        %2536 = vmatpush2.xpose.msra.mxu0 0.0
        %2537 = vmatprep.subr.mxu0 0.0
        %2538 = vmatpush2.xpose.msra.mxu0 0.0
        %2539 = vmatprep.subr.mxu0 0.0
        %2540 = vmatpush2.xpose.msra.mxu0 0.0
        %2541 = vmatprep.subr.mxu0 0.0
        %2542 = vmatpush2.xpose.msra.mxu0 0.0
        %2543 = vmatprep.subr.mxu0 0.0
        %2544 = vmatpush2.xpose.msra.mxu0 0.0
        %2545 = vmatprep.subr.mxu0 0.0
        %2546 = vmatpush2.xpose.msra.mxu0 0.0
        %2547 = vmatprep.subr.mxu0 0.0
        %2548 = vmatpush2.xpose.msra.mxu0 0.0
        %2549 = vmatprep.subr.mxu0 0.0
        %2550 = vmatpush2.xpose.msra.mxu0 0.0
        %2551 = vmatprep.subr.mxu0 0.0
        %2552 = vmatpush2.xpose.msra.mxu0 0.0
        %2553 = vmatprep.subr.mxu0 0.0
        %2554 = vmatpush2.xpose.msra.mxu0 0.0
        %2555 = vmatprep.subr.mxu0 0.0
        %2556 = vmatpush2.xpose.msra.mxu0 0.0
        %2557 = vmatprep.subr.mxu0 0.0
        %2558 = vmatpush2.xpose.msra.mxu0 0.0
        %2559 = vmatprep.subr.mxu0 0.0
        %2560 = vmatpush2.xpose.msra.mxu0 0.0
        %2561 = vmatprep.subr.mxu0 0.0
        %2562 = vmatpush2.xpose.msra.mxu0 0.0
        %2563 = vmatprep.mubr.f32.mxu0 0.0
        %2564 = vmatmul.mubr.f32.gmra.mxu0 %v2494
        %v2565 = vpop.f32.mrf.mxu0
        %v2566 = vadd.f32 0.0, %v2565
        %v2567 = vpop.f32.mrf.mxu0
        %2568 = vdwg.mxu0
        %s2569 = scalar_lea.vmem [#allocation3], 32
        %v2570 = vld [vmem:[%s2569] sm:$0xff]
        %v2571 = vsel %vm1223, %v2566, -inf
        %2572 = vmax.xlane.f32.xlu0 %v2571
        %v2573 = vpop.xlane.xlu0 %2572
        %v2574 = vmax.f32 %v2570, %v2573
        %v2575 = vsub.f32 %v2570, %v2574
        %v2576 = vmul.f32 %v2575, 1.442695
        %v2577 = vpow.pop %v2576
        %2579 = vset.pattern.permute.xlu0 0
        %2580 = vperm.xlu0 %2579, %v2574
        %v2581 = vpop.permute.xlu0 %2580
        %v2583 = vsub.f32 %v2566, %v2581
        %v2584 = vmul.f32 %v2583, 1.442695
        %v2585 = vpow.pop %v2584
        %s2586 = scalar_lea.vmem [#allocation4], 32
        %v2587 = vld [vmem:[%s2586] sm:$0xff]
        %v2588 = vmul.f32 %v2577, %v2587
        %v2589 = vsel %vm1223, %v2585, 0.0
        %2590 = vadd.xlane.f32.xlu0 %v2589
        %v2591 = vpop.xlane.xlu0 %2590
        %v2592 = vadd.f32 %v2588, %v2591
        %2593 = vst.msk [vmem:[%s2586] sm:$0xff] %vm1245, %v2592
        %s2594 = scalar_lea.vmem [#allocation5], 32
        %v2595 = vld [vmem:[%s2594] sm:$0xff]
        %2597 = vset.pattern.permute.xlu0 0
        %2598 = vperm.xlu0 %2597, %v2577
        %v2599 = vpop.permute.xlu0 %2598
        %v2601 = vmul.f32 %v2599, %v2595
        %v2603 = vsel %vm1223, %v2585, 0
        %2605 = vmatprep.subr.mxu0 0.0
        %2606 = vmatpush1.msra.mxu0 0.0
        %2607 = vmatprep.subr.mxu0 0.0
        %2608 = vmatpush1.msra.mxu0 0.0
        %2609 = vmatprep.subr.mxu0 0.0
        %2610 = vmatpush1.msra.mxu0 0.0
        %2611 = vmatprep.subr.mxu0 0.0
        %2612 = vmatpush1.msra.mxu0 0.0
        %2613 = vmatprep.subr.mxu0 0.0
        %2614 = vmatpush1.msra.mxu0 0.0
        %2615 = vmatprep.subr.mxu0 0.0
        %2616 = vmatpush1.msra.mxu0 0.0
        %2617 = vmatprep.subr.mxu0 0.0
        %2618 = vmatpush1.msra.mxu0 0.0
        %2619 = vmatprep.subr.mxu0 0.0
        %2620 = vmatpush1.msra.mxu0 0.0
        %2621 = vmatprep.subr.mxu0 0.0
        %2622 = vmatpush1.msra.mxu0 0.0
        %2623 = vmatprep.subr.mxu0 0.0
        %2624 = vmatpush1.msra.mxu0 0.0
        %2625 = vmatprep.subr.mxu0 0.0
        %2626 = vmatpush1.msra.mxu0 0.0
        %2627 = vmatprep.subr.mxu0 0.0
        %2628 = vmatpush1.msra.mxu0 0.0
        %2629 = vmatprep.subr.mxu0 0.0
        %2630 = vmatpush1.msra.mxu0 0.0
        %2631 = vmatprep.subr.mxu0 0.0
        %2632 = vmatpush1.msra.mxu0 0.0
        %2633 = vmatprep.subr.mxu0 0.0
        %2634 = vmatpush1.msra.mxu0 0.0
        %2635 = vmatprep.subr.mxu0 0.0
        %2636 = vmatpush1.msra.mxu0 %v2488
        %2637 = vmatprep.subr.mxu0 0.0
        %2638 = vmatpush2.msra.mxu0 0.0
        %2639 = vmatprep.subr.mxu0 0.0
        %2640 = vmatpush2.msra.mxu0 0.0
        %2641 = vmatprep.subr.mxu0 0.0
        %2642 = vmatpush2.msra.mxu0 0.0
        %2643 = vmatprep.subr.mxu0 0.0
        %2644 = vmatpush2.msra.mxu0 0.0
        %2645 = vmatprep.subr.mxu0 0.0
        %2646 = vmatpush2.msra.mxu0 0.0
        %2647 = vmatprep.subr.mxu0 0.0
        %2648 = vmatpush2.msra.mxu0 0.0
        %2649 = vmatprep.subr.mxu0 0.0
        %2650 = vmatpush2.msra.mxu0 0.0
        %2651 = vmatprep.subr.mxu0 0.0
        %2652 = vmatpush2.msra.mxu0 0.0
        %2653 = vmatprep.subr.mxu0 0.0
        %2654 = vmatpush2.msra.mxu0 0.0
        %2655 = vmatprep.subr.mxu0 0.0
        %2656 = vmatpush2.msra.mxu0 0.0
        %2657 = vmatprep.subr.mxu0 0.0
        %2658 = vmatpush2.msra.mxu0 0.0
        %2659 = vmatprep.subr.mxu0 0.0
        %2660 = vmatpush2.msra.mxu0 0.0
        %2661 = vmatprep.subr.mxu0 0.0
        %2662 = vmatpush2.msra.mxu0 0.0
        %2663 = vmatprep.subr.mxu0 0.0
        %2664 = vmatpush2.msra.mxu0 0.0
        %2665 = vmatprep.subr.mxu0 0.0
        %2666 = vmatpush2.msra.mxu0 0.0
        %2667 = vmatprep.subr.mxu0 0.0
        %2668 = vmatpush2.msra.mxu0 0.0
        %2669 = vmatprep.mubr.f32.mxu0 0.0
        %2670 = vmatmul.mubr.f32.gmra.mxu0 %v2603
        %v2671 = vpop.f32.mrf.mxu0
        %v2672 = vadd.f32 0.0, %v2671
        %v2673 = vpop.f32.mrf.mxu0
        %2674 = vdwg.mxu0
        %v2675 = vadd.f32 %v2601, %v2672
        %2676 = vst.msk [vmem:[%s2594] sm:$0xff] %vm1145, %v2675
        %2677 = vst.msk [vmem:[%s2569] sm:$0xff] %vm1245, %v2574
        %s2678 = scalar_lea.vmem %s3, 160
        %v2679 = vld [vmem:[%s2678] sm:$0xff]
        %v2680 = vld [vmem:[%s2678 + $0x8] sm:$0xff]
        %v2681 = vld [vmem:[%s2678 + $0x10] sm:$0xff]
        %v2682 = vld [vmem:[%s2678 + $0x18] sm:$0xff]
        %2683 = vmatprep.subr.mxu0 0.0
        %2684 = vmatpush1.msra.mxu0 0.0
        %2685 = vmatprep.subr.mxu0 0.0
        %2686 = vmatpush1.msra.mxu0 0.0
        %2687 = vmatprep.subr.mxu0 0.0
        %2688 = vmatpush1.msra.mxu0 0.0
        %2689 = vmatprep.subr.mxu0 0.0
        %2690 = vmatpush1.msra.mxu0 0.0
        %2691 = vmatprep.subr.mxu0 0.0
        %2692 = vmatpush1.msra.mxu0 0.0
        %2693 = vmatprep.subr.mxu0 0.0
        %2694 = vmatpush1.msra.mxu0 0.0
        %2695 = vmatprep.subr.mxu0 0.0
        %2696 = vmatpush1.msra.mxu0 0.0
        %2697 = vmatprep.subr.mxu0 0.0
        %2698 = vmatpush1.msra.mxu0 0.0
        %2699 = vmatprep.subr.mxu0 0.0
        %2700 = vmatpush1.msra.mxu0 0.0
        %2701 = vmatprep.subr.mxu0 0.0
        %2702 = vmatpush1.msra.mxu0 0.0
        %2703 = vmatprep.subr.mxu0 0.0
        %2704 = vmatpush1.msra.mxu0 0.0
        %2705 = vmatprep.subr.mxu0 0.0
        %2706 = vmatpush1.msra.mxu0 0.0
        %2707 = vmatprep.subr.mxu0 0.0
        %2708 = vmatpush1.msra.mxu0 %v2682
        %2709 = vmatprep.subr.mxu0 0.0
        %2710 = vmatpush1.msra.mxu0 %v2681
        %2711 = vmatprep.subr.mxu0 0.0
        %2712 = vmatpush1.msra.mxu0 %v2680
        %2713 = vmatprep.subr.mxu0 0.0
        %2714 = vmatpush1.msra.mxu0 %v2679
        %2715 = vmatprep.subr.mxu0 0.0
        %2716 = vmatpush2.msra.mxu0 0.0
        %2717 = vmatprep.subr.mxu0 0.0
        %2718 = vmatpush2.msra.mxu0 0.0
        %2719 = vmatprep.subr.mxu0 0.0
        %2720 = vmatpush2.msra.mxu0 0.0
        %2721 = vmatprep.subr.mxu0 0.0
        %2722 = vmatpush2.msra.mxu0 0.0
        %2723 = vmatprep.subr.mxu0 0.0
        %2724 = vmatpush2.msra.mxu0 0.0
        %2725 = vmatprep.subr.mxu0 0.0
        %2726 = vmatpush2.msra.mxu0 0.0
        %2727 = vmatprep.subr.mxu0 0.0
        %2728 = vmatpush2.msra.mxu0 0.0
        %2729 = vmatprep.subr.mxu0 0.0
        %2730 = vmatpush2.msra.mxu0 0.0
        %2731 = vmatprep.subr.mxu0 0.0
        %2732 = vmatpush2.msra.mxu0 0.0
        %2733 = vmatprep.subr.mxu0 0.0
        %2734 = vmatpush2.msra.mxu0 0.0
        %2735 = vmatprep.subr.mxu0 0.0
        %2736 = vmatpush2.msra.mxu0 0.0
        %2737 = vmatprep.subr.mxu0 0.0
        %2738 = vmatpush2.msra.mxu0 0.0
        %2739 = vmatprep.subr.mxu0 0.0
        %2740 = vmatpush2.msra.mxu0 0.0
        %2741 = vmatprep.subr.mxu0 0.0
        %2742 = vmatpush2.msra.mxu0 0.0
        %2743 = vmatprep.subr.mxu0 0.0
        %2744 = vmatpush2.msra.mxu0 0.0
        %2745 = vmatprep.subr.mxu0 0.0
        %2746 = vmatpush2.msra.mxu0 0.0
        %2747 = vmatprep.mubr.f32.mxu0 0.0
        %2748 = vmatmul.mubr.f32.gmra.mxu0 %v998
        %v2749 = vpop.f32.mrf.mxu0
        %v2750 = vadd.f32 0.0, %v2749
        %v2751 = vpop.f32.mrf.mxu0
        %2752 = vdwg.mxu0
        %s2753 = scalar_lea.vmem %s4, 160
        %v2754 = vld [vmem:[%s2753] sm:$0xff]
        %v2755 = vld [vmem:[%s2753 + $0x8] sm:$0xff]
        %v2756 = vld [vmem:[%s2753 + $0x10] sm:$0xff]
        %v2757 = vld [vmem:[%s2753 + $0x18] sm:$0xff]
        %2758 = vmatprep.subr.mxu0 0.0
        %2759 = vmatpush1.msra.mxu0 0.0
        %2760 = vmatprep.subr.mxu0 0.0
        %2761 = vmatpush1.msra.mxu0 0.0
        %2762 = vmatprep.subr.mxu0 0.0
        %2763 = vmatpush1.msra.mxu0 0.0
        %2764 = vmatprep.subr.mxu0 0.0
        %2765 = vmatpush1.msra.mxu0 0.0
        %2766 = vmatprep.subr.mxu0 0.0
        %2767 = vmatpush1.msra.mxu0 0.0
        %2768 = vmatprep.subr.mxu0 0.0
        %2769 = vmatpush1.msra.mxu0 0.0
        %2770 = vmatprep.subr.mxu0 0.0
        %2771 = vmatpush1.msra.mxu0 0.0
        %2772 = vmatprep.subr.mxu0 0.0
        %2773 = vmatpush1.msra.mxu0 0.0
        %2774 = vmatprep.subr.mxu0 0.0
        %2775 = vmatpush1.msra.mxu0 0.0
        %2776 = vmatprep.subr.mxu0 0.0
        %2777 = vmatpush1.msra.mxu0 0.0
        %2778 = vmatprep.subr.mxu0 0.0
        %2779 = vmatpush1.msra.mxu0 0.0
        %2780 = vmatprep.subr.mxu0 0.0
        %2781 = vmatpush1.msra.mxu0 0.0
        %2782 = vmatprep.subr.mxu0 0.0
        %2783 = vmatpush1.msra.mxu0 %v2757
        %2784 = vmatprep.subr.mxu0 0.0
        %2785 = vmatpush1.msra.mxu0 %v2756
        %2786 = vmatprep.subr.mxu0 0.0
        %2787 = vmatpush1.msra.mxu0 %v2755
        %2788 = vmatprep.subr.mxu0 0.0
        %2789 = vmatpush1.msra.mxu0 %v2754
        %2790 = vmatprep.subr.mxu0 0.0
        %2791 = vmatpush2.msra.mxu0 0.0
        %2792 = vmatprep.subr.mxu0 0.0
        %2793 = vmatpush2.msra.mxu0 0.0
        %2794 = vmatprep.subr.mxu0 0.0
        %2795 = vmatpush2.msra.mxu0 0.0
        %2796 = vmatprep.subr.mxu0 0.0
        %2797 = vmatpush2.msra.mxu0 0.0
        %2798 = vmatprep.subr.mxu0 0.0
        %2799 = vmatpush2.msra.mxu0 0.0
        %2800 = vmatprep.subr.mxu0 0.0
        %2801 = vmatpush2.msra.mxu0 0.0
        %2802 = vmatprep.subr.mxu0 0.0
        %2803 = vmatpush2.msra.mxu0 0.0
        %2804 = vmatprep.subr.mxu0 0.0
        %2805 = vmatpush2.msra.mxu0 0.0
        %2806 = vmatprep.subr.mxu0 0.0
        %2807 = vmatpush2.msra.mxu0 0.0
        %2808 = vmatprep.subr.mxu0 0.0
        %2809 = vmatpush2.msra.mxu0 0.0
        %2810 = vmatprep.subr.mxu0 0.0
        %2811 = vmatpush2.msra.mxu0 0.0
        %2812 = vmatprep.subr.mxu0 0.0
        %2813 = vmatpush2.msra.mxu0 0.0
        %2814 = vmatprep.subr.mxu0 0.0
        %2815 = vmatpush2.msra.mxu0 0.0
        %2816 = vmatprep.subr.mxu0 0.0
        %2817 = vmatpush2.msra.mxu0 0.0
        %2818 = vmatprep.subr.mxu0 0.0
        %2819 = vmatpush2.msra.mxu0 0.0
        %2820 = vmatprep.subr.mxu0 0.0
        %2821 = vmatpush2.msra.mxu0 0.0
        %2822 = vmatprep.mubr.f32.mxu0 0.0
        %2823 = vmatmul.mubr.f32.gmra.mxu0 %v998
        %v2824 = vpop.f32.mrf.mxu0
        %v2825 = vadd.f32 0.0, %v2824
        %v2826 = vpop.f32.mrf.mxu0
        %2827 = vdwg.mxu0
        %s2828 = scalar_lea.vmem [#allocation2], 40
        %v2829 = vld [vmem:[%s2828] sm:$0xff]
        %v2831 = vsel %vm1145, %v2829, 0
        %v2834 = vsel %vm1145, %v2750, 0
        %2836 = vmatprep.subr.mxu0 0.0
        %2837 = vmatpush1.xpose.msra.mxu0 0.0
        %2838 = vmatprep.subr.mxu0 0.0
        %2839 = vmatpush1.xpose.msra.mxu0 0.0
        %2840 = vmatprep.subr.mxu0 0.0
        %2841 = vmatpush1.xpose.msra.mxu0 0.0
        %2842 = vmatprep.subr.mxu0 0.0
        %2843 = vmatpush1.xpose.msra.mxu0 0.0
        %2844 = vmatprep.subr.mxu0 0.0
        %2845 = vmatpush1.xpose.msra.mxu0 0.0
        %2846 = vmatprep.subr.mxu0 0.0
        %2847 = vmatpush1.xpose.msra.mxu0 0.0
        %2848 = vmatprep.subr.mxu0 0.0
        %2849 = vmatpush1.xpose.msra.mxu0 0.0
        %2850 = vmatprep.subr.mxu0 0.0
        %2851 = vmatpush1.xpose.msra.mxu0 0.0
        %2852 = vmatprep.subr.mxu0 0.0
        %2853 = vmatpush1.xpose.msra.mxu0 0.0
        %2854 = vmatprep.subr.mxu0 0.0
        %2855 = vmatpush1.xpose.msra.mxu0 0.0
        %2856 = vmatprep.subr.mxu0 0.0
        %2857 = vmatpush1.xpose.msra.mxu0 0.0
        %2858 = vmatprep.subr.mxu0 0.0
        %2859 = vmatpush1.xpose.msra.mxu0 0.0
        %2860 = vmatprep.subr.mxu0 0.0
        %2861 = vmatpush1.xpose.msra.mxu0 0.0
        %2862 = vmatprep.subr.mxu0 0.0
        %2863 = vmatpush1.xpose.msra.mxu0 0.0
        %2864 = vmatprep.subr.mxu0 0.0
        %2865 = vmatpush1.xpose.msra.mxu0 0.0
        %2866 = vmatprep.subr.mxu0 0.0
        %2867 = vmatpush1.xpose.msra.mxu0 %v2834
        %2868 = vmatprep.subr.mxu0 0.0
        %2869 = vmatpush2.xpose.msra.mxu0 0.0
        %2870 = vmatprep.subr.mxu0 0.0
        %2871 = vmatpush2.xpose.msra.mxu0 0.0
        %2872 = vmatprep.subr.mxu0 0.0
        %2873 = vmatpush2.xpose.msra.mxu0 0.0
        %2874 = vmatprep.subr.mxu0 0.0
        %2875 = vmatpush2.xpose.msra.mxu0 0.0
        %2876 = vmatprep.subr.mxu0 0.0
        %2877 = vmatpush2.xpose.msra.mxu0 0.0
        %2878 = vmatprep.subr.mxu0 0.0
        %2879 = vmatpush2.xpose.msra.mxu0 0.0
        %2880 = vmatprep.subr.mxu0 0.0
        %2881 = vmatpush2.xpose.msra.mxu0 0.0
        %2882 = vmatprep.subr.mxu0 0.0
        %2883 = vmatpush2.xpose.msra.mxu0 0.0
        %2884 = vmatprep.subr.mxu0 0.0
        %2885 = vmatpush2.xpose.msra.mxu0 0.0
        %2886 = vmatprep.subr.mxu0 0.0
        %2887 = vmatpush2.xpose.msra.mxu0 0.0
        %2888 = vmatprep.subr.mxu0 0.0
        %2889 = vmatpush2.xpose.msra.mxu0 0.0
        %2890 = vmatprep.subr.mxu0 0.0
        %2891 = vmatpush2.xpose.msra.mxu0 0.0
        %2892 = vmatprep.subr.mxu0 0.0
        %2893 = vmatpush2.xpose.msra.mxu0 0.0
        %2894 = vmatprep.subr.mxu0 0.0
        %2895 = vmatpush2.xpose.msra.mxu0 0.0
        %2896 = vmatprep.subr.mxu0 0.0
        %2897 = vmatpush2.xpose.msra.mxu0 0.0
        %2898 = vmatprep.subr.mxu0 0.0
        %2899 = vmatpush2.xpose.msra.mxu0 0.0
        %2900 = vmatprep.mubr.f32.mxu0 0.0
        %2901 = vmatmul.mubr.f32.gmra.mxu0 %v2831
        %v2902 = vpop.f32.mrf.mxu0
        %v2903 = vadd.f32 0.0, %v2902
        %v2904 = vpop.f32.mrf.mxu0
        %2905 = vdwg.mxu0
        %s2906 = scalar_lea.vmem [#allocation3], 40
        %v2907 = vld [vmem:[%s2906] sm:$0xff]
        %v2908 = vsel %vm1223, %v2903, -inf
        %2909 = vmax.xlane.f32.xlu0 %v2908
        %v2910 = vpop.xlane.xlu0 %2909
        %v2911 = vmax.f32 %v2907, %v2910
        %v2912 = vsub.f32 %v2907, %v2911
        %v2913 = vmul.f32 %v2912, 1.442695
        %v2914 = vpow.pop %v2913
        %2916 = vset.pattern.permute.xlu0 0
        %2917 = vperm.xlu0 %2916, %v2911
        %v2918 = vpop.permute.xlu0 %2917
        %v2920 = vsub.f32 %v2903, %v2918
        %v2921 = vmul.f32 %v2920, 1.442695
        %v2922 = vpow.pop %v2921
        %s2923 = scalar_lea.vmem [#allocation4], 40
        %v2924 = vld [vmem:[%s2923] sm:$0xff]
        %v2925 = vmul.f32 %v2914, %v2924
        %v2926 = vsel %vm1223, %v2922, 0.0
        %2927 = vadd.xlane.f32.xlu0 %v2926
        %v2928 = vpop.xlane.xlu0 %2927
        %v2929 = vadd.f32 %v2925, %v2928
        %2930 = vst.msk [vmem:[%s2923] sm:$0xff] %vm1245, %v2929
        %s2931 = scalar_lea.vmem [#allocation5], 40
        %v2932 = vld [vmem:[%s2931] sm:$0xff]
        %2934 = vset.pattern.permute.xlu0 0
        %2935 = vperm.xlu0 %2934, %v2914
        %v2936 = vpop.permute.xlu0 %2935
        %v2938 = vmul.f32 %v2936, %v2932
        %v2940 = vsel %vm1223, %v2922, 0
        %2942 = vmatprep.subr.mxu0 0.0
        %2943 = vmatpush1.msra.mxu0 0.0
        %2944 = vmatprep.subr.mxu0 0.0
        %2945 = vmatpush1.msra.mxu0 0.0
        %2946 = vmatprep.subr.mxu0 0.0
        %2947 = vmatpush1.msra.mxu0 0.0
        %2948 = vmatprep.subr.mxu0 0.0
        %2949 = vmatpush1.msra.mxu0 0.0
        %2950 = vmatprep.subr.mxu0 0.0
        %2951 = vmatpush1.msra.mxu0 0.0
        %2952 = vmatprep.subr.mxu0 0.0
        %2953 = vmatpush1.msra.mxu0 0.0
        %2954 = vmatprep.subr.mxu0 0.0
        %2955 = vmatpush1.msra.mxu0 0.0
        %2956 = vmatprep.subr.mxu0 0.0
        %2957 = vmatpush1.msra.mxu0 0.0
        %2958 = vmatprep.subr.mxu0 0.0
        %2959 = vmatpush1.msra.mxu0 0.0
        %2960 = vmatprep.subr.mxu0 0.0
        %2961 = vmatpush1.msra.mxu0 0.0
        %2962 = vmatprep.subr.mxu0 0.0
        %2963 = vmatpush1.msra.mxu0 0.0
        %2964 = vmatprep.subr.mxu0 0.0
        %2965 = vmatpush1.msra.mxu0 0.0
        %2966 = vmatprep.subr.mxu0 0.0
        %2967 = vmatpush1.msra.mxu0 0.0
        %2968 = vmatprep.subr.mxu0 0.0
        %2969 = vmatpush1.msra.mxu0 0.0
        %2970 = vmatprep.subr.mxu0 0.0
        %2971 = vmatpush1.msra.mxu0 0.0
        %2972 = vmatprep.subr.mxu0 0.0
        %2973 = vmatpush1.msra.mxu0 %v2825
        %2974 = vmatprep.subr.mxu0 0.0
        %2975 = vmatpush2.msra.mxu0 0.0
        %2976 = vmatprep.subr.mxu0 0.0
        %2977 = vmatpush2.msra.mxu0 0.0
        %2978 = vmatprep.subr.mxu0 0.0
        %2979 = vmatpush2.msra.mxu0 0.0
        %2980 = vmatprep.subr.mxu0 0.0
        %2981 = vmatpush2.msra.mxu0 0.0
        %2982 = vmatprep.subr.mxu0 0.0
        %2983 = vmatpush2.msra.mxu0 0.0
        %2984 = vmatprep.subr.mxu0 0.0
        %2985 = vmatpush2.msra.mxu0 0.0
        %2986 = vmatprep.subr.mxu0 0.0
        %2987 = vmatpush2.msra.mxu0 0.0
        %2988 = vmatprep.subr.mxu0 0.0
        %2989 = vmatpush2.msra.mxu0 0.0
        %2990 = vmatprep.subr.mxu0 0.0
        %2991 = vmatpush2.msra.mxu0 0.0
        %2992 = vmatprep.subr.mxu0 0.0
        %2993 = vmatpush2.msra.mxu0 0.0
        %2994 = vmatprep.subr.mxu0 0.0
        %2995 = vmatpush2.msra.mxu0 0.0
        %2996 = vmatprep.subr.mxu0 0.0
        %2997 = vmatpush2.msra.mxu0 0.0
        %2998 = vmatprep.subr.mxu0 0.0
        %2999 = vmatpush2.msra.mxu0 0.0
        %3000 = vmatprep.subr.mxu0 0.0
        %3001 = vmatpush2.msra.mxu0 0.0
        %3002 = vmatprep.subr.mxu0 0.0
        %3003 = vmatpush2.msra.mxu0 0.0
        %3004 = vmatprep.subr.mxu0 0.0
        %3005 = vmatpush2.msra.mxu0 0.0
        %3006 = vmatprep.mubr.f32.mxu0 0.0
        %3007 = vmatmul.mubr.f32.gmra.mxu0 %v2940
        %v3008 = vpop.f32.mrf.mxu0
        %v3009 = vadd.f32 0.0, %v3008
        %v3010 = vpop.f32.mrf.mxu0
        %3011 = vdwg.mxu0
        %v3012 = vadd.f32 %v2938, %v3009
        %3013 = vst.msk [vmem:[%s2931] sm:$0xff] %vm1145, %v3012
        %3014 = vst.msk [vmem:[%s2906] sm:$0xff] %vm1245, %v2911
        %s3015 = scalar_lea.vmem %s3, 192
        %v3016 = vld [vmem:[%s3015] sm:$0xff]
        %v3017 = vld [vmem:[%s3015 + $0x8] sm:$0xff]
        %v3018 = vld [vmem:[%s3015 + $0x10] sm:$0xff]
        %v3019 = vld [vmem:[%s3015 + $0x18] sm:$0xff]
        %3020 = vmatprep.subr.mxu0 0.0
        %3021 = vmatpush1.msra.mxu0 0.0
        %3022 = vmatprep.subr.mxu0 0.0
        %3023 = vmatpush1.msra.mxu0 0.0
        %3024 = vmatprep.subr.mxu0 0.0
        %3025 = vmatpush1.msra.mxu0 0.0
        %3026 = vmatprep.subr.mxu0 0.0
        %3027 = vmatpush1.msra.mxu0 0.0
        %3028 = vmatprep.subr.mxu0 0.0
        %3029 = vmatpush1.msra.mxu0 0.0
        %3030 = vmatprep.subr.mxu0 0.0
        %3031 = vmatpush1.msra.mxu0 0.0
        %3032 = vmatprep.subr.mxu0 0.0
        %3033 = vmatpush1.msra.mxu0 0.0
        %3034 = vmatprep.subr.mxu0 0.0
        %3035 = vmatpush1.msra.mxu0 0.0
        %3036 = vmatprep.subr.mxu0 0.0
        %3037 = vmatpush1.msra.mxu0 0.0
        %3038 = vmatprep.subr.mxu0 0.0
        %3039 = vmatpush1.msra.mxu0 0.0
        %3040 = vmatprep.subr.mxu0 0.0
        %3041 = vmatpush1.msra.mxu0 0.0
        %3042 = vmatprep.subr.mxu0 0.0
        %3043 = vmatpush1.msra.mxu0 0.0
        %3044 = vmatprep.subr.mxu0 0.0
        %3045 = vmatpush1.msra.mxu0 %v3019
        %3046 = vmatprep.subr.mxu0 0.0
        %3047 = vmatpush1.msra.mxu0 %v3018
        %3048 = vmatprep.subr.mxu0 0.0
        %3049 = vmatpush1.msra.mxu0 %v3017
        %3050 = vmatprep.subr.mxu0 0.0
        %3051 = vmatpush1.msra.mxu0 %v3016
        %3052 = vmatprep.subr.mxu0 0.0
        %3053 = vmatpush2.msra.mxu0 0.0
        %3054 = vmatprep.subr.mxu0 0.0
        %3055 = vmatpush2.msra.mxu0 0.0
        %3056 = vmatprep.subr.mxu0 0.0
        %3057 = vmatpush2.msra.mxu0 0.0
        %3058 = vmatprep.subr.mxu0 0.0
        %3059 = vmatpush2.msra.mxu0 0.0
        %3060 = vmatprep.subr.mxu0 0.0
        %3061 = vmatpush2.msra.mxu0 0.0
        %3062 = vmatprep.subr.mxu0 0.0
        %3063 = vmatpush2.msra.mxu0 0.0
        %3064 = vmatprep.subr.mxu0 0.0
        %3065 = vmatpush2.msra.mxu0 0.0
        %3066 = vmatprep.subr.mxu0 0.0
        %3067 = vmatpush2.msra.mxu0 0.0
        %3068 = vmatprep.subr.mxu0 0.0
        %3069 = vmatpush2.msra.mxu0 0.0
        %3070 = vmatprep.subr.mxu0 0.0
        %3071 = vmatpush2.msra.mxu0 0.0
        %3072 = vmatprep.subr.mxu0 0.0
        %3073 = vmatpush2.msra.mxu0 0.0
        %3074 = vmatprep.subr.mxu0 0.0
        %3075 = vmatpush2.msra.mxu0 0.0
        %3076 = vmatprep.subr.mxu0 0.0
        %3077 = vmatpush2.msra.mxu0 0.0
        %3078 = vmatprep.subr.mxu0 0.0
        %3079 = vmatpush2.msra.mxu0 0.0
        %3080 = vmatprep.subr.mxu0 0.0
        %3081 = vmatpush2.msra.mxu0 0.0
        %3082 = vmatprep.subr.mxu0 0.0
        %3083 = vmatpush2.msra.mxu0 0.0
        %3084 = vmatprep.mubr.f32.mxu0 0.0
        %3085 = vmatmul.mubr.f32.gmra.mxu0 %v998
        %v3086 = vpop.f32.mrf.mxu0
        %v3087 = vadd.f32 0.0, %v3086
        %v3088 = vpop.f32.mrf.mxu0
        %3089 = vdwg.mxu0
        %s3090 = scalar_lea.vmem %s4, 192
        %v3091 = vld [vmem:[%s3090] sm:$0xff]
        %v3092 = vld [vmem:[%s3090 + $0x8] sm:$0xff]
        %v3093 = vld [vmem:[%s3090 + $0x10] sm:$0xff]
        %v3094 = vld [vmem:[%s3090 + $0x18] sm:$0xff]
        %3095 = vmatprep.subr.mxu0 0.0
        %3096 = vmatpush1.msra.mxu0 0.0
        %3097 = vmatprep.subr.mxu0 0.0
        %3098 = vmatpush1.msra.mxu0 0.0
        %3099 = vmatprep.subr.mxu0 0.0
        %3100 = vmatpush1.msra.mxu0 0.0
        %3101 = vmatprep.subr.mxu0 0.0
        %3102 = vmatpush1.msra.mxu0 0.0
        %3103 = vmatprep.subr.mxu0 0.0
        %3104 = vmatpush1.msra.mxu0 0.0
        %3105 = vmatprep.subr.mxu0 0.0
        %3106 = vmatpush1.msra.mxu0 0.0
        %3107 = vmatprep.subr.mxu0 0.0
        %3108 = vmatpush1.msra.mxu0 0.0
        %3109 = vmatprep.subr.mxu0 0.0
        %3110 = vmatpush1.msra.mxu0 0.0
        %3111 = vmatprep.subr.mxu0 0.0
        %3112 = vmatpush1.msra.mxu0 0.0
        %3113 = vmatprep.subr.mxu0 0.0
        %3114 = vmatpush1.msra.mxu0 0.0
        %3115 = vmatprep.subr.mxu0 0.0
        %3116 = vmatpush1.msra.mxu0 0.0
        %3117 = vmatprep.subr.mxu0 0.0
        %3118 = vmatpush1.msra.mxu0 0.0
        %3119 = vmatprep.subr.mxu0 0.0
        %3120 = vmatpush1.msra.mxu0 %v3094
        %3121 = vmatprep.subr.mxu0 0.0
        %3122 = vmatpush1.msra.mxu0 %v3093
        %3123 = vmatprep.subr.mxu0 0.0
        %3124 = vmatpush1.msra.mxu0 %v3092
        %3125 = vmatprep.subr.mxu0 0.0
        %3126 = vmatpush1.msra.mxu0 %v3091
        %3127 = vmatprep.subr.mxu0 0.0
        %3128 = vmatpush2.msra.mxu0 0.0
        %3129 = vmatprep.subr.mxu0 0.0
        %3130 = vmatpush2.msra.mxu0 0.0
        %3131 = vmatprep.subr.mxu0 0.0
        %3132 = vmatpush2.msra.mxu0 0.0
        %3133 = vmatprep.subr.mxu0 0.0
        %3134 = vmatpush2.msra.mxu0 0.0
        %3135 = vmatprep.subr.mxu0 0.0
        %3136 = vmatpush2.msra.mxu0 0.0
        %3137 = vmatprep.subr.mxu0 0.0
        %3138 = vmatpush2.msra.mxu0 0.0
        %3139 = vmatprep.subr.mxu0 0.0
        %3140 = vmatpush2.msra.mxu0 0.0
        %3141 = vmatprep.subr.mxu0 0.0
        %3142 = vmatpush2.msra.mxu0 0.0
        %3143 = vmatprep.subr.mxu0 0.0
        %3144 = vmatpush2.msra.mxu0 0.0
        %3145 = vmatprep.subr.mxu0 0.0
        %3146 = vmatpush2.msra.mxu0 0.0
        %3147 = vmatprep.subr.mxu0 0.0
        %3148 = vmatpush2.msra.mxu0 0.0
        %3149 = vmatprep.subr.mxu0 0.0
        %3150 = vmatpush2.msra.mxu0 0.0
        %3151 = vmatprep.subr.mxu0 0.0
        %3152 = vmatpush2.msra.mxu0 0.0
        %3153 = vmatprep.subr.mxu0 0.0
        %3154 = vmatpush2.msra.mxu0 0.0
        %3155 = vmatprep.subr.mxu0 0.0
        %3156 = vmatpush2.msra.mxu0 0.0
        %3157 = vmatprep.subr.mxu0 0.0
        %3158 = vmatpush2.msra.mxu0 0.0
        %3159 = vmatprep.mubr.f32.mxu0 0.0
        %3160 = vmatmul.mubr.f32.gmra.mxu0 %v998
        %v3161 = vpop.f32.mrf.mxu0
        %v3162 = vadd.f32 0.0, %v3161
        %v3163 = vpop.f32.mrf.mxu0
        %3164 = vdwg.mxu0
        %s3165 = scalar_lea.vmem [#allocation2], 48
        %v3166 = vld [vmem:[%s3165] sm:$0xff]
        %v3168 = vsel %vm1145, %v3166, 0
        %v3171 = vsel %vm1145, %v3087, 0
        %3173 = vmatprep.subr.mxu0 0.0
        %3174 = vmatpush1.xpose.msra.mxu0 0.0
        %3175 = vmatprep.subr.mxu0 0.0
        %3176 = vmatpush1.xpose.msra.mxu0 0.0
        %3177 = vmatprep.subr.mxu0 0.0
        %3178 = vmatpush1.xpose.msra.mxu0 0.0
        %3179 = vmatprep.subr.mxu0 0.0
        %3180 = vmatpush1.xpose.msra.mxu0 0.0
        %3181 = vmatprep.subr.mxu0 0.0
        %3182 = vmatpush1.xpose.msra.mxu0 0.0
        %3183 = vmatprep.subr.mxu0 0.0
        %3184 = vmatpush1.xpose.msra.mxu0 0.0
        %3185 = vmatprep.subr.mxu0 0.0
        %3186 = vmatpush1.xpose.msra.mxu0 0.0
        %3187 = vmatprep.subr.mxu0 0.0
        %3188 = vmatpush1.xpose.msra.mxu0 0.0
        %3189 = vmatprep.subr.mxu0 0.0
        %3190 = vmatpush1.xpose.msra.mxu0 0.0
        %3191 = vmatprep.subr.mxu0 0.0
        %3192 = vmatpush1.xpose.msra.mxu0 0.0
        %3193 = vmatprep.subr.mxu0 0.0
        %3194 = vmatpush1.xpose.msra.mxu0 0.0
        %3195 = vmatprep.subr.mxu0 0.0
        %3196 = vmatpush1.xpose.msra.mxu0 0.0
        %3197 = vmatprep.subr.mxu0 0.0
        %3198 = vmatpush1.xpose.msra.mxu0 0.0
        %3199 = vmatprep.subr.mxu0 0.0
        %3200 = vmatpush1.xpose.msra.mxu0 0.0
        %3201 = vmatprep.subr.mxu0 0.0
        %3202 = vmatpush1.xpose.msra.mxu0 0.0
        %3203 = vmatprep.subr.mxu0 0.0
        %3204 = vmatpush1.xpose.msra.mxu0 %v3171
        %3205 = vmatprep.subr.mxu0 0.0
        %3206 = vmatpush2.xpose.msra.mxu0 0.0
        %3207 = vmatprep.subr.mxu0 0.0
        %3208 = vmatpush2.xpose.msra.mxu0 0.0
        %3209 = vmatprep.subr.mxu0 0.0
        %3210 = vmatpush2.xpose.msra.mxu0 0.0
        %3211 = vmatprep.subr.mxu0 0.0
        %3212 = vmatpush2.xpose.msra.mxu0 0.0
        %3213 = vmatprep.subr.mxu0 0.0
        %3214 = vmatpush2.xpose.msra.mxu0 0.0
        %3215 = vmatprep.subr.mxu0 0.0
        %3216 = vmatpush2.xpose.msra.mxu0 0.0
        %3217 = vmatprep.subr.mxu0 0.0
        %3218 = vmatpush2.xpose.msra.mxu0 0.0
        %3219 = vmatprep.subr.mxu0 0.0
        %3220 = vmatpush2.xpose.msra.mxu0 0.0
        %3221 = vmatprep.subr.mxu0 0.0
        %3222 = vmatpush2.xpose.msra.mxu0 0.0
        %3223 = vmatprep.subr.mxu0 0.0
        %3224 = vmatpush2.xpose.msra.mxu0 0.0
        %3225 = vmatprep.subr.mxu0 0.0
        %3226 = vmatpush2.xpose.msra.mxu0 0.0
        %3227 = vmatprep.subr.mxu0 0.0
        %3228 = vmatpush2.xpose.msra.mxu0 0.0
        %3229 = vmatprep.subr.mxu0 0.0
        %3230 = vmatpush2.xpose.msra.mxu0 0.0
        %3231 = vmatprep.subr.mxu0 0.0
        %3232 = vmatpush2.xpose.msra.mxu0 0.0
        %3233 = vmatprep.subr.mxu0 0.0
        %3234 = vmatpush2.xpose.msra.mxu0 0.0
        %3235 = vmatprep.subr.mxu0 0.0
        %3236 = vmatpush2.xpose.msra.mxu0 0.0
        %3237 = vmatprep.mubr.f32.mxu0 0.0
        %3238 = vmatmul.mubr.f32.gmra.mxu0 %v3168
        %v3239 = vpop.f32.mrf.mxu0
        %v3240 = vadd.f32 0.0, %v3239
        %v3241 = vpop.f32.mrf.mxu0
        %3242 = vdwg.mxu0
        %s3243 = scalar_lea.vmem [#allocation3], 48
        %v3244 = vld [vmem:[%s3243] sm:$0xff]
        %v3245 = vsel %vm1223, %v3240, -inf
        %3246 = vmax.xlane.f32.xlu0 %v3245
        %v3247 = vpop.xlane.xlu0 %3246
        %v3248 = vmax.f32 %v3244, %v3247
        %v3249 = vsub.f32 %v3244, %v3248
        %v3250 = vmul.f32 %v3249, 1.442695
        %v3251 = vpow.pop %v3250
        %3253 = vset.pattern.permute.xlu0 0
        %3254 = vperm.xlu0 %3253, %v3248
        %v3255 = vpop.permute.xlu0 %3254
        %v3257 = vsub.f32 %v3240, %v3255
        %v3258 = vmul.f32 %v3257, 1.442695
        %v3259 = vpow.pop %v3258
        %s3260 = scalar_lea.vmem [#allocation4], 48
        %v3261 = vld [vmem:[%s3260] sm:$0xff]
        %v3262 = vmul.f32 %v3251, %v3261
        %v3263 = vsel %vm1223, %v3259, 0.0
        %3264 = vadd.xlane.f32.xlu0 %v3263
        %v3265 = vpop.xlane.xlu0 %3264
        %v3266 = vadd.f32 %v3262, %v3265
        %3267 = vst.msk [vmem:[%s3260] sm:$0xff] %vm1245, %v3266
        %s3268 = scalar_lea.vmem [#allocation5], 48
        %v3269 = vld [vmem:[%s3268] sm:$0xff]
        %3271 = vset.pattern.permute.xlu0 0
        %3272 = vperm.xlu0 %3271, %v3251
        %v3273 = vpop.permute.xlu0 %3272
        %v3275 = vmul.f32 %v3273, %v3269
        %v3277 = vsel %vm1223, %v3259, 0
        %3279 = vmatprep.subr.mxu0 0.0
        %3280 = vmatpush1.msra.mxu0 0.0
        %3281 = vmatprep.subr.mxu0 0.0
        %3282 = vmatpush1.msra.mxu0 0.0
        %3283 = vmatprep.subr.mxu0 0.0
        %3284 = vmatpush1.msra.mxu0 0.0
        %3285 = vmatprep.subr.mxu0 0.0
        %3286 = vmatpush1.msra.mxu0 0.0
        %3287 = vmatprep.subr.mxu0 0.0
        %3288 = vmatpush1.msra.mxu0 0.0
        %3289 = vmatprep.subr.mxu0 0.0
        %3290 = vmatpush1.msra.mxu0 0.0
        %3291 = vmatprep.subr.mxu0 0.0
        %3292 = vmatpush1.msra.mxu0 0.0
        %3293 = vmatprep.subr.mxu0 0.0
        %3294 = vmatpush1.msra.mxu0 0.0
        %3295 = vmatprep.subr.mxu0 0.0
        %3296 = vmatpush1.msra.mxu0 0.0
        %3297 = vmatprep.subr.mxu0 0.0
        %3298 = vmatpush1.msra.mxu0 0.0
        %3299 = vmatprep.subr.mxu0 0.0
        %3300 = vmatpush1.msra.mxu0 0.0
        %3301 = vmatprep.subr.mxu0 0.0
        %3302 = vmatpush1.msra.mxu0 0.0
        %3303 = vmatprep.subr.mxu0 0.0
        %3304 = vmatpush1.msra.mxu0 0.0
        %3305 = vmatprep.subr.mxu0 0.0
        %3306 = vmatpush1.msra.mxu0 0.0
        %3307 = vmatprep.subr.mxu0 0.0
        %3308 = vmatpush1.msra.mxu0 0.0
        %3309 = vmatprep.subr.mxu0 0.0
        %3310 = vmatpush1.msra.mxu0 %v3162
        %3311 = vmatprep.subr.mxu0 0.0
        %3312 = vmatpush2.msra.mxu0 0.0
        %3313 = vmatprep.subr.mxu0 0.0
        %3314 = vmatpush2.msra.mxu0 0.0
        %3315 = vmatprep.subr.mxu0 0.0
        %3316 = vmatpush2.msra.mxu0 0.0
        %3317 = vmatprep.subr.mxu0 0.0
        %3318 = vmatpush2.msra.mxu0 0.0
        %3319 = vmatprep.subr.mxu0 0.0
        %3320 = vmatpush2.msra.mxu0 0.0
        %3321 = vmatprep.subr.mxu0 0.0
        %3322 = vmatpush2.msra.mxu0 0.0
        %3323 = vmatprep.subr.mxu0 0.0
        %3324 = vmatpush2.msra.mxu0 0.0
        %3325 = vmatprep.subr.mxu0 0.0
        %3326 = vmatpush2.msra.mxu0 0.0
        %3327 = vmatprep.subr.mxu0 0.0
        %3328 = vmatpush2.msra.mxu0 0.0
        %3329 = vmatprep.subr.mxu0 0.0
        %3330 = vmatpush2.msra.mxu0 0.0
        %3331 = vmatprep.subr.mxu0 0.0
        %3332 = vmatpush2.msra.mxu0 0.0
        %3333 = vmatprep.subr.mxu0 0.0
        %3334 = vmatpush2.msra.mxu0 0.0
        %3335 = vmatprep.subr.mxu0 0.0
        %3336 = vmatpush2.msra.mxu0 0.0
        %3337 = vmatprep.subr.mxu0 0.0
        %3338 = vmatpush2.msra.mxu0 0.0
        %3339 = vmatprep.subr.mxu0 0.0
        %3340 = vmatpush2.msra.mxu0 0.0
        %3341 = vmatprep.subr.mxu0 0.0
        %3342 = vmatpush2.msra.mxu0 0.0
        %3343 = vmatprep.mubr.f32.mxu0 0.0
        %3344 = vmatmul.mubr.f32.gmra.mxu0 %v3277
        %v3345 = vpop.f32.mrf.mxu0
        %v3346 = vadd.f32 0.0, %v3345
        %v3347 = vpop.f32.mrf.mxu0
        %3348 = vdwg.mxu0
        %v3349 = vadd.f32 %v3275, %v3346
        %3350 = vst.msk [vmem:[%s3268] sm:$0xff] %vm1145, %v3349
        %3351 = vst.msk [vmem:[%s3243] sm:$0xff] %vm1245, %v3248
        %s3352 = scalar_lea.vmem %s3, 224
        %v3353 = vld [vmem:[%s3352] sm:$0xff]
        %v3354 = vld [vmem:[%s3352 + $0x8] sm:$0xff]
        %v3355 = vld [vmem:[%s3352 + $0x10] sm:$0xff]
        %v3356 = vld [vmem:[%s3352 + $0x18] sm:$0xff]
        %3357 = vmatprep.subr.mxu0 0.0
        %3358 = vmatpush1.msra.mxu0 0.0
        %3359 = vmatprep.subr.mxu0 0.0
        %3360 = vmatpush1.msra.mxu0 0.0
        %3361 = vmatprep.subr.mxu0 0.0
        %3362 = vmatpush1.msra.mxu0 0.0
        %3363 = vmatprep.subr.mxu0 0.0
        %3364 = vmatpush1.msra.mxu0 0.0
        %3365 = vmatprep.subr.mxu0 0.0
        %3366 = vmatpush1.msra.mxu0 0.0
        %3367 = vmatprep.subr.mxu0 0.0
        %3368 = vmatpush1.msra.mxu0 0.0
        %3369 = vmatprep.subr.mxu0 0.0
        %3370 = vmatpush1.msra.mxu0 0.0
        %3371 = vmatprep.subr.mxu0 0.0
        %3372 = vmatpush1.msra.mxu0 0.0
        %3373 = vmatprep.subr.mxu0 0.0
        %3374 = vmatpush1.msra.mxu0 0.0
        %3375 = vmatprep.subr.mxu0 0.0
        %3376 = vmatpush1.msra.mxu0 0.0
        %3377 = vmatprep.subr.mxu0 0.0
        %3378 = vmatpush1.msra.mxu0 0.0
        %3379 = vmatprep.subr.mxu0 0.0
        %3380 = vmatpush1.msra.mxu0 0.0
        %3381 = vmatprep.subr.mxu0 0.0
        %3382 = vmatpush1.msra.mxu0 %v3356
        %3383 = vmatprep.subr.mxu0 0.0
        %3384 = vmatpush1.msra.mxu0 %v3355
        %3385 = vmatprep.subr.mxu0 0.0
        %3386 = vmatpush1.msra.mxu0 %v3354
        %3387 = vmatprep.subr.mxu0 0.0
        %3388 = vmatpush1.msra.mxu0 %v3353
        %3389 = vmatprep.subr.mxu0 0.0
        %3390 = vmatpush2.msra.mxu0 0.0
        %3391 = vmatprep.subr.mxu0 0.0
        %3392 = vmatpush2.msra.mxu0 0.0
        %3393 = vmatprep.subr.mxu0 0.0
        %3394 = vmatpush2.msra.mxu0 0.0
        %3395 = vmatprep.subr.mxu0 0.0
        %3396 = vmatpush2.msra.mxu0 0.0
        %3397 = vmatprep.subr.mxu0 0.0
        %3398 = vmatpush2.msra.mxu0 0.0
        %3399 = vmatprep.subr.mxu0 0.0
        %3400 = vmatpush2.msra.mxu0 0.0
        %3401 = vmatprep.subr.mxu0 0.0
        %3402 = vmatpush2.msra.mxu0 0.0
        %3403 = vmatprep.subr.mxu0 0.0
        %3404 = vmatpush2.msra.mxu0 0.0
        %3405 = vmatprep.subr.mxu0 0.0
        %3406 = vmatpush2.msra.mxu0 0.0
        %3407 = vmatprep.subr.mxu0 0.0
        %3408 = vmatpush2.msra.mxu0 0.0
        %3409 = vmatprep.subr.mxu0 0.0
        %3410 = vmatpush2.msra.mxu0 0.0
        %3411 = vmatprep.subr.mxu0 0.0
        %3412 = vmatpush2.msra.mxu0 0.0
        %3413 = vmatprep.subr.mxu0 0.0
        %3414 = vmatpush2.msra.mxu0 0.0
        %3415 = vmatprep.subr.mxu0 0.0
        %3416 = vmatpush2.msra.mxu0 0.0
        %3417 = vmatprep.subr.mxu0 0.0
        %3418 = vmatpush2.msra.mxu0 0.0
        %3419 = vmatprep.subr.mxu0 0.0
        %3420 = vmatpush2.msra.mxu0 0.0
        %3421 = vmatprep.mubr.f32.mxu0 0.0
        %3422 = vmatmul.mubr.f32.gmra.mxu0 %v998
        %v3423 = vpop.f32.mrf.mxu0
        %v3424 = vadd.f32 0.0, %v3423
        %v3425 = vpop.f32.mrf.mxu0
        %3426 = vdwg.mxu0
        %s3427 = scalar_lea.vmem %s4, 224
        %v3428 = vld [vmem:[%s3427] sm:$0xff]
        %v3429 = vld [vmem:[%s3427 + $0x8] sm:$0xff]
        %v3430 = vld [vmem:[%s3427 + $0x10] sm:$0xff]
        %v3431 = vld [vmem:[%s3427 + $0x18] sm:$0xff]
        %3432 = vmatprep.subr.mxu0 0.0
        %3433 = vmatpush1.msra.mxu0 0.0
        %3434 = vmatprep.subr.mxu0 0.0
        %3435 = vmatpush1.msra.mxu0 0.0
        %3436 = vmatprep.subr.mxu0 0.0
        %3437 = vmatpush1.msra.mxu0 0.0
        %3438 = vmatprep.subr.mxu0 0.0
        %3439 = vmatpush1.msra.mxu0 0.0
        %3440 = vmatprep.subr.mxu0 0.0
        %3441 = vmatpush1.msra.mxu0 0.0
        %3442 = vmatprep.subr.mxu0 0.0
        %3443 = vmatpush1.msra.mxu0 0.0
        %3444 = vmatprep.subr.mxu0 0.0
        %3445 = vmatpush1.msra.mxu0 0.0
        %3446 = vmatprep.subr.mxu0 0.0
        %3447 = vmatpush1.msra.mxu0 0.0
        %3448 = vmatprep.subr.mxu0 0.0
        %3449 = vmatpush1.msra.mxu0 0.0
        %3450 = vmatprep.subr.mxu0 0.0
        %3451 = vmatpush1.msra.mxu0 0.0
        %3452 = vmatprep.subr.mxu0 0.0
        %3453 = vmatpush1.msra.mxu0 0.0
        %3454 = vmatprep.subr.mxu0 0.0
        %3455 = vmatpush1.msra.mxu0 0.0
        %3456 = vmatprep.subr.mxu0 0.0
        %3457 = vmatpush1.msra.mxu0 %v3431
        %3458 = vmatprep.subr.mxu0 0.0
        %3459 = vmatpush1.msra.mxu0 %v3430
        %3460 = vmatprep.subr.mxu0 0.0
        %3461 = vmatpush1.msra.mxu0 %v3429
        %3462 = vmatprep.subr.mxu0 0.0
        %3463 = vmatpush1.msra.mxu0 %v3428
        %3464 = vmatprep.subr.mxu0 0.0
        %3465 = vmatpush2.msra.mxu0 0.0
        %3466 = vmatprep.subr.mxu0 0.0
        %3467 = vmatpush2.msra.mxu0 0.0
        %3468 = vmatprep.subr.mxu0 0.0
        %3469 = vmatpush2.msra.mxu0 0.0
        %3470 = vmatprep.subr.mxu0 0.0
        %3471 = vmatpush2.msra.mxu0 0.0
        %3472 = vmatprep.subr.mxu0 0.0
        %3473 = vmatpush2.msra.mxu0 0.0
        %3474 = vmatprep.subr.mxu0 0.0
        %3475 = vmatpush2.msra.mxu0 0.0
        %3476 = vmatprep.subr.mxu0 0.0
        %3477 = vmatpush2.msra.mxu0 0.0
        %3478 = vmatprep.subr.mxu0 0.0
        %3479 = vmatpush2.msra.mxu0 0.0
        %3480 = vmatprep.subr.mxu0 0.0
        %3481 = vmatpush2.msra.mxu0 0.0
        %3482 = vmatprep.subr.mxu0 0.0
        %3483 = vmatpush2.msra.mxu0 0.0
        %3484 = vmatprep.subr.mxu0 0.0
        %3485 = vmatpush2.msra.mxu0 0.0
        %3486 = vmatprep.subr.mxu0 0.0
        %3487 = vmatpush2.msra.mxu0 0.0
        %3488 = vmatprep.subr.mxu0 0.0
        %3489 = vmatpush2.msra.mxu0 0.0
        %3490 = vmatprep.subr.mxu0 0.0
        %3491 = vmatpush2.msra.mxu0 0.0
        %3492 = vmatprep.subr.mxu0 0.0
        %3493 = vmatpush2.msra.mxu0 0.0
        %3494 = vmatprep.subr.mxu0 0.0
        %3495 = vmatpush2.msra.mxu0 0.0
        %3496 = vmatprep.mubr.f32.mxu0 0.0
        %3497 = vmatmul.mubr.f32.gmra.mxu0 %v998
        %v3498 = vpop.f32.mrf.mxu0
        %v3499 = vadd.f32 0.0, %v3498
        %v3500 = vpop.f32.mrf.mxu0
        %3501 = vdwg.mxu0
        %s3502 = scalar_lea.vmem [#allocation2], 56
        %v3503 = vld [vmem:[%s3502] sm:$0xff]
        %v3505 = vsel %vm1145, %v3503, 0
        %v3508 = vsel %vm1145, %v3424, 0
        %3510 = vmatprep.subr.mxu0 0.0
        %3511 = vmatpush1.xpose.msra.mxu0 0.0
        %3512 = vmatprep.subr.mxu0 0.0
        %3513 = vmatpush1.xpose.msra.mxu0 0.0
        %3514 = vmatprep.subr.mxu0 0.0
        %3515 = vmatpush1.xpose.msra.mxu0 0.0
        %3516 = vmatprep.subr.mxu0 0.0
        %3517 = vmatpush1.xpose.msra.mxu0 0.0
        %3518 = vmatprep.subr.mxu0 0.0
        %3519 = vmatpush1.xpose.msra.mxu0 0.0
        %3520 = vmatprep.subr.mxu0 0.0
        %3521 = vmatpush1.xpose.msra.mxu0 0.0
        %3522 = vmatprep.subr.mxu0 0.0
        %3523 = vmatpush1.xpose.msra.mxu0 0.0
        %3524 = vmatprep.subr.mxu0 0.0
        %3525 = vmatpush1.xpose.msra.mxu0 0.0
        %3526 = vmatprep.subr.mxu0 0.0
        %3527 = vmatpush1.xpose.msra.mxu0 0.0
        %3528 = vmatprep.subr.mxu0 0.0
        %3529 = vmatpush1.xpose.msra.mxu0 0.0
        %3530 = vmatprep.subr.mxu0 0.0
        %3531 = vmatpush1.xpose.msra.mxu0 0.0
        %3532 = vmatprep.subr.mxu0 0.0
        %3533 = vmatpush1.xpose.msra.mxu0 0.0
        %3534 = vmatprep.subr.mxu0 0.0
        %3535 = vmatpush1.xpose.msra.mxu0 0.0
        %3536 = vmatprep.subr.mxu0 0.0
        %3537 = vmatpush1.xpose.msra.mxu0 0.0
        %3538 = vmatprep.subr.mxu0 0.0
        %3539 = vmatpush1.xpose.msra.mxu0 0.0
        %3540 = vmatprep.subr.mxu0 0.0
        %3541 = vmatpush1.xpose.msra.mxu0 %v3508
        %3542 = vmatprep.subr.mxu0 0.0
        %3543 = vmatpush2.xpose.msra.mxu0 0.0
        %3544 = vmatprep.subr.mxu0 0.0
        %3545 = vmatpush2.xpose.msra.mxu0 0.0
        %3546 = vmatprep.subr.mxu0 0.0
        %3547 = vmatpush2.xpose.msra.mxu0 0.0
        %3548 = vmatprep.subr.mxu0 0.0
        %3549 = vmatpush2.xpose.msra.mxu0 0.0
        %3550 = vmatprep.subr.mxu0 0.0
        %3551 = vmatpush2.xpose.msra.mxu0 0.0
        %3552 = vmatprep.subr.mxu0 0.0
        %3553 = vmatpush2.xpose.msra.mxu0 0.0
        %3554 = vmatprep.subr.mxu0 0.0
        %3555 = vmatpush2.xpose.msra.mxu0 0.0
        %3556 = vmatprep.subr.mxu0 0.0
        %3557 = vmatpush2.xpose.msra.mxu0 0.0
        %3558 = vmatprep.subr.mxu0 0.0
        %3559 = vmatpush2.xpose.msra.mxu0 0.0
        %3560 = vmatprep.subr.mxu0 0.0
        %3561 = vmatpush2.xpose.msra.mxu0 0.0
        %3562 = vmatprep.subr.mxu0 0.0
        %3563 = vmatpush2.xpose.msra.mxu0 0.0
        %3564 = vmatprep.subr.mxu0 0.0
        %3565 = vmatpush2.xpose.msra.mxu0 0.0
        %3566 = vmatprep.subr.mxu0 0.0
        %3567 = vmatpush2.xpose.msra.mxu0 0.0
        %3568 = vmatprep.subr.mxu0 0.0
        %3569 = vmatpush2.xpose.msra.mxu0 0.0
        %3570 = vmatprep.subr.mxu0 0.0
        %3571 = vmatpush2.xpose.msra.mxu0 0.0
        %3572 = vmatprep.subr.mxu0 0.0
        %3573 = vmatpush2.xpose.msra.mxu0 0.0
        %3574 = vmatprep.mubr.f32.mxu0 0.0
        %3575 = vmatmul.mubr.f32.gmra.mxu0 %v3505
        %v3576 = vpop.f32.mrf.mxu0
        %v3577 = vadd.f32 0.0, %v3576
        %v3578 = vpop.f32.mrf.mxu0
        %3579 = vdwg.mxu0
        %s3580 = scalar_lea.vmem [#allocation3], 56
        %v3581 = vld [vmem:[%s3580] sm:$0xff]
        %v3582 = vsel %vm1223, %v3577, -inf
        %3583 = vmax.xlane.f32.xlu0 %v3582
        %v3584 = vpop.xlane.xlu0 %3583
        %v3585 = vmax.f32 %v3581, %v3584
        %v3586 = vsub.f32 %v3581, %v3585
        %v3587 = vmul.f32 %v3586, 1.442695
        %v3588 = vpow.pop %v3587
        %3590 = vset.pattern.permute.xlu0 0
        %3591 = vperm.xlu0 %3590, %v3585
        %v3592 = vpop.permute.xlu0 %3591
        %v3594 = vsub.f32 %v3577, %v3592
        %v3595 = vmul.f32 %v3594, 1.442695
        %v3596 = vpow.pop %v3595
        %s3597 = scalar_lea.vmem [#allocation4], 56
        %v3598 = vld [vmem:[%s3597] sm:$0xff]
        %v3599 = vmul.f32 %v3588, %v3598
        %v3600 = vsel %vm1223, %v3596, 0.0
        %3601 = vadd.xlane.f32.xlu0 %v3600
        %v3602 = vpop.xlane.xlu0 %3601
        %v3603 = vadd.f32 %v3599, %v3602
        %3604 = vst.msk [vmem:[%s3597] sm:$0xff] %vm1245, %v3603
        %s3605 = scalar_lea.vmem [#allocation5], 56
        %v3606 = vld [vmem:[%s3605] sm:$0xff]
        %3608 = vset.pattern.permute.xlu0 0
        %3609 = vperm.xlu0 %3608, %v3588
        %v3610 = vpop.permute.xlu0 %3609
        %v3612 = vmul.f32 %v3610, %v3606
        %v3614 = vsel %vm1223, %v3596, 0
        %3616 = vmatprep.subr.mxu0 0.0
        %3617 = vmatpush1.msra.mxu0 0.0
        %3618 = vmatprep.subr.mxu0 0.0
        %3619 = vmatpush1.msra.mxu0 0.0
        %3620 = vmatprep.subr.mxu0 0.0
        %3621 = vmatpush1.msra.mxu0 0.0
        %3622 = vmatprep.subr.mxu0 0.0
        %3623 = vmatpush1.msra.mxu0 0.0
        %3624 = vmatprep.subr.mxu0 0.0
        %3625 = vmatpush1.msra.mxu0 0.0
        %3626 = vmatprep.subr.mxu0 0.0
        %3627 = vmatpush1.msra.mxu0 0.0
        %3628 = vmatprep.subr.mxu0 0.0
        %3629 = vmatpush1.msra.mxu0 0.0
        %3630 = vmatprep.subr.mxu0 0.0
        %3631 = vmatpush1.msra.mxu0 0.0
        %3632 = vmatprep.subr.mxu0 0.0
        %3633 = vmatpush1.msra.mxu0 0.0
        %3634 = vmatprep.subr.mxu0 0.0
        %3635 = vmatpush1.msra.mxu0 0.0
        %3636 = vmatprep.subr.mxu0 0.0
        %3637 = vmatpush1.msra.mxu0 0.0
        %3638 = vmatprep.subr.mxu0 0.0
        %3639 = vmatpush1.msra.mxu0 0.0
        %3640 = vmatprep.subr.mxu0 0.0
        %3641 = vmatpush1.msra.mxu0 0.0
        %3642 = vmatprep.subr.mxu0 0.0
        %3643 = vmatpush1.msra.mxu0 0.0
        %3644 = vmatprep.subr.mxu0 0.0
        %3645 = vmatpush1.msra.mxu0 0.0
        %3646 = vmatprep.subr.mxu0 0.0
        %3647 = vmatpush1.msra.mxu0 %v3499
        %3648 = vmatprep.subr.mxu0 0.0
        %3649 = vmatpush2.msra.mxu0 0.0
        %3650 = vmatprep.subr.mxu0 0.0
        %3651 = vmatpush2.msra.mxu0 0.0
        %3652 = vmatprep.subr.mxu0 0.0
        %3653 = vmatpush2.msra.mxu0 0.0
        %3654 = vmatprep.subr.mxu0 0.0
        %3655 = vmatpush2.msra.mxu0 0.0
        %3656 = vmatprep.subr.mxu0 0.0
        %3657 = vmatpush2.msra.mxu0 0.0
        %3658 = vmatprep.subr.mxu0 0.0
        %3659 = vmatpush2.msra.mxu0 0.0
        %3660 = vmatprep.subr.mxu0 0.0
        %3661 = vmatpush2.msra.mxu0 0.0
        %3662 = vmatprep.subr.mxu0 0.0
        %3663 = vmatpush2.msra.mxu0 0.0
        %3664 = vmatprep.subr.mxu0 0.0
        %3665 = vmatpush2.msra.mxu0 0.0
        %3666 = vmatprep.subr.mxu0 0.0
        %3667 = vmatpush2.msra.mxu0 0.0
        %3668 = vmatprep.subr.mxu0 0.0
        %3669 = vmatpush2.msra.mxu0 0.0
        %3670 = vmatprep.subr.mxu0 0.0
        %3671 = vmatpush2.msra.mxu0 0.0
        %3672 = vmatprep.subr.mxu0 0.0
        %3673 = vmatpush2.msra.mxu0 0.0
        %3674 = vmatprep.subr.mxu0 0.0
        %3675 = vmatpush2.msra.mxu0 0.0
        %3676 = vmatprep.subr.mxu0 0.0
        %3677 = vmatpush2.msra.mxu0 0.0
        %3678 = vmatprep.subr.mxu0 0.0
        %3679 = vmatpush2.msra.mxu0 0.0
        %3680 = vmatprep.mubr.f32.mxu0 0.0
        %3681 = vmatmul.mubr.f32.gmra.mxu0 %v3614
        %v3682 = vpop.f32.mrf.mxu0
        %v3683 = vadd.f32 0.0, %v3682
        %v3684 = vpop.f32.mrf.mxu0
        %3685 = vdwg.mxu0
        %v3686 = vadd.f32 %v3612, %v3683
        %3687 = vst.msk [vmem:[%s3605] sm:$0xff] %vm1145, %v3686
        %3688 = vst.msk [vmem:[%s3580] sm:$0xff] %vm1245, %v3585
        // Predicated region
        $region53: #{tpu_custom_call.1} parent=47 // pred_check
          %p3689 = pneg %p334
        $region54: #{tpu_custom_call.1} parent=47 // pred_check_branch
          %3691 = sbr.rel (%p3689) target = $region56
        $region55: #{tpu_custom_call.1} parent=47 // pred_region
          %v3692 = vld [vmem:[#allocation4] sm:$0xff]
          %v3693 = vrcp.pop %v3692
          %v3694 = vld [vmem:[#allocation5] sm:$0xff]
          %3696 = vset.pattern.permute.xlu0 0
          %3697 = vperm.xlu0 %3696, %v3693
          %v3698 = vpop.permute.xlu0 %3697
          %v3700 = vmul.f32 %v3694, %v3698
          %v3701 = vld [vmem:[%s5] sm:$0xf]
          %v3702 = vld [vmem:[%s1575] sm:$0xff]
          %v3703 = vrcp.pop %v3702
          %v3704 = vld [vmem:[%s1583] sm:$0xff]
          %3706 = vset.pattern.permute.xlu0 0
          %3707 = vperm.xlu0 %3706, %v3703
          %v3708 = vpop.permute.xlu0 %3707
          %v3710 = vmul.f32 %v3704, %v3708
          %s3711 = scalar_lea.vmem %s5, 4
          %v3712 = vld [vmem:[%s3711] sm:$0xf]
          %v3714 = vsel %vm1145, %v3710, 0
          %vm3716 = vcmask 1043456
          %v3718 = vsel %vm3716, %v3712, 0
          %3720 = vmatprep.subr.mxu0 0.0
          %3721 = vmatpush1.msra.mxu0 0.0
          %3722 = vmatprep.subr.mxu0 0.0
          %3723 = vmatpush1.msra.mxu0 0.0
          %3724 = vmatprep.subr.mxu0 0.0
          %3725 = vmatpush1.msra.mxu0 0.0
          %3726 = vmatprep.subr.mxu0 0.0
          %3727 = vmatpush1.msra.mxu0 0.0
          %3728 = vmatprep.subr.mxu0 0.0
          %3729 = vmatpush1.msra.mxu0 0.0
          %3730 = vmatprep.subr.mxu0 0.0
          %3731 = vmatpush1.msra.mxu0 0.0
          %3732 = vmatprep.subr.mxu0 0.0
          %3733 = vmatpush1.msra.mxu0 0.0
          %3734 = vmatprep.subr.mxu0 0.0
          %3735 = vmatpush1.msra.mxu0 0.0
          %3736 = vmatprep.subr.mxu0 0.0
          %3737 = vmatpush1.msra.mxu0 0.0
          %3738 = vmatprep.subr.mxu0 0.0
          %3739 = vmatpush1.msra.mxu0 0.0
          %3740 = vmatprep.subr.mxu0 0.0
          %3741 = vmatpush1.msra.mxu0 0.0
          %3742 = vmatprep.subr.mxu0 0.0
          %3743 = vmatpush1.msra.mxu0 0.0
          %3744 = vmatprep.subr.mxu0 0.0
          %3745 = vmatpush1.msra.mxu0 0.0
          %3746 = vmatprep.subr.mxu0 0.0
          %3747 = vmatpush1.msra.mxu0 0.0
          %3748 = vmatprep.subr.mxu0 0.0
          %3749 = vmatpush1.msra.mxu0 0.0
          %3750 = vmatprep.subr.mxu0 0.0
          %3751 = vmatpush1.msra.mxu0 %v3718
          %3752 = vmatprep.subr.mxu0 0.0
          %3753 = vmatpush2.msra.mxu0 0.0
          %3754 = vmatprep.subr.mxu0 0.0
          %3755 = vmatpush2.msra.mxu0 0.0
          %3756 = vmatprep.subr.mxu0 0.0
          %3757 = vmatpush2.msra.mxu0 0.0
          %3758 = vmatprep.subr.mxu0 0.0
          %3759 = vmatpush2.msra.mxu0 0.0
          %3760 = vmatprep.subr.mxu0 0.0
          %3761 = vmatpush2.msra.mxu0 0.0
          %3762 = vmatprep.subr.mxu0 0.0
          %3763 = vmatpush2.msra.mxu0 0.0
          %3764 = vmatprep.subr.mxu0 0.0
          %3765 = vmatpush2.msra.mxu0 0.0
          %3766 = vmatprep.subr.mxu0 0.0
          %3767 = vmatpush2.msra.mxu0 0.0
          %3768 = vmatprep.subr.mxu0 0.0
          %3769 = vmatpush2.msra.mxu0 0.0
          %3770 = vmatprep.subr.mxu0 0.0
          %3771 = vmatpush2.msra.mxu0 0.0
          %3772 = vmatprep.subr.mxu0 0.0
          %3773 = vmatpush2.msra.mxu0 0.0
          %3774 = vmatprep.subr.mxu0 0.0
          %3775 = vmatpush2.msra.mxu0 0.0
          %3776 = vmatprep.subr.mxu0 0.0
          %3777 = vmatpush2.msra.mxu0 0.0
          %3778 = vmatprep.subr.mxu0 0.0
          %3779 = vmatpush2.msra.mxu0 0.0
          %3780 = vmatprep.subr.mxu0 0.0
          %3781 = vmatpush2.msra.mxu0 0.0
          %3782 = vmatprep.subr.mxu0 0.0
          %3783 = vmatpush2.msra.mxu0 0.0
          %3784 = vmatprep.mubr.f32.mxu0 0.0
          %3785 = vmatmul.mubr.f32.gmra.mxu0 %v3714
          %v3786 = vpop.f32.mrf.mxu0
          %v3787 = vadd.f32 0.0, %v3786
          %v3788 = vpop.f32.mrf.mxu0
          %3789 = vdwg.mxu0
          %v3791 = vsel %vm1145, %v3700, 0
          %v3794 = vsel %vm3716, %v3701, 0
          %3796 = vmatprep.subr.mxu0 0.0
          %3797 = vmatpush1.msra.mxu0 0.0
          %3798 = vmatprep.subr.mxu0 0.0
          %3799 = vmatpush1.msra.mxu0 0.0
          %3800 = vmatprep.subr.mxu0 0.0
          %3801 = vmatpush1.msra.mxu0 0.0
          %3802 = vmatprep.subr.mxu0 0.0
          %3803 = vmatpush1.msra.mxu0 0.0
          %3804 = vmatprep.subr.mxu0 0.0
          %3805 = vmatpush1.msra.mxu0 0.0
          %3806 = vmatprep.subr.mxu0 0.0
          %3807 = vmatpush1.msra.mxu0 0.0
          %3808 = vmatprep.subr.mxu0 0.0
          %3809 = vmatpush1.msra.mxu0 0.0
          %3810 = vmatprep.subr.mxu0 0.0
          %3811 = vmatpush1.msra.mxu0 0.0
          %3812 = vmatprep.subr.mxu0 0.0
          %3813 = vmatpush1.msra.mxu0 0.0
          %3814 = vmatprep.subr.mxu0 0.0
          %3815 = vmatpush1.msra.mxu0 0.0
          %3816 = vmatprep.subr.mxu0 0.0
          %3817 = vmatpush1.msra.mxu0 0.0
          %3818 = vmatprep.subr.mxu0 0.0
          %3819 = vmatpush1.msra.mxu0 0.0
          %3820 = vmatprep.subr.mxu0 0.0
          %3821 = vmatpush1.msra.mxu0 0.0
          %3822 = vmatprep.subr.mxu0 0.0
          %3823 = vmatpush1.msra.mxu0 0.0
          %3824 = vmatprep.subr.mxu0 0.0
          %3825 = vmatpush1.msra.mxu0 0.0
          %3826 = vmatprep.subr.mxu0 0.0
          %3827 = vmatpush1.msra.mxu0 %v3794
          %3828 = vmatprep.subr.mxu0 0.0
          %3829 = vmatpush2.msra.mxu0 0.0
          %3830 = vmatprep.subr.mxu0 0.0
          %3831 = vmatpush2.msra.mxu0 0.0
          %3832 = vmatprep.subr.mxu0 0.0
          %3833 = vmatpush2.msra.mxu0 0.0
          %3834 = vmatprep.subr.mxu0 0.0
          %3835 = vmatpush2.msra.mxu0 0.0
          %3836 = vmatprep.subr.mxu0 0.0
          %3837 = vmatpush2.msra.mxu0 0.0
          %3838 = vmatprep.subr.mxu0 0.0
          %3839 = vmatpush2.msra.mxu0 0.0
          %3840 = vmatprep.subr.mxu0 0.0
          %3841 = vmatpush2.msra.mxu0 0.0
          %3842 = vmatprep.subr.mxu0 0.0
          %3843 = vmatpush2.msra.mxu0 0.0
          %3844 = vmatprep.subr.mxu0 0.0
          %3845 = vmatpush2.msra.mxu0 0.0
          %3846 = vmatprep.subr.mxu0 0.0
          %3847 = vmatpush2.msra.mxu0 0.0
          %3848 = vmatprep.subr.mxu0 0.0
          %3849 = vmatpush2.msra.mxu0 0.0
          %3850 = vmatprep.subr.mxu0 0.0
          %3851 = vmatpush2.msra.mxu0 0.0
          %3852 = vmatprep.subr.mxu0 0.0
          %3853 = vmatpush2.msra.mxu0 0.0
          %3854 = vmatprep.subr.mxu0 0.0
          %3855 = vmatpush2.msra.mxu0 0.0
          %3856 = vmatprep.subr.mxu0 0.0
          %3857 = vmatpush2.msra.mxu0 0.0
          %3858 = vmatprep.subr.mxu0 0.0
          %3859 = vmatpush2.msra.mxu0 0.0
          %3860 = vmatprep.mubr.f32.mxu0 0.0
          %3861 = vmatmul.mubr.f32.gmra.mxu0 %v3791
          %v3862 = vpop.f32.mrf.mxu0
          %v3863 = vadd.f32 %v3787, %v3862
          %v3864 = vpop.f32.mrf.mxu0
          %3865 = vdwg.mxu0
          %v3866 = vld [vmem:[%s1912] sm:$0xff]
          %v3867 = vrcp.pop %v3866
          %v3868 = vld [vmem:[%s1920] sm:$0xff]
          %3870 = vset.pattern.permute.xlu0 0
          %3871 = vperm.xlu0 %3870, %v3867
          %v3872 = vpop.permute.xlu0 %3871
          %v3874 = vmul.f32 %v3868, %v3872
          %s3875 = scalar_lea.vmem %s5, 8
          %v3876 = vld [vmem:[%s3875] sm:$0xf]
          %v3878 = vsel %vm1145, %v3874, 0
          %v3881 = vsel %vm3716, %v3876, 0
          %3883 = vmatprep.subr.mxu0 0.0
          %3884 = vmatpush1.msra.mxu0 0.0
          %3885 = vmatprep.subr.mxu0 0.0
          %3886 = vmatpush1.msra.mxu0 0.0
          %3887 = vmatprep.subr.mxu0 0.0
          %3888 = vmatpush1.msra.mxu0 0.0
          %3889 = vmatprep.subr.mxu0 0.0
          %3890 = vmatpush1.msra.mxu0 0.0
          %3891 = vmatprep.subr.mxu0 0.0
          %3892 = vmatpush1.msra.mxu0 0.0
          %3893 = vmatprep.subr.mxu0 0.0
          %3894 = vmatpush1.msra.mxu0 0.0
          %3895 = vmatprep.subr.mxu0 0.0
          %3896 = vmatpush1.msra.mxu0 0.0
          %3897 = vmatprep.subr.mxu0 0.0
          %3898 = vmatpush1.msra.mxu0 0.0
          %3899 = vmatprep.subr.mxu0 0.0
          %3900 = vmatpush1.msra.mxu0 0.0
          %3901 = vmatprep.subr.mxu0 0.0
          %3902 = vmatpush1.msra.mxu0 0.0
          %3903 = vmatprep.subr.mxu0 0.0
          %3904 = vmatpush1.msra.mxu0 0.0
          %3905 = vmatprep.subr.mxu0 0.0
          %3906 = vmatpush1.msra.mxu0 0.0
          %3907 = vmatprep.subr.mxu0 0.0
          %3908 = vmatpush1.msra.mxu0 0.0
          %3909 = vmatprep.subr.mxu0 0.0
          %3910 = vmatpush1.msra.mxu0 0.0
          %3911 = vmatprep.subr.mxu0 0.0
          %3912 = vmatpush1.msra.mxu0 0.0
          %3913 = vmatprep.subr.mxu0 0.0
          %3914 = vmatpush1.msra.mxu0 %v3881
          %3915 = vmatprep.subr.mxu0 0.0
          %3916 = vmatpush2.msra.mxu0 0.0
          %3917 = vmatprep.subr.mxu0 0.0
          %3918 = vmatpush2.msra.mxu0 0.0
          %3919 = vmatprep.subr.mxu0 0.0
          %3920 = vmatpush2.msra.mxu0 0.0
          %3921 = vmatprep.subr.mxu0 0.0
          %3922 = vmatpush2.msra.mxu0 0.0
          %3923 = vmatprep.subr.mxu0 0.0
          %3924 = vmatpush2.msra.mxu0 0.0
          %3925 = vmatprep.subr.mxu0 0.0
          %3926 = vmatpush2.msra.mxu0 0.0
          %3927 = vmatprep.subr.mxu0 0.0
          %3928 = vmatpush2.msra.mxu0 0.0
          %3929 = vmatprep.subr.mxu0 0.0
          %3930 = vmatpush2.msra.mxu0 0.0
          %3931 = vmatprep.subr.mxu0 0.0
          %3932 = vmatpush2.msra.mxu0 0.0
          %3933 = vmatprep.subr.mxu0 0.0
          %3934 = vmatpush2.msra.mxu0 0.0
          %3935 = vmatprep.subr.mxu0 0.0
          %3936 = vmatpush2.msra.mxu0 0.0
          %3937 = vmatprep.subr.mxu0 0.0
          %3938 = vmatpush2.msra.mxu0 0.0
          %3939 = vmatprep.subr.mxu0 0.0
          %3940 = vmatpush2.msra.mxu0 0.0
          %3941 = vmatprep.subr.mxu0 0.0
          %3942 = vmatpush2.msra.mxu0 0.0
          %3943 = vmatprep.subr.mxu0 0.0
          %3944 = vmatpush2.msra.mxu0 0.0
          %3945 = vmatprep.subr.mxu0 0.0
          %3946 = vmatpush2.msra.mxu0 0.0
          %3947 = vmatprep.mubr.f32.mxu0 0.0
          %3948 = vmatmul.mubr.f32.gmra.mxu0 %v3878
          %v3949 = vpop.f32.mrf.mxu0
          %v3950 = vadd.f32 0.0, %v3949
          %v3951 = vpop.f32.mrf.mxu0
          %3952 = vdwg.mxu0
          %v3953 = vadd.f32 %v3863, %v3950
          %v3954 = vld [vmem:[%s2249] sm:$0xff]
          %v3955 = vrcp.pop %v3954
          %v3956 = vld [vmem:[%s2257] sm:$0xff]
          %3958 = vset.pattern.permute.xlu0 0
          %3959 = vperm.xlu0 %3958, %v3955
          %v3960 = vpop.permute.xlu0 %3959
          %v3962 = vmul.f32 %v3956, %v3960
          %s3963 = scalar_lea.vmem %s5, 12
          %v3964 = vld [vmem:[%s3963] sm:$0xf]
          %v3966 = vsel %vm1145, %v3962, 0
          %v3969 = vsel %vm3716, %v3964, 0
          %3971 = vmatprep.subr.mxu0 0.0
          %3972 = vmatpush1.msra.mxu0 0.0
          %3973 = vmatprep.subr.mxu0 0.0
          %3974 = vmatpush1.msra.mxu0 0.0
          %3975 = vmatprep.subr.mxu0 0.0
          %3976 = vmatpush1.msra.mxu0 0.0
          %3977 = vmatprep.subr.mxu0 0.0
          %3978 = vmatpush1.msra.mxu0 0.0
          %3979 = vmatprep.subr.mxu0 0.0
          %3980 = vmatpush1.msra.mxu0 0.0
          %3981 = vmatprep.subr.mxu0 0.0
          %3982 = vmatpush1.msra.mxu0 0.0
          %3983 = vmatprep.subr.mxu0 0.0
          %3984 = vmatpush1.msra.mxu0 0.0
          %3985 = vmatprep.subr.mxu0 0.0
          %3986 = vmatpush1.msra.mxu0 0.0
          %3987 = vmatprep.subr.mxu0 0.0
          %3988 = vmatpush1.msra.mxu0 0.0
          %3989 = vmatprep.subr.mxu0 0.0
          %3990 = vmatpush1.msra.mxu0 0.0
          %3991 = vmatprep.subr.mxu0 0.0
          %3992 = vmatpush1.msra.mxu0 0.0
          %3993 = vmatprep.subr.mxu0 0.0
          %3994 = vmatpush1.msra.mxu0 0.0
          %3995 = vmatprep.subr.mxu0 0.0
          %3996 = vmatpush1.msra.mxu0 0.0
          %3997 = vmatprep.subr.mxu0 0.0
          %3998 = vmatpush1.msra.mxu0 0.0
          %3999 = vmatprep.subr.mxu0 0.0
          %4000 = vmatpush1.msra.mxu0 0.0
          %4001 = vmatprep.subr.mxu0 0.0
          %4002 = vmatpush1.msra.mxu0 %v3969
          %4003 = vmatprep.subr.mxu0 0.0
          %4004 = vmatpush2.msra.mxu0 0.0
          %4005 = vmatprep.subr.mxu0 0.0
          %4006 = vmatpush2.msra.mxu0 0.0
          %4007 = vmatprep.subr.mxu0 0.0
          %4008 = vmatpush2.msra.mxu0 0.0
          %4009 = vmatprep.subr.mxu0 0.0
          %4010 = vmatpush2.msra.mxu0 0.0
          %4011 = vmatprep.subr.mxu0 0.0
          %4012 = vmatpush2.msra.mxu0 0.0
          %4013 = vmatprep.subr.mxu0 0.0
          %4014 = vmatpush2.msra.mxu0 0.0
          %4015 = vmatprep.subr.mxu0 0.0
          %4016 = vmatpush2.msra.mxu0 0.0
          %4017 = vmatprep.subr.mxu0 0.0
          %4018 = vmatpush2.msra.mxu0 0.0
          %4019 = vmatprep.subr.mxu0 0.0
          %4020 = vmatpush2.msra.mxu0 0.0
          %4021 = vmatprep.subr.mxu0 0.0
          %4022 = vmatpush2.msra.mxu0 0.0
          %4023 = vmatprep.subr.mxu0 0.0
          %4024 = vmatpush2.msra.mxu0 0.0
          %4025 = vmatprep.subr.mxu0 0.0
          %4026 = vmatpush2.msra.mxu0 0.0
          %4027 = vmatprep.subr.mxu0 0.0
          %4028 = vmatpush2.msra.mxu0 0.0
          %4029 = vmatprep.subr.mxu0 0.0
          %4030 = vmatpush2.msra.mxu0 0.0
          %4031 = vmatprep.subr.mxu0 0.0
          %4032 = vmatpush2.msra.mxu0 0.0
          %4033 = vmatprep.subr.mxu0 0.0
          %4034 = vmatpush2.msra.mxu0 0.0
          %4035 = vmatprep.mubr.f32.mxu0 0.0
          %4036 = vmatmul.mubr.f32.gmra.mxu0 %v3966
          %v4037 = vpop.f32.mrf.mxu0
          %v4038 = vadd.f32 0.0, %v4037
          %v4039 = vpop.f32.mrf.mxu0
          %4040 = vdwg.mxu0
          %v4041 = vadd.f32 %v3953, %v4038
          %v4042 = vld [vmem:[%s2586] sm:$0xff]
          %v4043 = vrcp.pop %v4042
          %v4044 = vld [vmem:[%s2594] sm:$0xff]
          %4046 = vset.pattern.permute.xlu0 0
          %4047 = vperm.xlu0 %4046, %v4043
          %v4048 = vpop.permute.xlu0 %4047
          %v4050 = vmul.f32 %v4044, %v4048
          %s4051 = scalar_lea.vmem %s5, 16
          %v4052 = vld [vmem:[%s4051] sm:$0xf]
          %v4054 = vsel %vm1145, %v4050, 0
          %v4057 = vsel %vm3716, %v4052, 0
          %4059 = vmatprep.subr.mxu0 0.0
          %4060 = vmatpush1.msra.mxu0 0.0
          %4061 = vmatprep.subr.mxu0 0.0
          %4062 = vmatpush1.msra.mxu0 0.0
          %4063 = vmatprep.subr.mxu0 0.0
          %4064 = vmatpush1.msra.mxu0 0.0
          %4065 = vmatprep.subr.mxu0 0.0
          %4066 = vmatpush1.msra.mxu0 0.0
          %4067 = vmatprep.subr.mxu0 0.0
          %4068 = vmatpush1.msra.mxu0 0.0
          %4069 = vmatprep.subr.mxu0 0.0
          %4070 = vmatpush1.msra.mxu0 0.0
          %4071 = vmatprep.subr.mxu0 0.0
          %4072 = vmatpush1.msra.mxu0 0.0
          %4073 = vmatprep.subr.mxu0 0.0
          %4074 = vmatpush1.msra.mxu0 0.0
          %4075 = vmatprep.subr.mxu0 0.0
          %4076 = vmatpush1.msra.mxu0 0.0
          %4077 = vmatprep.subr.mxu0 0.0
          %4078 = vmatpush1.msra.mxu0 0.0
          %4079 = vmatprep.subr.mxu0 0.0
          %4080 = vmatpush1.msra.mxu0 0.0
          %4081 = vmatprep.subr.mxu0 0.0
          %4082 = vmatpush1.msra.mxu0 0.0
          %4083 = vmatprep.subr.mxu0 0.0
          %4084 = vmatpush1.msra.mxu0 0.0
          %4085 = vmatprep.subr.mxu0 0.0
          %4086 = vmatpush1.msra.mxu0 0.0
          %4087 = vmatprep.subr.mxu0 0.0
          %4088 = vmatpush1.msra.mxu0 0.0
          %4089 = vmatprep.subr.mxu0 0.0
          %4090 = vmatpush1.msra.mxu0 %v4057
          %4091 = vmatprep.subr.mxu0 0.0
          %4092 = vmatpush2.msra.mxu0 0.0
          %4093 = vmatprep.subr.mxu0 0.0
          %4094 = vmatpush2.msra.mxu0 0.0
          %4095 = vmatprep.subr.mxu0 0.0
          %4096 = vmatpush2.msra.mxu0 0.0
          %4097 = vmatprep.subr.mxu0 0.0
          %4098 = vmatpush2.msra.mxu0 0.0
          %4099 = vmatprep.subr.mxu0 0.0
          %4100 = vmatpush2.msra.mxu0 0.0
          %4101 = vmatprep.subr.mxu0 0.0
          %4102 = vmatpush2.msra.mxu0 0.0
          %4103 = vmatprep.subr.mxu0 0.0
          %4104 = vmatpush2.msra.mxu0 0.0
          %4105 = vmatprep.subr.mxu0 0.0
          %4106 = vmatpush2.msra.mxu0 0.0
          %4107 = vmatprep.subr.mxu0 0.0
          %4108 = vmatpush2.msra.mxu0 0.0
          %4109 = vmatprep.subr.mxu0 0.0
          %4110 = vmatpush2.msra.mxu0 0.0
          %4111 = vmatprep.subr.mxu0 0.0
          %4112 = vmatpush2.msra.mxu0 0.0
          %4113 = vmatprep.subr.mxu0 0.0
          %4114 = vmatpush2.msra.mxu0 0.0
          %4115 = vmatprep.subr.mxu0 0.0
          %4116 = vmatpush2.msra.mxu0 0.0
          %4117 = vmatprep.subr.mxu0 0.0
          %4118 = vmatpush2.msra.mxu0 0.0
          %4119 = vmatprep.subr.mxu0 0.0
          %4120 = vmatpush2.msra.mxu0 0.0
          %4121 = vmatprep.subr.mxu0 0.0
          %4122 = vmatpush2.msra.mxu0 0.0
          %4123 = vmatprep.mubr.f32.mxu0 0.0
          %4124 = vmatmul.mubr.f32.gmra.mxu0 %v4054
          %v4125 = vpop.f32.mrf.mxu0
          %v4126 = vadd.f32 0.0, %v4125
          %v4127 = vpop.f32.mrf.mxu0
          %4128 = vdwg.mxu0
          %v4129 = vadd.f32 %v4041, %v4126
          %v4130 = vld [vmem:[%s2923] sm:$0xff]
          %v4131 = vrcp.pop %v4130
          %v4132 = vld [vmem:[%s2931] sm:$0xff]
          %4134 = vset.pattern.permute.xlu0 0
          %4135 = vperm.xlu0 %4134, %v4131
          %v4136 = vpop.permute.xlu0 %4135
          %v4138 = vmul.f32 %v4132, %v4136
          %s4139 = scalar_lea.vmem %s5, 20
          %v4140 = vld [vmem:[%s4139] sm:$0xf]
          %v4142 = vsel %vm1145, %v4138, 0
          %v4145 = vsel %vm3716, %v4140, 0
          %4147 = vmatprep.subr.mxu0 0.0
          %4148 = vmatpush1.msra.mxu0 0.0
          %4149 = vmatprep.subr.mxu0 0.0
          %4150 = vmatpush1.msra.mxu0 0.0
          %4151 = vmatprep.subr.mxu0 0.0
          %4152 = vmatpush1.msra.mxu0 0.0
          %4153 = vmatprep.subr.mxu0 0.0
          %4154 = vmatpush1.msra.mxu0 0.0
          %4155 = vmatprep.subr.mxu0 0.0
          %4156 = vmatpush1.msra.mxu0 0.0
          %4157 = vmatprep.subr.mxu0 0.0
          %4158 = vmatpush1.msra.mxu0 0.0
          %4159 = vmatprep.subr.mxu0 0.0
          %4160 = vmatpush1.msra.mxu0 0.0
          %4161 = vmatprep.subr.mxu0 0.0
          %4162 = vmatpush1.msra.mxu0 0.0
          %4163 = vmatprep.subr.mxu0 0.0
          %4164 = vmatpush1.msra.mxu0 0.0
          %4165 = vmatprep.subr.mxu0 0.0
          %4166 = vmatpush1.msra.mxu0 0.0
          %4167 = vmatprep.subr.mxu0 0.0
          %4168 = vmatpush1.msra.mxu0 0.0
          %4169 = vmatprep.subr.mxu0 0.0
          %4170 = vmatpush1.msra.mxu0 0.0
          %4171 = vmatprep.subr.mxu0 0.0
          %4172 = vmatpush1.msra.mxu0 0.0
          %4173 = vmatprep.subr.mxu0 0.0
          %4174 = vmatpush1.msra.mxu0 0.0
          %4175 = vmatprep.subr.mxu0 0.0
          %4176 = vmatpush1.msra.mxu0 0.0
          %4177 = vmatprep.subr.mxu0 0.0
          %4178 = vmatpush1.msra.mxu0 %v4145
          %4179 = vmatprep.subr.mxu0 0.0
          %4180 = vmatpush2.msra.mxu0 0.0
          %4181 = vmatprep.subr.mxu0 0.0
          %4182 = vmatpush2.msra.mxu0 0.0
          %4183 = vmatprep.subr.mxu0 0.0
          %4184 = vmatpush2.msra.mxu0 0.0
          %4185 = vmatprep.subr.mxu0 0.0
          %4186 = vmatpush2.msra.mxu0 0.0
          %4187 = vmatprep.subr.mxu0 0.0
          %4188 = vmatpush2.msra.mxu0 0.0
          %4189 = vmatprep.subr.mxu0 0.0
          %4190 = vmatpush2.msra.mxu0 0.0
          %4191 = vmatprep.subr.mxu0 0.0
          %4192 = vmatpush2.msra.mxu0 0.0
          %4193 = vmatprep.subr.mxu0 0.0
          %4194 = vmatpush2.msra.mxu0 0.0
          %4195 = vmatprep.subr.mxu0 0.0
          %4196 = vmatpush2.msra.mxu0 0.0
          %4197 = vmatprep.subr.mxu0 0.0
          %4198 = vmatpush2.msra.mxu0 0.0
          %4199 = vmatprep.subr.mxu0 0.0
          %4200 = vmatpush2.msra.mxu0 0.0
          %4201 = vmatprep.subr.mxu0 0.0
          %4202 = vmatpush2.msra.mxu0 0.0
          %4203 = vmatprep.subr.mxu0 0.0
          %4204 = vmatpush2.msra.mxu0 0.0
          %4205 = vmatprep.subr.mxu0 0.0
          %4206 = vmatpush2.msra.mxu0 0.0
          %4207 = vmatprep.subr.mxu0 0.0
          %4208 = vmatpush2.msra.mxu0 0.0
          %4209 = vmatprep.subr.mxu0 0.0
          %4210 = vmatpush2.msra.mxu0 0.0
          %4211 = vmatprep.mubr.f32.mxu0 0.0
          %4212 = vmatmul.mubr.f32.gmra.mxu0 %v4142
          %v4213 = vpop.f32.mrf.mxu0
          %v4214 = vadd.f32 0.0, %v4213
          %v4215 = vpop.f32.mrf.mxu0
          %4216 = vdwg.mxu0
          %v4217 = vadd.f32 %v4129, %v4214
          %v4218 = vld [vmem:[%s3260] sm:$0xff]
          %v4219 = vrcp.pop %v4218
          %v4220 = vld [vmem:[%s3268] sm:$0xff]
          %4222 = vset.pattern.permute.xlu0 0
          %4223 = vperm.xlu0 %4222, %v4219
          %v4224 = vpop.permute.xlu0 %4223
          %v4226 = vmul.f32 %v4220, %v4224
          %s4227 = scalar_lea.vmem %s5, 24
          %v4228 = vld [vmem:[%s4227] sm:$0xf]
          %v4230 = vsel %vm1145, %v4226, 0
          %v4233 = vsel %vm3716, %v4228, 0
          %4235 = vmatprep.subr.mxu0 0.0
          %4236 = vmatpush1.msra.mxu0 0.0
          %4237 = vmatprep.subr.mxu0 0.0
          %4238 = vmatpush1.msra.mxu0 0.0
          %4239 = vmatprep.subr.mxu0 0.0
          %4240 = vmatpush1.msra.mxu0 0.0
          %4241 = vmatprep.subr.mxu0 0.0
          %4242 = vmatpush1.msra.mxu0 0.0
          %4243 = vmatprep.subr.mxu0 0.0
          %4244 = vmatpush1.msra.mxu0 0.0
          %4245 = vmatprep.subr.mxu0 0.0
          %4246 = vmatpush1.msra.mxu0 0.0
          %4247 = vmatprep.subr.mxu0 0.0
          %4248 = vmatpush1.msra.mxu0 0.0
          %4249 = vmatprep.subr.mxu0 0.0
          %4250 = vmatpush1.msra.mxu0 0.0
          %4251 = vmatprep.subr.mxu0 0.0
          %4252 = vmatpush1.msra.mxu0 0.0
          %4253 = vmatprep.subr.mxu0 0.0
          %4254 = vmatpush1.msra.mxu0 0.0
          %4255 = vmatprep.subr.mxu0 0.0
          %4256 = vmatpush1.msra.mxu0 0.0
          %4257 = vmatprep.subr.mxu0 0.0
          %4258 = vmatpush1.msra.mxu0 0.0
          %4259 = vmatprep.subr.mxu0 0.0
          %4260 = vmatpush1.msra.mxu0 0.0
          %4261 = vmatprep.subr.mxu0 0.0
          %4262 = vmatpush1.msra.mxu0 0.0
          %4263 = vmatprep.subr.mxu0 0.0
          %4264 = vmatpush1.msra.mxu0 0.0
          %4265 = vmatprep.subr.mxu0 0.0
          %4266 = vmatpush1.msra.mxu0 %v4233
          %4267 = vmatprep.subr.mxu0 0.0
          %4268 = vmatpush2.msra.mxu0 0.0
          %4269 = vmatprep.subr.mxu0 0.0
          %4270 = vmatpush2.msra.mxu0 0.0
          %4271 = vmatprep.subr.mxu0 0.0
          %4272 = vmatpush2.msra.mxu0 0.0
          %4273 = vmatprep.subr.mxu0 0.0
          %4274 = vmatpush2.msra.mxu0 0.0
          %4275 = vmatprep.subr.mxu0 0.0
          %4276 = vmatpush2.msra.mxu0 0.0
          %4277 = vmatprep.subr.mxu0 0.0
          %4278 = vmatpush2.msra.mxu0 0.0
          %4279 = vmatprep.subr.mxu0 0.0
          %4280 = vmatpush2.msra.mxu0 0.0
          %4281 = vmatprep.subr.mxu0 0.0
          %4282 = vmatpush2.msra.mxu0 0.0
          %4283 = vmatprep.subr.mxu0 0.0
          %4284 = vmatpush2.msra.mxu0 0.0
          %4285 = vmatprep.subr.mxu0 0.0
          %4286 = vmatpush2.msra.mxu0 0.0
          %4287 = vmatprep.subr.mxu0 0.0
          %4288 = vmatpush2.msra.mxu0 0.0
          %4289 = vmatprep.subr.mxu0 0.0
          %4290 = vmatpush2.msra.mxu0 0.0
          %4291 = vmatprep.subr.mxu0 0.0
          %4292 = vmatpush2.msra.mxu0 0.0
          %4293 = vmatprep.subr.mxu0 0.0
          %4294 = vmatpush2.msra.mxu0 0.0
          %4295 = vmatprep.subr.mxu0 0.0
          %4296 = vmatpush2.msra.mxu0 0.0
          %4297 = vmatprep.subr.mxu0 0.0
          %4298 = vmatpush2.msra.mxu0 0.0
          %4299 = vmatprep.mubr.f32.mxu0 0.0
          %4300 = vmatmul.mubr.f32.gmra.mxu0 %v4230
          %v4301 = vpop.f32.mrf.mxu0
          %v4302 = vadd.f32 0.0, %v4301
          %v4303 = vpop.f32.mrf.mxu0
          %4304 = vdwg.mxu0
          %v4305 = vadd.f32 %v4217, %v4302
          %v4306 = vld [vmem:[%s3597] sm:$0xff]
          %v4307 = vrcp.pop %v4306
          %v4308 = vld [vmem:[%s3605] sm:$0xff]
          %4310 = vset.pattern.permute.xlu0 0
          %4311 = vperm.xlu0 %4310, %v4307
          %v4312 = vpop.permute.xlu0 %4311
          %v4314 = vmul.f32 %v4308, %v4312
          %s4315 = scalar_lea.vmem %s5, 28
          %v4316 = vld [vmem:[%s4315] sm:$0xf]
          %v4318 = vsel %vm1145, %v4314, 0
          %v4321 = vsel %vm3716, %v4316, 0
          %4323 = vmatprep.subr.mxu0 0.0
          %4324 = vmatpush1.msra.mxu0 0.0
          %4325 = vmatprep.subr.mxu0 0.0
          %4326 = vmatpush1.msra.mxu0 0.0
          %4327 = vmatprep.subr.mxu0 0.0
          %4328 = vmatpush1.msra.mxu0 0.0
          %4329 = vmatprep.subr.mxu0 0.0
          %4330 = vmatpush1.msra.mxu0 0.0
          %4331 = vmatprep.subr.mxu0 0.0
          %4332 = vmatpush1.msra.mxu0 0.0
          %4333 = vmatprep.subr.mxu0 0.0
          %4334 = vmatpush1.msra.mxu0 0.0
          %4335 = vmatprep.subr.mxu0 0.0
          %4336 = vmatpush1.msra.mxu0 0.0
          %4337 = vmatprep.subr.mxu0 0.0
          %4338 = vmatpush1.msra.mxu0 0.0
          %4339 = vmatprep.subr.mxu0 0.0
          %4340 = vmatpush1.msra.mxu0 0.0
          %4341 = vmatprep.subr.mxu0 0.0
          %4342 = vmatpush1.msra.mxu0 0.0
          %4343 = vmatprep.subr.mxu0 0.0
          %4344 = vmatpush1.msra.mxu0 0.0
          %4345 = vmatprep.subr.mxu0 0.0
          %4346 = vmatpush1.msra.mxu0 0.0
          %4347 = vmatprep.subr.mxu0 0.0
          %4348 = vmatpush1.msra.mxu0 0.0
          %4349 = vmatprep.subr.mxu0 0.0
          %4350 = vmatpush1.msra.mxu0 0.0
          %4351 = vmatprep.subr.mxu0 0.0
          %4352 = vmatpush1.msra.mxu0 0.0
          %4353 = vmatprep.subr.mxu0 0.0
          %4354 = vmatpush1.msra.mxu0 %v4321
          %4355 = vmatprep.subr.mxu0 0.0
          %4356 = vmatpush2.msra.mxu0 0.0
          %4357 = vmatprep.subr.mxu0 0.0
          %4358 = vmatpush2.msra.mxu0 0.0
          %4359 = vmatprep.subr.mxu0 0.0
          %4360 = vmatpush2.msra.mxu0 0.0
          %4361 = vmatprep.subr.mxu0 0.0
          %4362 = vmatpush2.msra.mxu0 0.0
          %4363 = vmatprep.subr.mxu0 0.0
          %4364 = vmatpush2.msra.mxu0 0.0
          %4365 = vmatprep.subr.mxu0 0.0
          %4366 = vmatpush2.msra.mxu0 0.0
          %4367 = vmatprep.subr.mxu0 0.0
          %4368 = vmatpush2.msra.mxu0 0.0
          %4369 = vmatprep.subr.mxu0 0.0
          %4370 = vmatpush2.msra.mxu0 0.0
          %4371 = vmatprep.subr.mxu0 0.0
          %4372 = vmatpush2.msra.mxu0 0.0
          %4373 = vmatprep.subr.mxu0 0.0
          %4374 = vmatpush2.msra.mxu0 0.0
          %4375 = vmatprep.subr.mxu0 0.0
          %4376 = vmatpush2.msra.mxu0 0.0
          %4377 = vmatprep.subr.mxu0 0.0
          %4378 = vmatpush2.msra.mxu0 0.0
          %4379 = vmatprep.subr.mxu0 0.0
          %4380 = vmatpush2.msra.mxu0 0.0
          %4381 = vmatprep.subr.mxu0 0.0
          %4382 = vmatpush2.msra.mxu0 0.0
          %4383 = vmatprep.subr.mxu0 0.0
          %4384 = vmatpush2.msra.mxu0 0.0
          %4385 = vmatprep.subr.mxu0 0.0
          %4386 = vmatpush2.msra.mxu0 0.0
          %4387 = vmatprep.mubr.f32.mxu0 0.0
          %4388 = vmatmul.mubr.f32.gmra.mxu0 %v4318
          %v4389 = vpop.f32.mrf.mxu0
          %v4390 = vadd.f32 0.0, %v4389
          %v4391 = vpop.f32.mrf.mxu0
          %4392 = vdwg.mxu0
          %v4393 = vadd.f32 %v4305, %v4390
          %v4394 = vld [vmem:[%s6] sm:$0x1]
          %v4396 = vlaneseq
          %v4397 = vshrl.u32 %v4396, 7
          %v4398 = vsub.s32 0, %v4397
          %v4399 = vrot.slane %v4394, %v4398
          %v4401 = vadd.f32 %v4393, %v4399
          %4402 = vst.msk [vmem:[%s319] sm:$0xff] %vm996, %v4401
        $region56: #{tpu_custom_call.1} parent=47 // pred_fallthru
          _
        %s4403 = sand.u32 %s211, 1
        %s4404 = scalar_lea.sflag [#allocation7], %s4403
        %s4405 = sand.u32 %s211, 1
        %s4406 = smul.addr %s4405, 8
        %s4407 = scalar_lea.vmem [#allocation6], %s4406
        // Predicated region
        $region57: #{tpu_custom_call.1} parent=47 // pred_check
          %p4408 = pneg %p221
        $region58: #{tpu_custom_call.1} parent=47 // pred_check_branch
          %4410 = sbr.rel (%p4408) target = $region60
        $region59: #{tpu_custom_call.1} parent=47 // pred_region
          %s4412 = ssub.s32 128, 128
          %4413 = vsyncadd %s4404, %s4412
          %s4414 = sadd.s32 %s27, %s26
          %s4415 = smul.addr %s4414, 128
          %s4416 = scalar_lea.hbm %s7, %s4415
          %s4418 = sshll.u32 %s4407, 4
          %s4419 = int_to_ptr.vmem [resolvable:$true] %s4418
          %4421 = dma.vmem_to_hbm [thread:$0]  %s4419, 128, %s4416, %s4404
        $region60: #{tpu_custom_call.1} parent=47 // pred_fallthru
          _
      $region48: #{tpu_custom_call.1} parent=5 // pred_fallthru
        _
      %p4422 = scmp.le.s32.totalorder 2, %s16
      // Predicated region
      $region61: #{tpu_custom_call.1} parent=5 // pred_check
        %p4423 = pneg %p4422
      $region62: #{tpu_custom_call.1} parent=5 // pred_check_branch
        %4425 = sbr.rel (%p4423) target = $region64
      $region63: #{tpu_custom_call.1} parent=5 // pred_region
        %s4426 = ssub.s32 %s16, 2
        // Predicated region
        $region65: #{tpu_custom_call.1} parent=63 // pred_check
          %p4427 = pneg %p227
        $region66: #{tpu_custom_call.1} parent=63 // pred_check_branch
          %4429 = sbr.rel (%p4427) target = $region68
        $region67: #{tpu_custom_call.1} parent=63 // pred_region
          %s4430 = sand.u32 %s212, 1
          %s4431 = scalar_lea.sflag [#allocation7], %s4430
          %s4432 = sand.u32 %s212, 1
          %s4433 = smul.addr %s4432, 8
          %s4434 = scalar_lea.vmem [#allocation6], %s4433
          %4435 = dma.done %s4431, 128
        $region68: #{tpu_custom_call.1} parent=63 // pred_fallthru
          _
      $region64: #{tpu_custom_call.1} parent=5 // pred_fallthru
        _
    $region6: #{tpu_custom_call.1} parent=1 // loop_footer
      %s20 = sadd.s32 1, %s16
    $region7: #{tpu_custom_call.1} parent=1 // loop_footer_branch
      %15 = sbr.rel target = $region3
    $region8: #{tpu_custom_call.1} parent=1 // loop_exit
      _
    %4436 = vsyncpa [#allocation7], 1
    %s4437 = scalar_lea.sflag [#allocation7], 1
    %4438 = vsyncpa %s4437, 1

</llo_original>
